<compile_context>
chip_gen: v7x
topology: tpu7x:2x2x1
jax: 0.10.0
libtpu: 0.0.40
codegen_flags: <defaults>
</compile_context>

<pallas_src>
import math
import numpy as np
import jax
import jax.numpy as jnp
from jax import lax
from jax.experimental import pallas as pl
from jax.experimental.pallas import tpu as pltpu

PAD = 3  # max conv padding (7x7) -- input is pre-padded once by 3 per side


# ----------------------------------------------------------------- host glue:
# static pooling / interpolation coefficient matrices

def _adaptive_pool_matrix(out_size, in_size):
    # rows: pooled index, cols: input index -- matches torch AdaptiveAvgPool2d
    m = np.zeros((out_size, in_size), np.float32)
    for i in range(out_size):
        start = (i * in_size) // out_size
        end = -(-((i + 1) * in_size) // out_size)  # ceil
        m[i, start:end] = 1.0 / (end - start)
    return m


def _bilinear_matrix(out_size, in_size):
    # torch F.interpolate(mode='bilinear', align_corners=False) along one axis
    m = np.zeros((out_size, in_size), np.float32)
    if in_size == 1:
        m[:, 0] = 1.0
        return m
    scale = in_size / out_size
    for d in range(out_size):
        src = max((d + 0.5) * scale - 0.5, 0.0)
        i0 = min(int(math.floor(src)), in_size - 1)
        i1 = min(i0 + 1, in_size - 1)
        lam = src - i0
        m[d, i0] += 1.0 - lam
        m[d, i1] += lam
    return m


def _build_pool_operators(H, W):
    """(21, H*W) stacked [pool1; pool2; pool4] and (H*W, 21) upsample (reference)."""
    ps, qs = [], []
    for s in (1, 2, 4):
        Ah = _adaptive_pool_matrix(s, H)
        Aw = _adaptive_pool_matrix(s, W)
        Uh = _bilinear_matrix(H, s)
        Uw = _bilinear_matrix(W, s)
        ps.append(np.kron(Ah, Aw))          # (s*s, H*W)
        qs.append(np.kron(Uh, Uw))          # (H*W, s*s)
    return np.concatenate(ps, axis=0), np.concatenate(qs, axis=1)


def _build_operators(w3, w5, w7, wpool, wfuse, H, W):
    """Fold weights + static pool/upsample coefficients into lane-dense operators."""
    C = w3.shape[2]
    K = 7
    C3 = 3 * C
    Hp, Wp = H + 2 * PAD, W + 2 * PAD

    # merged zero-padded conv weight (7,7,C,3C), branches aligned at the center
    wm = np.zeros((K, K, C, C3), np.float32)
    wm[2:5, 2:5, :, 0:C] = w3
    wm[1:6, 1:6, :, C:2 * C] = w5
    wm[:, :, :, 2 * C:3 * C] = w7

    # per-dy banded conv operator: acc[h, w*3C+c3] = sum_dx,ci X[h+dy,(w+dx)*C+ci]*wm[dy,dx,ci,c3]
    mconv = np.zeros((K, Wp * C, W * C3), np.float32)
    for dy in range(K):
        for w in range(W):
            c0 = w * C3
            for dx in range(K):
                r0 = (w + dx) * C
                mconv[dy, r0:r0 + C, c0:c0 + C3] = wm[dy, dx]

    # 1x1 fuse over the three conv branches, block-diagonal in lane-dense layout
    ffuse = np.kron(np.eye(W, dtype=np.float32), wfuse[:C3]).astype(np.float32)

    # pool path: Ah (pool over H, padded coords), then per scale
    #   pc_s   = relu(tmpH_rows @ kron(Aw_s.T, wpool))        (pool-W ∘ pool_conv)
    #   contrib = Uh_s @ (pc_s @ kron(Uw_s.T, wfuse_slice_s)) (upsample ∘ fuse)
    ahs, per_scale = [], []
    for si, s in enumerate((1, 2, 4)):
        Ah = _adaptive_pool_matrix(s, H)          # (s, H)
        Aw = _adaptive_pool_matrix(s, W)          # (s, W)
        Uh = _bilinear_matrix(H, s)               # (H, s)
        Uw = _bilinear_matrix(W, s)               # (W, s)
        ahs.append(Ah)
        bp = np.zeros((Wp * C, s * C), np.float32)
        bp[PAD * C:PAD * C + W * C, :] = np.kron(Aw.T, wpool)
        wf_s = wfuse[(3 + si) * C:(4 + si) * C]   # fuse slice for this pool branch
        bu = np.kron(Uw.T, wf_s).astype(np.float32)   # (s*C, W*C)
        per_scale.append((bp, bu, Uh.astype(np.float32)))
    ahall = np.zeros((7, Hp), np.float32)         # 1+2+4 = 7 pooled rows
    ahall[:, PAD:PAD + H] = np.concatenate(ahs, axis=0)

    return mconv, ffuse, ahall, per_scale


# ------------------------------------------------------------------ the kernel

def msfe_kernel(xpad_ref, mconv_ref, ffuse_ref, ahall_ref,
                bp1_ref, bu1_ref, uh1_ref,
                bp2_ref, bu2_ref, uh2_ref,
                bp4_ref, bu4_ref, uh4_ref,
                o_ref):
    _, Hp, _ = xpad_ref.shape
    H = Hp - 2 * PAD
    WC3 = mconv_ref.shape[2]

    X = xpad_ref[0]                                   # (Hp, Wp*C), lane-dense

    # ---- conv branches (3x3/5x5/7x7 merged) : 7 banded matmuls --------------
    acc = jnp.zeros((H, WC3), jnp.float32)
    for dy in range(7):
        acc = acc + jnp.dot(X[dy:dy + H, :], mconv_ref[dy],
                            preferred_element_type=jnp.float32)
    conv_act = jnp.maximum(acc, 0.0)                  # relu(x3|x5|x7), (H, W*3C)

    # 1x1 fuse over the conv branches (block-diagonal kron(I_W, wfuse[:3C]))
    out = jnp.dot(conv_act, ffuse_ref[...], preferred_element_type=jnp.float32)

    # ---- pooled branches: pool(H) once, then tiny per-scale matmuls ---------
    tmpH = jnp.dot(ahall_ref[...], X, preferred_element_type=jnp.float32)  # (7, Wp*C)

    def pool_branch(rows, bp_ref, bu_ref, uh_ref):
        pc = jnp.maximum(jnp.dot(rows, bp_ref[...],
                                 preferred_element_type=jnp.float32), 0.0)
        r = jnp.dot(pc, bu_ref[...], preferred_element_type=jnp.float32)
        return jnp.dot(uh_ref[...], r, preferred_element_type=jnp.float32)

    out = out + pool_branch(tmpH[0:1, :], bp1_ref, bu1_ref, uh1_ref)   # 1x1 pool
    out = out + pool_branch(tmpH[1:3, :], bp2_ref, bu2_ref, uh2_ref)   # 2x2 pool
    out = out + pool_branch(tmpH[3:7, :], bp4_ref, bu4_ref, uh4_ref)   # 4x4 pool

    o_ref[0] = out.astype(o_ref.dtype)                # (H, W*C), lane-dense store


# ------------------------------------------------------------------ wrapper

def multi_scale_feature_extractor(x_nchw, w3, w5, w7, wpool, wfuse):
    B, C, H, W = x_nchw.shape
    Hp, Wp = H + 2 * PAD, W + 2 * PAD

    x = jnp.transpose(x_nchw, (0, 2, 3, 1)).astype(jnp.float32)          # NHWC
    xpad = jnp.pad(x, ((0, 0), (PAD, PAD), (PAD, PAD), (0, 0)))
    xpad2 = xpad.reshape(B, Hp, Wp * C)                                  # lane-dense

    mconv, ffuse, ahall, per_scale = _build_operators(
        np.asarray(w3, np.float32), np.asarray(w5, np.float32),
        np.asarray(w7, np.float32), np.asarray(wpool, np.float32),
        np.asarray(wfuse, np.float32), H, W)
    (bp1, bu1, uh1), (bp2, bu2, uh2), (bp4, bu4, uh4) = per_scale

    consts = [jnp.asarray(c) for c in
              (mconv, ffuse, ahall, bp1, bu1, uh1, bp2, bu2, uh2, bp4, bu4, uh4)]

    def full(a):
        return pl.BlockSpec(a.shape, lambda b: (0,) * a.ndim)

    out2 = pl.pallas_call(
        msfe_kernel,
        out_shape=jax.ShapeDtypeStruct((B, H, W * C), jnp.float32),
        grid=(B,),
        in_specs=[pl.BlockSpec((1, Hp, Wp * C), lambda b: (b, 0, 0))] +
                 [full(c) for c in consts],
        out_specs=pl.BlockSpec((1, H, W * C), lambda b: (b, 0, 0)),
        compiler_params=pltpu.CompilerParams(dimension_semantics=("parallel",)),
    )(xpad2, *consts)

    out_nhwc = out2.reshape(B, H, W, C)
    return jnp.transpose(out_nhwc, (0, 3, 1, 2))                         # NCHW


# ------------------------------------------------------------------ pure-JAX reference

def reference_forward(x_nchw, w3, w5, w7, wpool, wfuse):
    B, C, H, W = x_nchw.shape
    x = jnp.transpose(x_nchw, (0, 2, 3, 1)).astype(jnp.float32)

    def conv(xx, w, k):
        return lax.conv_general_dilated(
            xx, w, (1, 1), [(k // 2, k // 2)] * 2,
            dimension_numbers=('NHWC', 'HWIO', 'NHWC'))

    x3 = jax.nn.relu(conv(x, w3, 3))
    x5 = jax.nn.relu(conv(x, w5, 5))
    x7 = jax.nn.relu(conv(x, w7, 7))

    pmat_np, qmat_np = _build_pool_operators(H, W)
    pmat = jnp.asarray(pmat_np)
    qmat = jnp.asarray(qmat_np)
    x_flat = x.reshape(B, H * W, C)

    def pool(row_off, n):
        P = pmat[row_off:row_off + n]
        Q = qmat[:, row_off:row_off + n]
        pooled = jnp.einsum('nm,bmc->bnc', P, x_flat)
        pc = jax.nn.relu(jnp.einsum('bnc,cd->bnd', pooled, wpool))
        return jnp.einsum('mn,bnd->bmd', Q, pc).reshape(B, H, W, C)

    u1, u2, u4 = pool(0, 1), pool(1, 4), pool(5, 16)
    cat = jnp.concatenate([x3, x5, x7, u1, u2, u4], axis=-1)             # (B,H,W,6C)
    out = jnp.einsum('bhwc,cd->bhwd', cat, wfuse)
    return jnp.transpose(out, (0, 3, 1, 2))


# ------------------------------------------------------------------ main

if __name__ == "__main__":
    B, C, H, W = 2, 8, 16, 16   # C == input_type.size == output_type.size (pool_conv)

    key = jax.random.PRNGKey(0)
    k0, k1, k2, k3, k4, k5 = jax.random.split(key, 6)

    x = jax.random.normal(k0, (B, C, H, W), jnp.float32)
    # weights stored HWIO = (k, k, Cin, Cout); fuse weight as (6C, C) matrix
    w3 = jax.random.normal(k1, (3, 3, C, C), jnp.float32) * 0.2
    w5 = jax.random.normal(k2, (5, 5, C, C), jnp.float32) * 0.1
    w7 = jax.random.normal(k3, (7, 7, C, C), jnp.float32) * 0.05
    wpool = jax.random.normal(k4, (C, C), jnp.float32) * 0.3
    wfuse = jax.random.normal(k5, (6 * C, C), jnp.float32) * 0.1

    out = multi_scale_feature_extractor(x, w3, w5, w7, wpool, wfuse)
    out = jax.block_until_ready(out)

    ref = jax.block_until_ready(reference_forward(x, w3, w5, w7, wpool, wfuse))
    np.testing.assert_allclose(np.asarray(out), np.asarray(ref), atol=2e-3, rtol=2e-3)

    print("KERNEL_OK")
</pallas_src>

<mosaic_0001>
module attributes {stable_mosaic.version = 11 : i64} {
  func.func @msfe_kernel(%arg0: i32, %arg1: memref<1x22x176xf32, #tpu.memory_space<vmem>>, %arg2: memref<7x176x384xf32, #tpu.memory_space<vmem>>, %arg3: memref<384x128xf32, #tpu.memory_space<vmem>>, %arg4: memref<7x22xf32, #tpu.memory_space<vmem>>, %arg5: memref<176x8xf32, #tpu.memory_space<vmem>>, %arg6: memref<8x128xf32, #tpu.memory_space<vmem>>, %arg7: memref<16x1xf32, #tpu.memory_space<vmem>>, %arg8: memref<176x16xf32, #tpu.memory_space<vmem>>, %arg9: memref<16x128xf32, #tpu.memory_space<vmem>>, %arg10: memref<16x2xf32, #tpu.memory_space<vmem>>, %arg11: memref<176x32xf32, #tpu.memory_space<vmem>>, %arg12: memref<32x128xf32, #tpu.memory_space<vmem>>, %arg13: memref<16x4xf32, #tpu.memory_space<vmem>>, %arg14: memref<1x16x128xf32, #tpu.memory_space<vmem>>) attributes {dimension_semantics = [#tpu.dimension_semantics<parallel>], iteration_bounds = array<i64: 2>, scalar_prefetch = 0 : i64, scratch_operands = 0 : i64, tpu.core_type = #tpu.core_type<tc>, window_params = [{transform_indices = @transform_0, window_bounds = array<i64: 1, 22, 176>}, {pipeline_mode = #tpu.pipeline_mode<synchronous>, transform_indices = @transform_1, window_bounds = array<i64: 7, 176, 384>}, {pipeline_mode = #tpu.pipeline_mode<synchronous>, transform_indices = @transform_2, window_bounds = array<i64: 384, 128>}, {pipeline_mode = #tpu.pipeline_mode<synchronous>, transform_indices = @transform_3, window_bounds = array<i64: 7, 22>}, {pipeline_mode = #tpu.pipeline_mode<synchronous>, transform_indices = @transform_4, window_bounds = array<i64: 176, 8>}, {pipeline_mode = #tpu.pipeline_mode<synchronous>, transform_indices = @transform_5, window_bounds = array<i64: 8, 128>}, {pipeline_mode = #tpu.pipeline_mode<synchronous>, transform_indices = @transform_6, window_bounds = array<i64: 16, 1>}, {pipeline_mode = #tpu.pipeline_mode<synchronous>, transform_indices = @transform_7, window_bounds = array<i64: 176, 16>}, {pipeline_mode = #tpu.pipeline_mode<synchronous>, transform_indices = @transform_8, window_bounds = array<i64: 16, 128>}, {pipeline_mode = #tpu.pipeline_mode<synchronous>, transform_indices = @transform_9, window_bounds = array<i64: 16, 2>}, {pipeline_mode = #tpu.pipeline_mode<synchronous>, transform_indices = @transform_10, window_bounds = array<i64: 176, 32>}, {pipeline_mode = #tpu.pipeline_mode<synchronous>, transform_indices = @transform_11, window_bounds = array<i64: 32, 128>}, {pipeline_mode = #tpu.pipeline_mode<synchronous>, transform_indices = @transform_12, window_bounds = array<i64: 16, 4>}, {transform_indices = @transform_13, window_bounds = array<i64: 1, 16, 128>}]} {
    %c0 = arith.constant 0 : index
    %c0_0 = arith.constant 0 : index
    %c0_1 = arith.constant 0 : index
    %0 = vector.load %arg1[%c0, %c0_0, %c0_1] : memref<1x22x176xf32, #tpu.memory_space<vmem>>, vector<1x22x176xf32>
    %1 = vector.shape_cast %0 : vector<1x22x176xf32> to vector<22x176xf32>
    %cst = arith.constant 0.000000e+00 : f32
    %2 = vector.broadcast %cst : f32 to vector<16x384xf32>
    %3 = vector.extract_strided_slice %1 {offsets = [0, 0], sizes = [16, 176], strides = [1, 1]} : vector<22x176xf32> to vector<16x176xf32>
    %c0_2 = arith.constant 0 : index
    %c0_3 = arith.constant 0 : index
    %c0_4 = arith.constant 0 : index
    %4 = vector.load %arg2[%c0_2, %c0_3, %c0_4] : memref<7x176x384xf32, #tpu.memory_space<vmem>>, vector<1x176x384xf32>
    %5 = vector.shape_cast %4 : vector<1x176x384xf32> to vector<176x384xf32>
    %cst_5 = arith.constant dense<0.000000e+00> : vector<16x384xf32>
    %6 = tpu.matmul %3, %5, %cst_5 {dimension_numbers = #tpu.dot_dimension_numbers<[1], [0], [0], [1], [0, 0, 1, 1], [], []>} : vector<16x176xf32>, vector<176x384xf32>, vector<16x384xf32> -> vector<16x384xf32>
    %7 = arith.addf %2, %6 : vector<16x384xf32>
    %8 = vector.extract_strided_slice %1 {offsets = [1, 0], sizes = [16, 176], strides = [1, 1]} : vector<22x176xf32> to vector<16x176xf32>
    %c1 = arith.constant 1 : index
    %c0_6 = arith.constant 0 : index
    %c0_7 = arith.constant 0 : index
    %9 = vector.load %arg2[%c1, %c0_6, %c0_7] : memref<7x176x384xf32, #tpu.memory_space<vmem>>, vector<1x176x384xf32>
    %10 = vector.shape_cast %9 : vector<1x176x384xf32> to vector<176x384xf32>
    %cst_8 = arith.constant dense<0.000000e+00> : vector<16x384xf32>
    %11 = tpu.matmul %8, %10, %cst_8 {dimension_numbers = #tpu.dot_dimension_numbers<[1], [0], [0], [1], [0, 0, 1, 1], [], []>} : vector<16x176xf32>, vector<176x384xf32>, vector<16x384xf32> -> vector<16x384xf32>
    %12 = arith.addf %7, %11 : vector<16x384xf32>
    %13 = vector.extract_strided_slice %1 {offsets = [2, 0], sizes = [16, 176], strides = [1, 1]} : vector<22x176xf32> to vector<16x176xf32>
    %c2 = arith.constant 2 : index
    %c0_9 = arith.constant 0 : index
    %c0_10 = arith.constant 0 : index
    %14 = vector.load %arg2[%c2, %c0_9, %c0_10] : memref<7x176x384xf32, #tpu.memory_space<vmem>>, vector<1x176x384xf32>
    %15 = vector.shape_cast %14 : vector<1x176x384xf32> to vector<176x384xf32>
    %cst_11 = arith.constant dense<0.000000e+00> : vector<16x384xf32>
    %16 = tpu.matmul %13, %15, %cst_11 {dimension_numbers = #tpu.dot_dimension_numbers<[1], [0], [0], [1], [0, 0, 1, 1], [], []>} : vector<16x176xf32>, vector<176x384xf32>, vector<16x384xf32> -> vector<16x384xf32>
    %17 = arith.addf %12, %16 : vector<16x384xf32>
    %18 = vector.extract_strided_slice %1 {offsets = [3, 0], sizes = [16, 176], strides = [1, 1]} : vector<22x176xf32> to vector<16x176xf32>
    %c3 = arith.constant 3 : index
    %c0_12 = arith.constant 0 : index
    %c0_13 = arith.constant 0 : index
    %19 = vector.load %arg2[%c3, %c0_12, %c0_13] : memref<7x176x384xf32, #tpu.memory_space<vmem>>, vector<1x176x384xf32>
    %20 = vector.shape_cast %19 : vector<1x176x384xf32> to vector<176x384xf32>
    %cst_14 = arith.constant dense<0.000000e+00> : vector<16x384xf32>
    %21 = tpu.matmul %18, %20, %cst_14 {dimension_numbers = #tpu.dot_dimension_numbers<[1], [0], [0], [1], [0, 0, 1, 1], [], []>} : vector<16x176xf32>, vector<176x384xf32>, vector<16x384xf32> -> vector<16x384xf32>
    %22 = arith.addf %17, %21 : vector<16x384xf32>
    %23 = vector.extract_strided_slice %1 {offsets = [4, 0], sizes = [16, 176], strides = [1, 1]} : vector<22x176xf32> to vector<16x176xf32>
    %c4 = arith.constant 4 : index
    %c0_15 = arith.constant 0 : index
    %c0_16 = arith.constant 0 : index
    %24 = vector.load %arg2[%c4, %c0_15, %c0_16] : memref<7x176x384xf32, #tpu.memory_space<vmem>>, vector<1x176x384xf32>
    %25 = vector.shape_cast %24 : vector<1x176x384xf32> to vector<176x384xf32>
    %cst_17 = arith.constant dense<0.000000e+00> : vector<16x384xf32>
    %26 = tpu.matmul %23, %25, %cst_17 {dimension_numbers = #tpu.dot_dimension_numbers<[1], [0], [0], [1], [0, 0, 1, 1], [], []>} : vector<16x176xf32>, vector<176x384xf32>, vector<16x384xf32> -> vector<16x384xf32>
    %27 = arith.addf %22, %26 : vector<16x384xf32>
    %28 = vector.extract_strided_slice %1 {offsets = [5, 0], sizes = [16, 176], strides = [1, 1]} : vector<22x176xf32> to vector<16x176xf32>
    %c5 = arith.constant 5 : index
    %c0_18 = arith.constant 0 : index
    %c0_19 = arith.constant 0 : index
    %29 = vector.load %arg2[%c5, %c0_18, %c0_19] : memref<7x176x384xf32, #tpu.memory_space<vmem>>, vector<1x176x384xf32>
    %30 = vector.shape_cast %29 : vector<1x176x384xf32> to vector<176x384xf32>
    %cst_20 = arith.constant dense<0.000000e+00> : vector<16x384xf32>
    %31 = tpu.matmul %28, %30, %cst_20 {dimension_numbers = #tpu.dot_dimension_numbers<[1], [0], [0], [1], [0, 0, 1, 1], [], []>} : vector<16x176xf32>, vector<176x384xf32>, vector<16x384xf32> -> vector<16x384xf32>
    %32 = arith.addf %27, %31 : vector<16x384xf32>
    %33 = vector.extract_strided_slice %1 {offsets = [6, 0], sizes = [16, 176], strides = [1, 1]} : vector<22x176xf32> to vector<16x176xf32>
    %c6 = arith.constant 6 : index
    %c0_21 = arith.constant 0 : index
    %c0_22 = arith.constant 0 : index
    %34 = vector.load %arg2[%c6, %c0_21, %c0_22] : memref<7x176x384xf32, #tpu.memory_space<vmem>>, vector<1x176x384xf32>
    %35 = vector.shape_cast %34 : vector<1x176x384xf32> to vector<176x384xf32>
    %cst_23 = arith.constant dense<0.000000e+00> : vector<16x384xf32>
    %36 = tpu.matmul %33, %35, %cst_23 {dimension_numbers = #tpu.dot_dimension_numbers<[1], [0], [0], [1], [0, 0, 1, 1], [], []>} : vector<16x176xf32>, vector<176x384xf32>, vector<16x384xf32> -> vector<16x384xf32>
    %37 = arith.addf %32, %36 : vector<16x384xf32>
    %cst_24 = arith.constant 0.000000e+00 : f32
    %38 = vector.broadcast %cst_24 : f32 to vector<16x384xf32>
    %39 = arith.maximumf %37, %38 : vector<16x384xf32>
    %c0_25 = arith.constant 0 : index
    %c0_26 = arith.constant 0 : index
    %40 = vector.load %arg3[%c0_25, %c0_26] : memref<384x128xf32, #tpu.memory_space<vmem>>, vector<384x128xf32>
    %cst_27 = arith.constant dense<0.000000e+00> : vector<16x128xf32>
    %41 = tpu.matmul %39, %40, %cst_27 {dimension_numbers = #tpu.dot_dimension_numbers<[1], [0], [0], [1], [0, 0, 1, 1], [], []>} : vector<16x384xf32>, vector<384x128xf32>, vector<16x128xf32> -> vector<16x128xf32>
    %c0_28 = arith.constant 0 : index
    %c0_29 = arith.constant 0 : index
    %42 = vector.load %arg4[%c0_28, %c0_29] : memref<7x22xf32, #tpu.memory_space<vmem>>, vector<7x22xf32>
    %cst_30 = arith.constant dense<0.000000e+00> : vector<7x176xf32>
    %43 = tpu.matmul %42, %1, %cst_30 {dimension_numbers = #tpu.dot_dimension_numbers<[1], [0], [0], [1], [0, 0, 1, 1], [], []>} : vector<7x22xf32>, vector<22x176xf32>, vector<7x176xf32> -> vector<7x176xf32>
    %44 = vector.extract_strided_slice %43 {offsets = [0, 0], sizes = [1, 176], strides = [1, 1]} : vector<7x176xf32> to vector<1x176xf32>
    %c0_31 = arith.constant 0 : index
    %c0_32 = arith.constant 0 : index
    %45 = vector.load %arg5[%c0_31, %c0_32] : memref<176x8xf32, #tpu.memory_space<vmem>>, vector<176x8xf32>
    %cst_33 = arith.constant dense<0.000000e+00> : vector<1x8xf32>
    %46 = tpu.matmul %44, %45, %cst_33 {dimension_numbers = #tpu.dot_dimension_numbers<[1], [0], [0], [1], [0, 0, 1, 1], [], []>} : vector<1x176xf32>, vector<176x8xf32>, vector<1x8xf32> -> vector<1x8xf32>
    %cst_34 = arith.constant 0.000000e+00 : f32
    %47 = vector.broadcast %cst_34 : f32 to vector<1x8xf32>
    %48 = arith.maximumf %46, %47 : vector<1x8xf32>
    %c0_35 = arith.constant 0 : index
    %c0_36 = arith.constant 0 : index
    %49 = vector.load %arg6[%c0_35, %c0_36] : memref<8x128xf32, #tpu.memory_space<vmem>>, vector<8x128xf32>
    %cst_37 = arith.constant dense<0.000000e+00> : vector<1x128xf32>
    %50 = tpu.matmul %48, %49, %cst_37 {dimension_numbers = #tpu.dot_dimension_numbers<[1], [0], [0], [1], [0, 0, 1, 1], [], []>} : vector<1x8xf32>, vector<8x128xf32>, vector<1x128xf32> -> vector<1x128xf32>
    %c0_38 = arith.constant 0 : index
    %c0_39 = arith.constant 0 : index
    %51 = vector.load %arg7[%c0_38, %c0_39] : memref<16x1xf32, #tpu.memory_space<vmem>>, vector<16x1xf32>
    %cst_40 = arith.constant dense<0.000000e+00> : vector<16x128xf32>
    %52 = tpu.matmul %51, %50, %cst_40 {dimension_numbers = #tpu.dot_dimension_numbers<[1], [0], [0], [1], [0, 0, 1, 1], [], []>} : vector<16x1xf32>, vector<1x128xf32>, vector<16x128xf32> -> vector<16x128xf32>
    %53 = arith.addf %41, %52 : vector<16x128xf32>
    %54 = vector.extract_strided_slice %43 {offsets = [1, 0], sizes = [2, 176], strides = [1, 1]} : vector<7x176xf32> to vector<2x176xf32>
    %c0_41 = arith.constant 0 : index
    %c0_42 = arith.constant 0 : index
    %55 = vector.load %arg8[%c0_41, %c0_42] : memref<176x16xf32, #tpu.memory_space<vmem>>, vector<176x16xf32>
    %cst_43 = arith.constant dense<0.000000e+00> : vector<2x16xf32>
    %56 = tpu.matmul %54, %55, %cst_43 {dimension_numbers = #tpu.dot_dimension_numbers<[1], [0], [0], [1], [0, 0, 1, 1], [], []>} : vector<2x176xf32>, vector<176x16xf32>, vector<2x16xf32> -> vector<2x16xf32>
    %cst_44 = arith.constant 0.000000e+00 : f32
    %57 = vector.broadcast %cst_44 : f32 to vector<2x16xf32>
    %58 = arith.maximumf %56, %57 : vector<2x16xf32>
    %c0_45 = arith.constant 0 : index
    %c0_46 = arith.constant 0 : index
    %59 = vector.load %arg9[%c0_45, %c0_46] : memref<16x128xf32, #tpu.memory_space<vmem>>, vector<16x128xf32>
    %cst_47 = arith.constant dense<0.000000e+00> : vector<2x128xf32>
    %60 = tpu.matmul %58, %59, %cst_47 {dimension_numbers = #tpu.dot_dimension_numbers<[1], [0], [0], [1], [0, 0, 1, 1], [], []>} : vector<2x16xf32>, vector<16x128xf32>, vector<2x128xf32> -> vector<2x128xf32>
    %c0_48 = arith.constant 0 : index
    %c0_49 = arith.constant 0 : index
    %61 = vector.load %arg10[%c0_48, %c0_49] : memref<16x2xf32, #tpu.memory_space<vmem>>, vector<16x2xf32>
    %cst_50 = arith.constant dense<0.000000e+00> : vector<16x128xf32>
    %62 = tpu.matmul %61, %60, %cst_50 {dimension_numbers = #tpu.dot_dimension_numbers<[1], [0], [0], [1], [0, 0, 1, 1], [], []>} : vector<16x2xf32>, vector<2x128xf32>, vector<16x128xf32> -> vector<16x128xf32>
    %63 = arith.addf %53, %62 : vector<16x128xf32>
    %64 = vector.extract_strided_slice %43 {offsets = [3, 0], sizes = [4, 176], strides = [1, 1]} : vector<7x176xf32> to vector<4x176xf32>
    %c0_51 = arith.constant 0 : index
    %c0_52 = arith.constant 0 : index
    %65 = vector.load %arg11[%c0_51, %c0_52] : memref<176x32xf32, #tpu.memory_space<vmem>>, vector<176x32xf32>
    %cst_53 = arith.constant dense<0.000000e+00> : vector<4x32xf32>
    %66 = tpu.matmul %64, %65, %cst_53 {dimension_numbers = #tpu.dot_dimension_numbers<[1], [0], [0], [1], [0, 0, 1, 1], [], []>} : vector<4x176xf32>, vector<176x32xf32>, vector<4x32xf32> -> vector<4x32xf32>
    %cst_54 = arith.constant 0.000000e+00 : f32
    %67 = vector.broadcast %cst_54 : f32 to vector<4x32xf32>
    %68 = arith.maximumf %66, %67 : vector<4x32xf32>
    %c0_55 = arith.constant 0 : index
    %c0_56 = arith.constant 0 : index
    %69 = vector.load %arg12[%c0_55, %c0_56] : memref<32x128xf32, #tpu.memory_space<vmem>>, vector<32x128xf32>
    %cst_57 = arith.constant dense<0.000000e+00> : vector<4x128xf32>
    %70 = tpu.matmul %68, %69, %cst_57 {dimension_numbers = #tpu.dot_dimension_numbers<[1], [0], [0], [1], [0, 0, 1, 1], [], []>} : vector<4x32xf32>, vector<32x128xf32>, vector<4x128xf32> -> vector<4x128xf32>
    %c0_58 = arith.constant 0 : index
    %c0_59 = arith.constant 0 : index
    %71 = vector.load %arg13[%c0_58, %c0_59] : memref<16x4xf32, #tpu.memory_space<vmem>>, vector<16x4xf32>
    %cst_60 = arith.constant dense<0.000000e+00> : vector<16x128xf32>
    %72 = tpu.matmul %71, %70, %cst_60 {dimension_numbers = #tpu.dot_dimension_numbers<[1], [0], [0], [1], [0, 0, 1, 1], [], []>} : vector<16x4xf32>, vector<4x128xf32>, vector<16x128xf32> -> vector<16x128xf32>
    %73 = arith.addf %63, %72 : vector<16x128xf32>
    %c0_61 = arith.constant 0 : index
    %c0_62 = arith.constant 0 : index
    %c0_63 = arith.constant 0 : index
    %74 = vector.load %arg14[%c0_61, %c0_62, %c0_63] : memref<1x16x128xf32, #tpu.memory_space<vmem>>, vector<1x16x128xf32>
    %75 = vector.shape_cast %74 : vector<1x16x128xf32> to vector<16x128xf32>
    %76 = vector.shape_cast %73 : vector<16x128xf32> to vector<1x16x128xf32>
    tpu.vector_store %arg14[%c0_61, %c0_62, %c0_63], %76 {strides = array<i32>} : memref<1x16x128xf32, #tpu.memory_space<vmem>>, vector<1x16x128xf32>,
    return
  }
  func.func @transform_0(%arg0: i32) -> (i32, i32, i32) {
    %c0_i32 = arith.constant 0 : i32
    %c0_i32_0 = arith.constant 0 : i32
    %c0_i32_1 = arith.constant 0 : i32
    return %arg0, %c0_i32, %c0_i32_0 : i32, i32, i32
  }
  func.func @transform_1(%arg0: i32) -> (i32, i32, i32) {
    %c0_i32 = arith.constant 0 : i32
    %c0_i32_0 = arith.constant 0 : i32
    %c0_i32_1 = arith.constant 0 : i32
    %c0_i32_2 = arith.constant 0 : i32
    return %c0_i32, %c0_i32_0, %c0_i32_1 : i32, i32, i32
  }
  func.func @transform_2(%arg0: i32) -> (i32, i32) {
    %c0_i32 = arith.constant 0 : i32
    %c0_i32_0 = arith.constant 0 : i32
    %c0_i32_1 = arith.constant 0 : i32
    return %c0_i32, %c0_i32_0 : i32, i32
  }
  func.func @transform_3(%arg0: i32) -> (i32, i32) {
    %c0_i32 = arith.constant 0 : i32
    %c0_i32_0 = arith.constant 0 : i32
    %c0_i32_1 = arith.constant 0 : i32
    return %c0_i32, %c0_i32_0 : i32, i32
  }
  func.func @transform_4(%arg0: i32) -> (i32, i32) {
    %c0_i32 = arith.constant 0 : i32
    %c0_i32_0 = arith.constant 0 : i32
    %c0_i32_1 = arith.constant 0 : i32
    return %c0_i32, %c0_i32_0 : i32, i32
  }
  func.func @transform_5(%arg0: i32) -> (i32, i32) {
    %c0_i32 = arith.constant 0 : i32
    %c0_i32_0 = arith.constant 0 : i32
    %c0_i32_1 = arith.constant 0 : i32
    return %c0_i32, %c0_i32_0 : i32, i32
  }
  func.func @transform_6(%arg0: i32) -> (i32, i32) {
    %c0_i32 = arith.constant 0 : i32
    %c0_i32_0 = arith.constant 0 : i32
    %c0_i32_1 = arith.constant 0 : i32
    return %c0_i32, %c0_i32_0 : i32, i32
  }
  func.func @transform_7(%arg0: i32) -> (i32, i32) {
    %c0_i32 = arith.constant 0 : i32
    %c0_i32_0 = arith.constant 0 : i32
    %c0_i32_1 = arith.constant 0 : i32
    return %c0_i32, %c0_i32_0 : i32, i32
  }
  func.func @transform_8(%arg0: i32) -> (i32, i32) {
    %c0_i32 = arith.constant 0 : i32
    %c0_i32_0 = arith.constant 0 : i32
    %c0_i32_1 = arith.constant 0 : i32
    return %c0_i32, %c0_i32_0 : i32, i32
  }
  func.func @transform_9(%arg0: i32) -> (i32, i32) {
    %c0_i32 = arith.constant 0 : i32
    %c0_i32_0 = arith.constant 0 : i32
    %c0_i32_1 = arith.constant 0 : i32
    return %c0_i32, %c0_i32_0 : i32, i32
  }
  func.func @transform_10(%arg0: i32) -> (i32, i32) {
    %c0_i32 = arith.constant 0 : i32
    %c0_i32_0 = arith.constant 0 : i32
    %c0_i32_1 = arith.constant 0 : i32
    return %c0_i32, %c0_i32_0 : i32, i32
  }
  func.func @transform_11(%arg0: i32) -> (i32, i32) {
    %c0_i32 = arith.constant 0 : i32
    %c0_i32_0 = arith.constant 0 : i32
    %c0_i32_1 = arith.constant 0 : i32
    return %c0_i32, %c0_i32_0 : i32, i32
  }
  func.func @transform_12(%arg0: i32) -> (i32, i32) {
    %c0_i32 = arith.constant 0 : i32
    %c0_i32_0 = arith.constant 0 : i32
    %c0_i32_1 = arith.constant 0 : i32
    return %c0_i32, %c0_i32_0 : i32, i32
  }
  func.func @transform_13(%arg0: i32) -> (i32, i32, i32) {
    %c0_i32 = arith.constant 0 : i32
    %c0_i32_0 = arith.constant 0 : i32
    %c0_i32_1 = arith.constant 0 : i32
    return %arg0, %c0_i32, %c0_i32_0 : i32, i32, i32
  }
}

</mosaic_0001>

<llo_original>
// kernel: tpu_custom_call.1
$region0: #{tpu_custom_call.1}
  #allocation0 [shape = 'u32[]', space=smem, size = 0x4, offset = 0x4, fixed_abs, tag = 'smem constant byte address 0x4 - core index']
  #allocation1 [shape = 'u32[144,128]{1,0:T(1,128)}', space=vmem, size = 0x12000, scoped, tag = 'internal scratch']
  %s0 = inlined_call_operand.vmem [shape: f32[2,22,176], index: 0, kind: input, shape index: {}]
  %s1 = inlined_call_operand.hbm [shape: f32[7,176,384], index: 1, kind: input, shape index: {}]
  %s2 = inlined_call_operand.hbm [shape: f32[384,128], index: 2, kind: input, shape index: {}]
  %s3 = inlined_call_operand.hbm [shape: f32[7,22], index: 3, kind: input, shape index: {}]
  %s4 = inlined_call_operand.vmem [shape: f32[176,8], index: 4, kind: input, shape index: {}]
  %s5 = inlined_call_operand.hbm [shape: f32[8,128], index: 5, kind: input, shape index: {}]
  %s6 = inlined_call_operand.vmem [shape: f32[16,1], index: 6, kind: input, shape index: {}]
  %s7 = inlined_call_operand.vmem [shape: f32[176,16], index: 7, kind: input, shape index: {}]
  %s8 = inlined_call_operand.hbm [shape: f32[16,128], index: 8, kind: input, shape index: {}]
  %s9 = inlined_call_operand.vmem [shape: f32[16,2], index: 9, kind: input, shape index: {}]
  %s10 = inlined_call_operand.vmem [shape: f32[176,32], index: 10, kind: input, shape index: {}]
  %s11 = inlined_call_operand.hbm [shape: f32[32,128], index: 11, kind: input, shape index: {}]
  %s12 = inlined_call_operand.vmem [shape: f32[16,4], index: 12, kind: input, shape index: {}]
  %s13 = inlined_call_operand.hbm [shape: f32[2,16,128], index: 13, kind: output, shape index: {}]
  %s14 = sld [smem:[#allocation0]]
  $region109: #{tpu_custom_call.1} parent=0
    _
  %s16 = ssub.s32 1, %s14
  %s17 = scalar_select 0, %s16, %s14
  $region1: #{tpu_custom_call.1} parent=0
    #allocation2 [shape = 'u8[1892352]{0}', space=vmem, size = 0x1ce000, scoped, tag = 'input window, operand 1, single buffered']
    #allocation3 [shape = 's32[2]{0}', space=sflag, size = 0x8, scoped, tag = 'scoped memory for tpu_custom_call.1']
    #allocation4 [shape = 's32[2]{0}', space=sflag, size = 0x8, scoped, tag = 'scoped memory for tpu_custom_call.1']
    #allocation5 [shape = 'u8[196608]{0}', space=vmem, size = 0x30000, scoped, tag = 'input window, operand 2, single buffered']
    #allocation6 [shape = 's32[1]{0}', space=sflag, size = 0x4, scoped, tag = 'scoped memory for tpu_custom_call.1']
    #allocation7 [shape = 'u8[4096]{0}', space=vmem, size = 0x1000, scoped, tag = 'input window, operand 3, single buffered']
    #allocation8 [shape = 'u8[4096]{0}', space=vmem, size = 0x1000, scoped, tag = 'input window, operand 5, single buffered']
    #allocation9 [shape = 's32[1]{0}', space=sflag, size = 0x4, scoped, tag = 'scoped memory for tpu_custom_call.1']
    #allocation10 [shape = 'u8[8192]{0}', space=vmem, size = 0x2000, scoped, tag = 'input window, operand 8, single buffered']
    #allocation11 [shape = 'u8[16384]{0}', space=vmem, size = 0x4000, scoped, tag = 'input window, operand 11, single buffered']
    #allocation12 [shape = 's32[1]{0}', space=sflag, size = 0x4, scoped, tag = 'scoped memory for tpu_custom_call.1']
    #allocation13 [shape = 'u8[16384]{0}', space=vmem, size = 0x4000, scoped, tag = 'output window, operand 0']
    %18 = vsyncpa [#allocation3], 0
    %19 = vsyncpa [#allocation6], 0
    %20 = vsyncpa [#allocation9], 0
    %21 = vsyncpa [#allocation12], 0
    %22 = vsyncpa [#allocation4], 0
    %s23 = scalar_lea.sflag [#allocation4], 1
    %24 = vsyncpa %s23, 0
    loop: start=0, step=1, limit=4
    $region2: #{tpu_custom_call.1} parent=1 // loop_pre_header
      _
    $region3: #{tpu_custom_call.1} parent=1 // loop_header
      %s26 = sphi 0, %s30
      %p27 = scmp.ge.s32.totalorder %s26, 4
      %s36 = sphi 0, %s38
      %s39 = sphi 0, %s36
      %s40 = sphi 0, %s39
      %s56 = sphi 0, %s40
      %s60 = sphi 0, %s60
      %s62 = sphi 0, %s60
      %s63 = sphi 0, %s62
      %s77 = sphi 0, %s63
      %s81 = sphi 0, %s81
      %s83 = sphi 0, %s81
      %s84 = sphi 0, %s83
      %s98 = sphi 0, %s84
      %s102 = sphi 0, %s102
      %s104 = sphi 0, %s102
      %s105 = sphi 0, %s104
      %s119 = sphi 0, %s105
      %s123 = sphi 0, %s123
      %s125 = sphi 0, %s123
      %s126 = sphi 0, %s125
      %s140 = sphi 0, %s126
      %s144 = sphi 0, %s144
      %s146 = sphi 0, %s144
      %s147 = sphi 0, %s146
      %s161 = sphi 0, %s147
      %s165 = sphi 0, %s165
      %s167 = sphi 0, %s165
      %s168 = sphi 0, %s167
      %s182 = sphi 0, %s168
      %s186 = sphi 0, %s186
      %s188 = sphi 0, %s186
      %s189 = sphi 0, %s188
      %s203 = sphi 0, %s189
      %s207 = sphi 0, %s207
      %s209 = sphi 0, %s207
      %s210 = sphi 0, %s209
      %s224 = sphi 0, %s210
      %s228 = sphi 0, %s228
      %s230 = sphi 0, %s228
      %s231 = sphi 0, %s230
      %s245 = sphi 0, %s231
      %s249 = sphi 0, %s249
      %s251 = sphi 0, %s249
      %s252 = sphi 0, %s251
      %s266 = sphi 0, %s252
      %s270 = sphi 0, %s270
      %s272 = sphi 0, %s270
      %s273 = sphi 0, %s272
      %s287 = sphi 0, %s273
      %s291 = sphi 0, %s291
      %s293 = sphi 0, %s291
      %s294 = sphi 0, %s293
      %s308 = sphi 0, %s294
      %s314 = sphi 0, %s316
      %s317 = sphi 0, %s314
      %s318 = sphi 0, %s317
      %s334 = sphi 0, %s318
    $region4: #{tpu_custom_call.1} parent=1 // loop_header_branch
      %29 = sbr.rel (%p27) target = $region8
    $region5: #{tpu_custom_call.1} parent=1 // loop_body
      %s31 = ssub.s32 %s26, 1
      %s32 = ssub.s32 %s26, 2
      %s33 = sadd.s32 %s26, 1
      %s34 = ssub.s32 %s26, %s33
      %p35 = scmp.eq.s32.totalorder %s34, 0
      %s37 = sadd.s32 %s36, 1
      %s38 = scalar_select %p35, %s36, %s37
      %p41 = pneg %p35
      %p42 = scmp.eq.s32.totalorder %s26, 1
      %p43 = por %p41, %p42
      %p44 = scmp.ne.s32.totalorder %s36, %s39
      %p45 = scmp.eq.s32.totalorder %s26, 0
      %p46 = por %p44, %p45
      %p47 = scmp.ne.s32.totalorder %s36, %s39
      %p48 = scmp.eq.s32.totalorder %s31, 1
      %p49 = por %p47, %p48
      %p50 = scmp.ne.s32.totalorder %s39, %s40
      %p51 = scmp.eq.s32.totalorder %s31, 0
      %p52 = por %p50, %p51
      %p53 = scmp.ne.s32.totalorder %s39, %s40
      %p54 = scmp.eq.s32.totalorder %s32, 1
      %p55 = por %p53, %p54
      %p57 = scmp.ne.s32.totalorder %s40, %s56
      %p58 = scmp.eq.s32.totalorder %s32, 0
      %p59 = por %p57, %p58
      %s61 = sadd.s32 %s60, 1
      %p64 = scmp.eq.s32.totalorder %s26, 1
      %p65 = scmp.ne.s32.totalorder %s60, %s62
      %p66 = scmp.eq.s32.totalorder %s26, 0
      %p67 = por %p65, %p66
      %p68 = scmp.ne.s32.totalorder %s60, %s62
      %p69 = scmp.eq.s32.totalorder %s31, 1
      %p70 = por %p68, %p69
      %p71 = scmp.ne.s32.totalorder %s62, %s63
      %p72 = scmp.eq.s32.totalorder %s31, 0
      %p73 = por %p71, %p72
      %p74 = scmp.ne.s32.totalorder %s62, %s63
      %p75 = scmp.eq.s32.totalorder %s32, 1
      %p76 = por %p74, %p75
      %p78 = scmp.ne.s32.totalorder %s63, %s77
      %p79 = scmp.eq.s32.totalorder %s32, 0
      %p80 = por %p78, %p79
      %s82 = sadd.s32 %s81, 1
      %p85 = scmp.eq.s32.totalorder %s26, 1
      %p86 = scmp.ne.s32.totalorder %s81, %s83
      %p87 = scmp.eq.s32.totalorder %s26, 0
      %p88 = por %p86, %p87
      %p89 = scmp.ne.s32.totalorder %s81, %s83
      %p90 = scmp.eq.s32.totalorder %s31, 1
      %p91 = por %p89, %p90
      %p92 = scmp.ne.s32.totalorder %s83, %s84
      %p93 = scmp.eq.s32.totalorder %s31, 0
      %p94 = por %p92, %p93
      %p95 = scmp.ne.s32.totalorder %s83, %s84
      %p96 = scmp.eq.s32.totalorder %s32, 1
      %p97 = por %p95, %p96
      %p99 = scmp.ne.s32.totalorder %s84, %s98
      %p100 = scmp.eq.s32.totalorder %s32, 0
      %p101 = por %p99, %p100
      %s103 = sadd.s32 %s102, 1
      %p106 = scmp.eq.s32.totalorder %s26, 1
      %p107 = scmp.ne.s32.totalorder %s102, %s104
      %p108 = scmp.eq.s32.totalorder %s26, 0
      %p109 = por %p107, %p108
      %p110 = scmp.ne.s32.totalorder %s102, %s104
      %p111 = scmp.eq.s32.totalorder %s31, 1
      %p112 = por %p110, %p111
      %p113 = scmp.ne.s32.totalorder %s104, %s105
      %p114 = scmp.eq.s32.totalorder %s31, 0
      %p115 = por %p113, %p114
      %p116 = scmp.ne.s32.totalorder %s104, %s105
      %p117 = scmp.eq.s32.totalorder %s32, 1
      %p118 = por %p116, %p117
      %p120 = scmp.ne.s32.totalorder %s105, %s119
      %p121 = scmp.eq.s32.totalorder %s32, 0
      %p122 = por %p120, %p121
      %s124 = sadd.s32 %s123, 1
      %p127 = scmp.eq.s32.totalorder %s26, 1
      %p128 = scmp.ne.s32.totalorder %s123, %s125
      %p129 = scmp.eq.s32.totalorder %s26, 0
      %p130 = por %p128, %p129
      %p131 = scmp.ne.s32.totalorder %s123, %s125
      %p132 = scmp.eq.s32.totalorder %s31, 1
      %p133 = por %p131, %p132
      %p134 = scmp.ne.s32.totalorder %s125, %s126
      %p135 = scmp.eq.s32.totalorder %s31, 0
      %p136 = por %p134, %p135
      %p137 = scmp.ne.s32.totalorder %s125, %s126
      %p138 = scmp.eq.s32.totalorder %s32, 1
      %p139 = por %p137, %p138
      %p141 = scmp.ne.s32.totalorder %s126, %s140
      %p142 = scmp.eq.s32.totalorder %s32, 0
      %p143 = por %p141, %p142
      %s145 = sadd.s32 %s144, 1
      %p148 = scmp.eq.s32.totalorder %s26, 1
      %p149 = scmp.ne.s32.totalorder %s144, %s146
      %p150 = scmp.eq.s32.totalorder %s26, 0
      %p151 = por %p149, %p150
      %p152 = scmp.ne.s32.totalorder %s144, %s146
      %p153 = scmp.eq.s32.totalorder %s31, 1
      %p154 = por %p152, %p153
      %p155 = scmp.ne.s32.totalorder %s146, %s147
      %p156 = scmp.eq.s32.totalorder %s31, 0
      %p157 = por %p155, %p156
      %p158 = scmp.ne.s32.totalorder %s146, %s147
      %p159 = scmp.eq.s32.totalorder %s32, 1
      %p160 = por %p158, %p159
      %p162 = scmp.ne.s32.totalorder %s147, %s161
      %p163 = scmp.eq.s32.totalorder %s32, 0
      %p164 = por %p162, %p163
      %s166 = sadd.s32 %s165, 1
      %p169 = scmp.eq.s32.totalorder %s26, 1
      %p170 = scmp.ne.s32.totalorder %s165, %s167
      %p171 = scmp.eq.s32.totalorder %s26, 0
      %p172 = por %p170, %p171
      %p173 = scmp.ne.s32.totalorder %s165, %s167
      %p174 = scmp.eq.s32.totalorder %s31, 1
      %p175 = por %p173, %p174
      %p176 = scmp.ne.s32.totalorder %s167, %s168
      %p177 = scmp.eq.s32.totalorder %s31, 0
      %p178 = por %p176, %p177
      %p179 = scmp.ne.s32.totalorder %s167, %s168
      %p180 = scmp.eq.s32.totalorder %s32, 1
      %p181 = por %p179, %p180
      %p183 = scmp.ne.s32.totalorder %s168, %s182
      %p184 = scmp.eq.s32.totalorder %s32, 0
      %p185 = por %p183, %p184
      %s187 = sadd.s32 %s186, 1
      %p190 = scmp.eq.s32.totalorder %s26, 1
      %p191 = scmp.ne.s32.totalorder %s186, %s188
      %p192 = scmp.eq.s32.totalorder %s26, 0
      %p193 = por %p191, %p192
      %p194 = scmp.ne.s32.totalorder %s186, %s188
      %p195 = scmp.eq.s32.totalorder %s31, 1
      %p196 = por %p194, %p195
      %p197 = scmp.ne.s32.totalorder %s188, %s189
      %p198 = scmp.eq.s32.totalorder %s31, 0
      %p199 = por %p197, %p198
      %p200 = scmp.ne.s32.totalorder %s188, %s189
      %p201 = scmp.eq.s32.totalorder %s32, 1
      %p202 = por %p200, %p201
      %p204 = scmp.ne.s32.totalorder %s189, %s203
      %p205 = scmp.eq.s32.totalorder %s32, 0
      %p206 = por %p204, %p205
      %s208 = sadd.s32 %s207, 1
      %p211 = scmp.eq.s32.totalorder %s26, 1
      %p212 = scmp.ne.s32.totalorder %s207, %s209
      %p213 = scmp.eq.s32.totalorder %s26, 0
      %p214 = por %p212, %p213
      %p215 = scmp.ne.s32.totalorder %s207, %s209
      %p216 = scmp.eq.s32.totalorder %s31, 1
      %p217 = por %p215, %p216
      %p218 = scmp.ne.s32.totalorder %s209, %s210
      %p219 = scmp.eq.s32.totalorder %s31, 0
      %p220 = por %p218, %p219
      %p221 = scmp.ne.s32.totalorder %s209, %s210
      %p222 = scmp.eq.s32.totalorder %s32, 1
      %p223 = por %p221, %p222
      %p225 = scmp.ne.s32.totalorder %s210, %s224
      %p226 = scmp.eq.s32.totalorder %s32, 0
      %p227 = por %p225, %p226
      %s229 = sadd.s32 %s228, 1
      %p232 = scmp.eq.s32.totalorder %s26, 1
      %p233 = scmp.ne.s32.totalorder %s228, %s230
      %p234 = scmp.eq.s32.totalorder %s26, 0
      %p235 = por %p233, %p234
      %p236 = scmp.ne.s32.totalorder %s228, %s230
      %p237 = scmp.eq.s32.totalorder %s31, 1
      %p238 = por %p236, %p237
      %p239 = scmp.ne.s32.totalorder %s230, %s231
      %p240 = scmp.eq.s32.totalorder %s31, 0
      %p241 = por %p239, %p240
      %p242 = scmp.ne.s32.totalorder %s230, %s231
      %p243 = scmp.eq.s32.totalorder %s32, 1
      %p244 = por %p242, %p243
      %p246 = scmp.ne.s32.totalorder %s231, %s245
      %p247 = scmp.eq.s32.totalorder %s32, 0
      %p248 = por %p246, %p247
      %s250 = sadd.s32 %s249, 1
      %p253 = scmp.eq.s32.totalorder %s26, 1
      %p254 = scmp.ne.s32.totalorder %s249, %s251
      %p255 = scmp.eq.s32.totalorder %s26, 0
      %p256 = por %p254, %p255
      %p257 = scmp.ne.s32.totalorder %s249, %s251
      %p258 = scmp.eq.s32.totalorder %s31, 1
      %p259 = por %p257, %p258
      %p260 = scmp.ne.s32.totalorder %s251, %s252
      %p261 = scmp.eq.s32.totalorder %s31, 0
      %p262 = por %p260, %p261
      %p263 = scmp.ne.s32.totalorder %s251, %s252
      %p264 = scmp.eq.s32.totalorder %s32, 1
      %p265 = por %p263, %p264
      %p267 = scmp.ne.s32.totalorder %s252, %s266
      %p268 = scmp.eq.s32.totalorder %s32, 0
      %p269 = por %p267, %p268
      %s271 = sadd.s32 %s270, 1
      %p274 = scmp.eq.s32.totalorder %s26, 1
      %p275 = scmp.ne.s32.totalorder %s270, %s272
      %p276 = scmp.eq.s32.totalorder %s26, 0
      %p277 = por %p275, %p276
      %p278 = scmp.ne.s32.totalorder %s270, %s272
      %p279 = scmp.eq.s32.totalorder %s31, 1
      %p280 = por %p278, %p279
      %p281 = scmp.ne.s32.totalorder %s272, %s273
      %p282 = scmp.eq.s32.totalorder %s31, 0
      %p283 = por %p281, %p282
      %p284 = scmp.ne.s32.totalorder %s272, %s273
      %p285 = scmp.eq.s32.totalorder %s32, 1
      %p286 = por %p284, %p285
      %p288 = scmp.ne.s32.totalorder %s273, %s287
      %p289 = scmp.eq.s32.totalorder %s32, 0
      %p290 = por %p288, %p289
      %s292 = sadd.s32 %s291, 1
      %p295 = scmp.eq.s32.totalorder %s26, 1
      %p296 = scmp.ne.s32.totalorder %s291, %s293
      %p297 = scmp.eq.s32.totalorder %s26, 0
      %p298 = por %p296, %p297
      %p299 = scmp.ne.s32.totalorder %s291, %s293
      %p300 = scmp.eq.s32.totalorder %s31, 1
      %p301 = por %p299, %p300
      %p302 = scmp.ne.s32.totalorder %s293, %s294
      %p303 = scmp.eq.s32.totalorder %s31, 0
      %p304 = por %p302, %p303
      %p305 = scmp.ne.s32.totalorder %s293, %s294
      %p306 = scmp.eq.s32.totalorder %s32, 1
      %p307 = por %p305, %p306
      %p309 = scmp.ne.s32.totalorder %s294, %s308
      %p310 = scmp.eq.s32.totalorder %s32, 0
      %p311 = por %p309, %p310
      %s312 = ssub.s32 %s26, %s33
      %p313 = scmp.eq.s32.totalorder %s312, 0
      %s315 = sadd.s32 %s314, 1
      %s316 = scalar_select %p313, %s314, %s315
      %p319 = pneg %p313
      %p320 = scmp.eq.s32.totalorder %s26, 1
      %p321 = por %p319, %p320
      %p322 = scmp.ne.s32.totalorder %s314, %s317
      %p323 = scmp.eq.s32.totalorder %s26, 0
      %p324 = por %p322, %p323
      %p325 = scmp.ne.s32.totalorder %s314, %s317
      %p326 = scmp.eq.s32.totalorder %s31, 1
      %p327 = por %p325, %p326
      %p328 = scmp.ne.s32.totalorder %s317, %s318
      %p329 = scmp.eq.s32.totalorder %s31, 0
      %p330 = por %p328, %p329
      %p331 = scmp.ne.s32.totalorder %s317, %s318
      %p332 = scmp.eq.s32.totalorder %s32, 1
      %p333 = por %p331, %p332
      %p335 = scmp.ne.s32.totalorder %s318, %s334
      %p336 = scmp.eq.s32.totalorder %s32, 0
      %p337 = por %p335, %p336
      %p338 = scmp.le.s32.totalorder 1, %s26
      %p339 = scmp.lt.s32.totalorder %s26, 3
      %p340 = pnand %p338, %p339
      %p341 = pneg %p340
      // Predicated region
      $region9: #{tpu_custom_call.1} parent=5 // pred_check
        _
      $region10: #{tpu_custom_call.1} parent=5 // pred_check_branch
        %343 = sbr.rel (%p340) target = $region12
      $region11: #{tpu_custom_call.1} parent=5 // pred_region
        %s344 = ssub.s32 %s26, 1
        // Predicated region
        $region13: #{tpu_custom_call.1} parent=11 // pred_check
          %p345 = pneg %p73
        $region14: #{tpu_custom_call.1} parent=11 // pred_check_branch
          %347 = sbr.rel (%p345) target = $region16
        $region15: #{tpu_custom_call.1} parent=11 // pred_region
          %s349 = ssub.s32 59136, 59136
          %350 = vsyncadd [#allocation3], %s349
          %s351 = sshll.u32 [#allocation2], 4
          %s352 = int_to_ptr.vmem [resolvable:$true] %s351
          %357 = dma.hbm_to_vmem [thread:$0]  %s1, 59136, %s352, [#allocation3], 384, 384, 24
        $region16: #{tpu_custom_call.1} parent=11 // pred_fallthru
          _
        // Predicated region
        $region17: #{tpu_custom_call.1} parent=11 // pred_check
          %p358 = pneg %p94
        $region18: #{tpu_custom_call.1} parent=11 // pred_check_branch
          %360 = sbr.rel (%p358) target = $region20
        $region19: #{tpu_custom_call.1} parent=11 // pred_region
          %s362 = ssub.s32 6144, 6144
          %363 = vsyncadd [#allocation6], %s362
          %s364 = sshll.u32 [#allocation5], 4
          %s365 = int_to_ptr.vmem [resolvable:$true] %s364
          %370 = dma.hbm_to_vmem [thread:$0]  %s2, 6144, %s365, [#allocation6], 128, 128, 8
        $region20: #{tpu_custom_call.1} parent=11 // pred_fallthru
          _
        // Predicated region
        $region21: #{tpu_custom_call.1} parent=11 // pred_check
          %p371 = pneg %p115
        $region22: #{tpu_custom_call.1} parent=11 // pred_check_branch
          %373 = sbr.rel (%p371) target = $region24
        $region23: #{tpu_custom_call.1} parent=11 // pred_region
          %s375 = ssub.s32 128, 128
          %376 = vsyncadd [#allocation6], %s375
          %s378 = sshll.u32 [#allocation7], 4
          %s379 = int_to_ptr.vmem [resolvable:$true] %s378
          %381 = dma.hbm_to_vmem [thread:$0]  %s3, 128, %s379, [#allocation6]
        $region24: #{tpu_custom_call.1} parent=11 // pred_fallthru
          _
        // Predicated region
        $region25: #{tpu_custom_call.1} parent=11 // pred_check
          %p382 = pneg %p136
        $region26: #{tpu_custom_call.1} parent=11 // pred_check_branch
          %384 = sbr.rel (%p382) target = $region28
        $region27: #{tpu_custom_call.1} parent=11 // pred_region
          _
        $region28: #{tpu_custom_call.1} parent=11 // pred_fallthru
          _
        // Predicated region
        $region29: #{tpu_custom_call.1} parent=11 // pred_check
          %p385 = pneg %p157
        $region30: #{tpu_custom_call.1} parent=11 // pred_check_branch
          %387 = sbr.rel (%p385) target = $region32
        $region31: #{tpu_custom_call.1} parent=11 // pred_region
          %s389 = ssub.s32 128, 128
          %390 = vsyncadd [#allocation9], %s389
          %s392 = sshll.u32 [#allocation8], 4
          %s393 = int_to_ptr.vmem [resolvable:$true] %s392
          %395 = dma.hbm_to_vmem [thread:$0]  %s5, 128, %s393, [#allocation9]
        $region32: #{tpu_custom_call.1} parent=11 // pred_fallthru
          _
        // Predicated region
        $region33: #{tpu_custom_call.1} parent=11 // pred_check
          %p396 = pneg %p178
        $region34: #{tpu_custom_call.1} parent=11 // pred_check_branch
          %398 = sbr.rel (%p396) target = $region36
        $region35: #{tpu_custom_call.1} parent=11 // pred_region
          _
        $region36: #{tpu_custom_call.1} parent=11 // pred_fallthru
          _
        // Predicated region
        $region37: #{tpu_custom_call.1} parent=11 // pred_check
          %p399 = pneg %p199
        $region38: #{tpu_custom_call.1} parent=11 // pred_check_branch
          %401 = sbr.rel (%p399) target = $region40
        $region39: #{tpu_custom_call.1} parent=11 // pred_region
          _
        $region40: #{tpu_custom_call.1} parent=11 // pred_fallthru
          _
        // Predicated region
        $region41: #{tpu_custom_call.1} parent=11 // pred_check
          %p402 = pneg %p220
        $region42: #{tpu_custom_call.1} parent=11 // pred_check_branch
          %404 = sbr.rel (%p402) target = $region44
        $region43: #{tpu_custom_call.1} parent=11 // pred_region
          %s406 = ssub.s32 256, 256
          %407 = vsyncadd [#allocation9], %s406
          %s408 = sshll.u32 [#allocation10], 4
          %s409 = int_to_ptr.vmem [resolvable:$true] %s408
          %414 = dma.hbm_to_vmem [thread:$0]  %s8, 256, %s409, [#allocation9], 128, 128, 8
        $region44: #{tpu_custom_call.1} parent=11 // pred_fallthru
          _
        // Predicated region
        $region45: #{tpu_custom_call.1} parent=11 // pred_check
          %p415 = pneg %p241
        $region46: #{tpu_custom_call.1} parent=11 // pred_check_branch
          %417 = sbr.rel (%p415) target = $region48
        $region47: #{tpu_custom_call.1} parent=11 // pred_region
          _
        $region48: #{tpu_custom_call.1} parent=11 // pred_fallthru
          _
        // Predicated region
        $region49: #{tpu_custom_call.1} parent=11 // pred_check
          %p418 = pneg %p262
        $region50: #{tpu_custom_call.1} parent=11 // pred_check_branch
          %420 = sbr.rel (%p418) target = $region52
        $region51: #{tpu_custom_call.1} parent=11 // pred_region
          _
        $region52: #{tpu_custom_call.1} parent=11 // pred_fallthru
          _
        // Predicated region
        $region53: #{tpu_custom_call.1} parent=11 // pred_check
          %p421 = pneg %p283
        $region54: #{tpu_custom_call.1} parent=11 // pred_check_branch
          %423 = sbr.rel (%p421) target = $region56
        $region55: #{tpu_custom_call.1} parent=11 // pred_region
          %s425 = ssub.s32 512, 512
          %426 = vsyncadd [#allocation12], %s425
          %s427 = sshll.u32 [#allocation11], 4
          %s428 = int_to_ptr.vmem [resolvable:$true] %s427
          %433 = dma.hbm_to_vmem [thread:$0]  %s11, 512, %s428, [#allocation12], 128, 128, 8
        $region56: #{tpu_custom_call.1} parent=11 // pred_fallthru
          _
        // Predicated region
        $region57: #{tpu_custom_call.1} parent=11 // pred_check
          %p434 = pneg %p304
        $region58: #{tpu_custom_call.1} parent=11 // pred_check_branch
          %436 = sbr.rel (%p434) target = $region60
        $region59: #{tpu_custom_call.1} parent=11 // pred_region
          _
        $region60: #{tpu_custom_call.1} parent=11 // pred_fallthru
          _
      $region12: #{tpu_custom_call.1} parent=5 // pred_fallthru
        _
      %p437 = scmp.lt.s32.totalorder %s26, 2
      // Predicated region
      $region61: #{tpu_custom_call.1} parent=5 // pred_check
        %p438 = pneg %p437
      $region62: #{tpu_custom_call.1} parent=5 // pred_check_branch
        %440 = sbr.rel (%p438) target = $region64
      $region63: #{tpu_custom_call.1} parent=5 // pred_region
        // Predicated region
        $region65: #{tpu_custom_call.1} parent=63 // pred_check
          %p441 = pneg %p46
        $region66: #{tpu_custom_call.1} parent=63 // pred_check_branch
          %443 = sbr.rel (%p441) target = $region68
        $region67: #{tpu_custom_call.1} parent=63 // pred_region
          %p444 = scmp.lt.s32.totalorder %s26, 1
          %s445 = scalar_select %p444, %s26, 1
          %s446 = smul.addr %s445, 6
          %s447 = smul.addr %s446, 8
          %s448 = scalar_lea.vmem %s0, %s447
        $region68: #{tpu_custom_call.1} parent=63 // pred_fallthru
          _
      $region64: #{tpu_custom_call.1} parent=5 // pred_fallthru
        _
      %p449 = scmp.le.s32.totalorder 1, %s26
      %p450 = scmp.lt.s32.totalorder %s26, 3
      %p451 = pnand %p449, %p450
      %p452 = pneg %p451
      // Predicated region
      $region69: #{tpu_custom_call.1} parent=5 // pred_check
        _
      $region70: #{tpu_custom_call.1} parent=5 // pred_check_branch
        %454 = sbr.rel (%p451) target = $region72
      $region71: #{tpu_custom_call.1} parent=5 // pred_region
        %s455 = ssub.s32 %s26, 1
        // Predicated region
        $region73: #{tpu_custom_call.1} parent=71 // pred_check
          %p456 = pneg %p73
        $region74: #{tpu_custom_call.1} parent=71 // pred_check_branch
          %458 = sbr.rel (%p456) target = $region76
        $region75: #{tpu_custom_call.1} parent=71 // pred_region
          %459 = dma.done [#allocation3], 59136
        $region76: #{tpu_custom_call.1} parent=71 // pred_fallthru
          _
        // Predicated region
        $region77: #{tpu_custom_call.1} parent=71 // pred_check
          %p460 = pneg %p94
        $region78: #{tpu_custom_call.1} parent=71 // pred_check_branch
          %462 = sbr.rel (%p460) target = $region80
        $region79: #{tpu_custom_call.1} parent=71 // pred_region
          %463 = dma.done [#allocation6], 6144
        $region80: #{tpu_custom_call.1} parent=71 // pred_fallthru
          _
        // Predicated region
        $region81: #{tpu_custom_call.1} parent=71 // pred_check
          %p464 = pneg %p115
        $region82: #{tpu_custom_call.1} parent=71 // pred_check_branch
          %466 = sbr.rel (%p464) target = $region84
        $region83: #{tpu_custom_call.1} parent=71 // pred_region
          %467 = dma.done [#allocation6], 128
        $region84: #{tpu_custom_call.1} parent=71 // pred_fallthru
          _
        // Predicated region
        $region85: #{tpu_custom_call.1} parent=71 // pred_check
          %p468 = pneg %p157
        $region86: #{tpu_custom_call.1} parent=71 // pred_check_branch
          %470 = sbr.rel (%p468) target = $region88
        $region87: #{tpu_custom_call.1} parent=71 // pred_region
          %471 = dma.done [#allocation9], 128
        $region88: #{tpu_custom_call.1} parent=71 // pred_fallthru
          _
        // Predicated region
        $region89: #{tpu_custom_call.1} parent=71 // pred_check
          %p472 = pneg %p220
        $region90: #{tpu_custom_call.1} parent=71 // pred_check_branch
          %474 = sbr.rel (%p472) target = $region92
        $region91: #{tpu_custom_call.1} parent=71 // pred_region
          %475 = dma.done [#allocation9], 256
        $region92: #{tpu_custom_call.1} parent=71 // pred_fallthru
          _
        // Predicated region
        $region93: #{tpu_custom_call.1} parent=71 // pred_check
          %p476 = pneg %p283
        $region94: #{tpu_custom_call.1} parent=71 // pred_check_branch
          %478 = sbr.rel (%p476) target = $region96
        $region95: #{tpu_custom_call.1} parent=71 // pred_region
          %479 = dma.done [#allocation12], 512
        $region96: #{tpu_custom_call.1} parent=71 // pred_fallthru
          _
        %p480 = scmp.lt.s32.totalorder %s31, 1
        %s481 = scalar_select %p480, %s31, 1
        %s482 = smul.addr %s481, 6
        %s483 = smul.addr %s482, 8
        %s484 = scalar_lea.vmem %s0, %s483
        %p485 = pneg %p52
        %p486 = pneg %p49
        %p487 = pneg %p73
        %p488 = pneg %p70
        %p489 = pneg %p94
        %p490 = pneg %p91
        %p491 = pneg %p115
        %p492 = pneg %p112
        %p493 = pneg %p136
        %p494 = pneg %p133
        %p495 = pneg %p157
        %p496 = pneg %p154
        %p497 = pneg %p178
        %p498 = pneg %p175
        %p499 = pneg %p199
        %p500 = pneg %p196
        %p501 = pneg %p220
        %p502 = pneg %p217
        %p503 = pneg %p241
        %p504 = pneg %p238
        %p505 = pneg %p262
        %p506 = pneg %p259
        %p507 = pneg %p283
        %p508 = pneg %p280
        %p509 = pneg %p304
        %p510 = pneg %p301
        %p511 = pneg %p330
        %p512 = pneg %p327
        %s513 = sand.u32 %s317, 1
        %s514 = scalar_lea.sflag [#allocation4], %s513
        %s515 = sand.u32 %s317, 1
        %s516 = smul.addr %s515, 16
        %s517 = scalar_lea.vmem [#allocation13], %s516
        %p518 = scmp.lt.s32.totalorder %s31, 1
        %s519 = scalar_select %p518, %s31, 1
        %s520 = smul.addr %s519, 6
        %s521 = smul.addr %s520, 8
        %s522 = scalar_lea.vmem %s0, %s521
        %v523 = vld [vmem:[%s522] sm:$0xff]
        %v524 = vld [vmem:[%s522 + $0x8] sm:$0xff]
        %v525 = vld [vmem:[%s522 + $0x10] sm:$0xff]
        %v526 = vld [vmem:[%s522 + $0x18] sm:$0xff]
        %v527 = vld [vmem:[%s522 + $0x20] sm:$0x3f]
        %v528 = vld [vmem:[%s522 + $0x28] sm:$0x3f]
        %v529 = vld [vmem:[#allocation2] sm:$0xff]
        %v530 = vld [vmem:[#allocation2 + $0x8] sm:$0xff]
        %v531 = vld [vmem:[#allocation2 + $0x10] sm:$0xff]
        %v532 = vld [vmem:[#allocation2 + $0x18] sm:$0xff]
        %v533 = vld [vmem:[#allocation2 + $0x20] sm:$0xff]
        %v534 = vld [vmem:[#allocation2 + $0x28] sm:$0xff]
        %v535 = vld [vmem:[#allocation2 + $0x30] sm:$0xff]
        %v536 = vld [vmem:[#allocation2 + $0x38] sm:$0xff]
        %v537 = vld [vmem:[#allocation2 + $0x40] sm:$0xff]
        %v538 = vld [vmem:[#allocation2 + $0x48] sm:$0xff]
        %v539 = vld [vmem:[#allocation2 + $0x50] sm:$0xff]
        %v540 = vld [vmem:[#allocation2 + $0x58] sm:$0xff]
        %v541 = vld [vmem:[#allocation2 + $0x60] sm:$0xff]
        %v542 = vld [vmem:[#allocation2 + $0x68] sm:$0xff]
        %v543 = vld [vmem:[#allocation2 + $0x70] sm:$0xff]
        %v544 = vld [vmem:[#allocation2 + $0x78] sm:$0xff]
        %v545 = vld [vmem:[#allocation2 + $0x80] sm:$0xff]
        %v546 = vld [vmem:[#allocation2 + $0x88] sm:$0xff]
        %v547 = vld [vmem:[#allocation2 + $0x90] sm:$0xff]
        %v548 = vld [vmem:[#allocation2 + $0x98] sm:$0xff]
        %v549 = vld [vmem:[#allocation2 + $0xa0] sm:$0xff]
        %v550 = vld [vmem:[#allocation2 + $0xa8] sm:$0xff]
        %v551 = vld [vmem:[#allocation2 + $0xb0] sm:$0xff]
        %v552 = vld [vmem:[#allocation2 + $0xb8] sm:$0xff]
        %v553 = vld [vmem:[#allocation2 + $0xc0] sm:$0xff]
        %v554 = vld [vmem:[#allocation2 + $0xc8] sm:$0xff]
        %v555 = vld [vmem:[#allocation2 + $0xd0] sm:$0xff]
        %v556 = vld [vmem:[#allocation2 + $0xd8] sm:$0xff]
        %v557 = vld [vmem:[#allocation2 + $0xe0] sm:$0xff]
        %v558 = vld [vmem:[#allocation2 + $0xe8] sm:$0xff]
        %v559 = vld [vmem:[#allocation2 + $0xf0] sm:$0xff]
        %v560 = vld [vmem:[#allocation2 + $0xf8] sm:$0xff]
        %v561 = vld [vmem:[#allocation2 + $0x100] sm:$0xff]
        %v562 = vld [vmem:[#allocation2 + $0x108] sm:$0xff]
        %v563 = vld [vmem:[#allocation2 + $0x110] sm:$0xff]
        %v564 = vld [vmem:[#allocation2 + $0x118] sm:$0xff]
        %v565 = vld [vmem:[#allocation2 + $0x120] sm:$0xff]
        %v566 = vld [vmem:[#allocation2 + $0x128] sm:$0xff]
        %v567 = vld [vmem:[#allocation2 + $0x130] sm:$0xff]
        %v568 = vld [vmem:[#allocation2 + $0x138] sm:$0xff]
        %v569 = vld [vmem:[#allocation2 + $0x140] sm:$0xff]
        %v570 = vld [vmem:[#allocation2 + $0x148] sm:$0xff]
        %v571 = vld [vmem:[#allocation2 + $0x150] sm:$0xff]
        %v572 = vld [vmem:[#allocation2 + $0x158] sm:$0xff]
        %v573 = vld [vmem:[#allocation2 + $0x160] sm:$0xff]
        %v574 = vld [vmem:[#allocation2 + $0x168] sm:$0xff]
        %v575 = vld [vmem:[#allocation2 + $0x170] sm:$0xff]
        %v576 = vld [vmem:[#allocation2 + $0x178] sm:$0xff]
        %v577 = vld [vmem:[#allocation2 + $0x180] sm:$0xff]
        %v578 = vld [vmem:[#allocation2 + $0x188] sm:$0xff]
        %v579 = vld [vmem:[#allocation2 + $0x190] sm:$0xff]
        %v580 = vld [vmem:[#allocation2 + $0x198] sm:$0xff]
        %v581 = vld [vmem:[#allocation2 + $0x1a0] sm:$0xff]
        %v582 = vld [vmem:[#allocation2 + $0x1a8] sm:$0xff]
        %v583 = vld [vmem:[#allocation2 + $0x1b0] sm:$0xff]
        %v584 = vld [vmem:[#allocation2 + $0x1b8] sm:$0xff]
        %v585 = vld [vmem:[#allocation2 + $0x1c0] sm:$0xff]
        %v586 = vld [vmem:[#allocation2 + $0x1c8] sm:$0xff]
        %v587 = vld [vmem:[#allocation2 + $0x1d0] sm:$0xff]
        %v588 = vld [vmem:[#allocation2 + $0x1d8] sm:$0xff]
        %v589 = vld [vmem:[#allocation2 + $0x1e0] sm:$0xff]
        %v590 = vld [vmem:[#allocation2 + $0x1e8] sm:$0xff]
        %v591 = vld [vmem:[#allocation2 + $0x1f0] sm:$0xff]
        %v592 = vld [vmem:[#allocation2 + $0x1f8] sm:$0xff]
        %v593 = vld [vmem:[#allocation2 + $0x200] sm:$0xff]
        %v594 = vld [vmem:[#allocation2 + $0x208] sm:$0xff]
        %s595 = scalar_lea.vmem [#allocation2], 528
        %v596 = vld [vmem:[%s595] sm:$0xff]
        %v597 = vld [vmem:[%s595 + $0x8] sm:$0xff]
        %v598 = vld [vmem:[%s595 + $0x10] sm:$0xff]
        %v599 = vld [vmem:[%s595 + $0x18] sm:$0xff]
        %v600 = vld [vmem:[%s595 + $0x20] sm:$0xff]
        %v601 = vld [vmem:[%s595 + $0x28] sm:$0xff]
        %v602 = vld [vmem:[%s595 + $0x30] sm:$0xff]
        %v603 = vld [vmem:[%s595 + $0x38] sm:$0xff]
        %v604 = vld [vmem:[%s595 + $0x40] sm:$0xff]
        %v605 = vld [vmem:[%s595 + $0x48] sm:$0xff]
        %v606 = vld [vmem:[%s595 + $0x50] sm:$0xff]
        %v607 = vld [vmem:[%s595 + $0x58] sm:$0xff]
        %v608 = vld [vmem:[%s595 + $0x60] sm:$0xff]
        %v609 = vld [vmem:[%s595 + $0x68] sm:$0xff]
        %v610 = vld [vmem:[%s595 + $0x70] sm:$0xff]
        %v611 = vld [vmem:[%s595 + $0x78] sm:$0xff]
        %v612 = vld [vmem:[%s595 + $0x80] sm:$0xff]
        %v613 = vld [vmem:[%s595 + $0x88] sm:$0xff]
        %v614 = vld [vmem:[%s595 + $0x90] sm:$0xff]
        %v615 = vld [vmem:[%s595 + $0x98] sm:$0xff]
        %v616 = vld [vmem:[%s595 + $0xa0] sm:$0xff]
        %v617 = vld [vmem:[%s595 + $0xa8] sm:$0xff]
        %v618 = vld [vmem:[%s595 + $0xb0] sm:$0xff]
        %v619 = vld [vmem:[%s595 + $0xb8] sm:$0xff]
        %v620 = vld [vmem:[%s595 + $0xc0] sm:$0xff]
        %v621 = vld [vmem:[%s595 + $0xc8] sm:$0xff]
        %v622 = vld [vmem:[%s595 + $0xd0] sm:$0xff]
        %v623 = vld [vmem:[%s595 + $0xd8] sm:$0xff]
        %v624 = vld [vmem:[%s595 + $0xe0] sm:$0xff]
        %v625 = vld [vmem:[%s595 + $0xe8] sm:$0xff]
        %v626 = vld [vmem:[%s595 + $0xf0] sm:$0xff]
        %v627 = vld [vmem:[%s595 + $0xf8] sm:$0xff]
        %v628 = vld [vmem:[%s595 + $0x100] sm:$0xff]
        %v629 = vld [vmem:[%s595 + $0x108] sm:$0xff]
        %v630 = vld [vmem:[%s595 + $0x110] sm:$0xff]
        %v631 = vld [vmem:[%s595 + $0x118] sm:$0xff]
        %v632 = vld [vmem:[%s595 + $0x120] sm:$0xff]
        %v633 = vld [vmem:[%s595 + $0x128] sm:$0xff]
        %v634 = vld [vmem:[%s595 + $0x130] sm:$0xff]
        %v635 = vld [vmem:[%s595 + $0x138] sm:$0xff]
        %v636 = vld [vmem:[%s595 + $0x140] sm:$0xff]
        %v637 = vld [vmem:[%s595 + $0x148] sm:$0xff]
        %v638 = vld [vmem:[%s595 + $0x150] sm:$0xff]
        %v639 = vld [vmem:[%s595 + $0x158] sm:$0xff]
        %v640 = vld [vmem:[%s595 + $0x160] sm:$0xff]
        %v641 = vld [vmem:[%s595 + $0x168] sm:$0xff]
        %v642 = vld [vmem:[%s595 + $0x170] sm:$0xff]
        %v643 = vld [vmem:[%s595 + $0x178] sm:$0xff]
        %v644 = vld [vmem:[%s595 + $0x180] sm:$0xff]
        %v645 = vld [vmem:[%s595 + $0x188] sm:$0xff]
        %v646 = vld [vmem:[%s595 + $0x190] sm:$0xff]
        %v647 = vld [vmem:[%s595 + $0x198] sm:$0xff]
        %v648 = vld [vmem:[%s595 + $0x1a0] sm:$0xff]
        %v649 = vld [vmem:[%s595 + $0x1a8] sm:$0xff]
        %v650 = vld [vmem:[%s595 + $0x1b0] sm:$0xff]
        %v651 = vld [vmem:[%s595 + $0x1b8] sm:$0xff]
        %v652 = vld [vmem:[%s595 + $0x1c0] sm:$0xff]
        %v653 = vld [vmem:[%s595 + $0x1c8] sm:$0xff]
        %v654 = vld [vmem:[%s595 + $0x1d0] sm:$0xff]
        %v655 = vld [vmem:[%s595 + $0x1d8] sm:$0xff]
        %v656 = vld [vmem:[%s595 + $0x1e0] sm:$0xff]
        %v657 = vld [vmem:[%s595 + $0x1e8] sm:$0xff]
        %v658 = vld [vmem:[%s595 + $0x1f0] sm:$0xff]
        %v659 = vld [vmem:[%s595 + $0x1f8] sm:$0xff]
        %v660 = vld [vmem:[%s595 + $0x200] sm:$0xff]
        %v661 = vld [vmem:[%s595 + $0x208] sm:$0xff]
        %vm668 = vcmask 1046528
        %v669 = vrot.slane %v523, 1
        %v670 = vrot.slane %v525, 1
        %v671 = vsel %vm668, %v669, %v670
        %v672 = vrot.slane %v524, 1
        %v673 = vrot.slane %v526, 1
        %v674 = vsel %vm668, %v672, %v673
        %v675 = vrot.slane %v527, 1
        %v676 = vsel %vm668, %v670, %v675
        %v677 = vrot.slane %v528, 1
        %v678 = vsel %vm668, %v673, %v677
        %vm681 = vcmask 392192
        %v682 = vsel %vm681, %v674, 0
        %v684 = vsel %vm681, %v678, 0
        %686 = vmatprep.subr.mxu0 %v597
        %687 = vmatpush1.msra.mxu0 %v596
        %688 = vmatprep.subr.mxu0 %v600
        %689 = vmatpush1.msra.mxu0 %v599
        %690 = vmatprep.subr.mxu0 %v603
        %691 = vmatpush1.msra.mxu0 %v602
        %692 = vmatprep.subr.mxu0 %v606
        %693 = vmatpush1.msra.mxu0 %v605
        %694 = vmatprep.subr.mxu0 %v609
        %695 = vmatpush1.msra.mxu0 %v608
        %696 = vmatprep.subr.mxu0 %v612
        %697 = vmatpush1.msra.mxu0 %v611
        %698 = vmatprep.subr.mxu0 %v615
        %699 = vmatpush1.msra.mxu0 %v614
        %700 = vmatprep.subr.mxu0 %v618
        %701 = vmatpush1.msra.mxu0 %v617
        %702 = vmatprep.subr.mxu0 %v621
        %703 = vmatpush1.msra.mxu0 %v620
        %704 = vmatprep.subr.mxu0 %v624
        %705 = vmatpush1.msra.mxu0 %v623
        %706 = vmatprep.subr.mxu0 %v627
        %707 = vmatpush1.msra.mxu0 %v626
        %708 = vmatprep.subr.mxu0 %v630
        %709 = vmatpush1.msra.mxu0 %v629
        %710 = vmatprep.subr.mxu0 %v633
        %711 = vmatpush1.msra.mxu0 %v632
        %712 = vmatprep.subr.mxu0 %v636
        %713 = vmatpush1.msra.mxu0 %v635
        %714 = vmatprep.subr.mxu0 %v639
        %715 = vmatpush1.msra.mxu0 %v638
        %716 = vmatprep.subr.mxu0 %v642
        %717 = vmatpush1.msra.mxu0 %v641
        %718 = vmatprep.subr.mxu0 %v645
        %719 = vmatpush1.msra.mxu0 %v644
        %720 = vmatprep.subr.mxu0 %v648
        %721 = vmatpush1.msra.mxu0 %v647
        %722 = vmatprep.subr.mxu0 %v651
        %723 = vmatpush1.msra.mxu0 %v650
        %724 = vmatprep.subr.mxu0 %v654
        %725 = vmatpush1.msra.mxu0 %v653
        %726 = vmatprep.subr.mxu0 %v657
        %727 = vmatpush1.msra.mxu0 %v656
        %728 = vmatprep.subr.mxu0 %v660
        %729 = vmatpush1.msra.mxu0 %v659
        %730 = vmatprep.subr.mxu0 0.0
        %731 = vmatpush1.msra.mxu0 0.0
        %732 = vmatprep.subr.mxu0 0.0
        %733 = vmatpush1.msra.mxu0 0.0
        %734 = vmatprep.subr.mxu0 0.0
        %735 = vmatpush1.msra.mxu0 0.0
        %736 = vmatprep.subr.mxu0 0.0
        %737 = vmatpush1.msra.mxu0 0.0
        %738 = vmatprep.subr.mxu0 0.0
        %739 = vmatpush1.msra.mxu0 0.0
        %740 = vmatprep.subr.mxu0 0.0
        %741 = vmatpush1.msra.mxu0 0.0
        %742 = vmatprep.subr.mxu0 0.0
        %743 = vmatpush1.msra.mxu0 0.0
        %744 = vmatprep.subr.mxu0 0.0
        %745 = vmatpush1.msra.mxu0 0.0
        %746 = vmatprep.subr.mxu0 0.0
        %747 = vmatpush1.msra.mxu0 0.0
        %748 = vmatprep.subr.mxu0 0.0
        %749 = vmatpush1.msra.mxu0 0.0
        %750 = vmatprep.mubr.f32.mxu0 %v682
        %751 = vmatmul.mubr.f32.gmra.mrb[0].mxu0 %v671
        %v752 = vpop.f32.mrb[0].mxu0
        %v753 = vadd.f32 0.0, %v752
        %v754 = vpop.f32.mrb[0].mxu0
        %v755 = vadd.f32 0.0, %v754
        %756 = vmatprep.mubr.f32.mxu0 %v684
        %757 = vmatmul.mubr.f32.gmra.mrb[0].mxu0 %v676
        %v758 = vpop.f32.mrb[0].mxu0
        %v759 = vadd.f32 0.0, %v758
        %v760 = vpop.f32.mrb[0].mxu0
        %v761 = vadd.f32 0.0, %v760
        %762 = vdwg.mxu0
        %763 = vmatprep.subr.mxu0 0.0
        %764 = vmatpush1.msra.mxu0 %v598
        %765 = vmatprep.subr.mxu0 0.0
        %766 = vmatpush1.msra.mxu0 %v601
        %767 = vmatprep.subr.mxu0 0.0
        %768 = vmatpush1.msra.mxu0 %v604
        %769 = vmatprep.subr.mxu0 0.0
        %770 = vmatpush1.msra.mxu0 %v607
        %771 = vmatprep.subr.mxu0 0.0
        %772 = vmatpush1.msra.mxu0 %v610
        %773 = vmatprep.subr.mxu0 0.0
        %774 = vmatpush1.msra.mxu0 %v613
        %775 = vmatprep.subr.mxu0 0.0
        %776 = vmatpush1.msra.mxu0 %v616
        %777 = vmatprep.subr.mxu0 0.0
        %778 = vmatpush1.msra.mxu0 %v619
        %779 = vmatprep.subr.mxu0 0.0
        %780 = vmatpush1.msra.mxu0 %v622
        %781 = vmatprep.subr.mxu0 0.0
        %782 = vmatpush1.msra.mxu0 %v625
        %783 = vmatprep.subr.mxu0 0.0
        %784 = vmatpush1.msra.mxu0 %v628
        %785 = vmatprep.subr.mxu0 0.0
        %786 = vmatpush1.msra.mxu0 %v631
        %787 = vmatprep.subr.mxu0 0.0
        %788 = vmatpush1.msra.mxu0 %v634
        %789 = vmatprep.subr.mxu0 0.0
        %790 = vmatpush1.msra.mxu0 %v637
        %791 = vmatprep.subr.mxu0 0.0
        %792 = vmatpush1.msra.mxu0 %v640
        %793 = vmatprep.subr.mxu0 0.0
        %794 = vmatpush1.msra.mxu0 %v643
        %795 = vmatprep.subr.mxu0 0.0
        %796 = vmatpush1.msra.mxu0 %v646
        %797 = vmatprep.subr.mxu0 0.0
        %798 = vmatpush1.msra.mxu0 %v649
        %799 = vmatprep.subr.mxu0 0.0
        %800 = vmatpush1.msra.mxu0 %v652
        %801 = vmatprep.subr.mxu0 0.0
        %802 = vmatpush1.msra.mxu0 %v655
        %803 = vmatprep.subr.mxu0 0.0
        %804 = vmatpush1.msra.mxu0 %v658
        %805 = vmatprep.subr.mxu0 0.0
        %806 = vmatpush1.msra.mxu0 %v661
        %807 = vmatprep.subr.mxu0 0.0
        %808 = vmatpush1.msra.mxu0 0.0
        %809 = vmatprep.subr.mxu0 0.0
        %810 = vmatpush1.msra.mxu0 0.0
        %811 = vmatprep.subr.mxu0 0.0
        %812 = vmatpush1.msra.mxu0 0.0
        %813 = vmatprep.subr.mxu0 0.0
        %814 = vmatpush1.msra.mxu0 0.0
        %815 = vmatprep.subr.mxu0 0.0
        %816 = vmatpush1.msra.mxu0 0.0
        %817 = vmatprep.subr.mxu0 0.0
        %818 = vmatpush1.msra.mxu0 0.0
        %819 = vmatprep.subr.mxu0 0.0
        %820 = vmatpush1.msra.mxu0 0.0
        %821 = vmatprep.subr.mxu0 0.0
        %822 = vmatpush1.msra.mxu0 0.0
        %823 = vmatprep.subr.mxu0 0.0
        %824 = vmatpush1.msra.mxu0 0.0
        %825 = vmatprep.subr.mxu0 0.0
        %826 = vmatpush1.msra.mxu0 0.0
        %827 = vmatprep.mubr.f32.mxu0 %v682
        %828 = vmatmul.mubr.f32.gmra.mrb[0].mxu0 %v671
        %v829 = vpop.f32.mrb[0].mxu0
        %v830 = vadd.f32 0.0, %v829
        %v831 = vpop.f32.mrb[0].mxu0
        %832 = vmatprep.mubr.f32.mxu0 %v684
        %833 = vmatmul.mubr.f32.gmra.mrb[0].mxu0 %v676
        %v834 = vpop.f32.mrb[0].mxu0
        %v835 = vadd.f32 0.0, %v834
        %v836 = vpop.f32.mrb[0].mxu0
        %837 = vdwg.mxu0
        %v838 = vsel %vm681, %v524, 0
        %v840 = vsel %vm681, %v526, 0
        %842 = vmatprep.subr.mxu0 %v530
        %843 = vmatpush1.msra.mxu0 %v529
        %844 = vmatprep.subr.mxu0 %v533
        %845 = vmatpush1.msra.mxu0 %v532
        %846 = vmatprep.subr.mxu0 %v536
        %847 = vmatpush1.msra.mxu0 %v535
        %848 = vmatprep.subr.mxu0 %v539
        %849 = vmatpush1.msra.mxu0 %v538
        %850 = vmatprep.subr.mxu0 %v542
        %851 = vmatpush1.msra.mxu0 %v541
        %852 = vmatprep.subr.mxu0 %v545
        %853 = vmatpush1.msra.mxu0 %v544
        %854 = vmatprep.subr.mxu0 %v548
        %855 = vmatpush1.msra.mxu0 %v547
        %856 = vmatprep.subr.mxu0 %v551
        %857 = vmatpush1.msra.mxu0 %v550
        %858 = vmatprep.subr.mxu0 %v554
        %859 = vmatpush1.msra.mxu0 %v553
        %860 = vmatprep.subr.mxu0 %v557
        %861 = vmatpush1.msra.mxu0 %v556
        %862 = vmatprep.subr.mxu0 %v560
        %863 = vmatpush1.msra.mxu0 %v559
        %864 = vmatprep.subr.mxu0 %v563
        %865 = vmatpush1.msra.mxu0 %v562
        %866 = vmatprep.subr.mxu0 %v566
        %867 = vmatpush1.msra.mxu0 %v565
        %868 = vmatprep.subr.mxu0 %v569
        %869 = vmatpush1.msra.mxu0 %v568
        %870 = vmatprep.subr.mxu0 %v572
        %871 = vmatpush1.msra.mxu0 %v571
        %872 = vmatprep.subr.mxu0 %v575
        %873 = vmatpush1.msra.mxu0 %v574
        %874 = vmatprep.subr.mxu0 %v578
        %875 = vmatpush1.msra.mxu0 %v577
        %876 = vmatprep.subr.mxu0 %v581
        %877 = vmatpush1.msra.mxu0 %v580
        %878 = vmatprep.subr.mxu0 %v584
        %879 = vmatpush1.msra.mxu0 %v583
        %880 = vmatprep.subr.mxu0 %v587
        %881 = vmatpush1.msra.mxu0 %v586
        %882 = vmatprep.subr.mxu0 %v590
        %883 = vmatpush1.msra.mxu0 %v589
        %884 = vmatprep.subr.mxu0 %v593
        %885 = vmatpush1.msra.mxu0 %v592
        %886 = vmatprep.subr.mxu0 0.0
        %887 = vmatpush1.msra.mxu0 0.0
        %888 = vmatprep.subr.mxu0 0.0
        %889 = vmatpush1.msra.mxu0 0.0
        %890 = vmatprep.subr.mxu0 0.0
        %891 = vmatpush1.msra.mxu0 0.0
        %892 = vmatprep.subr.mxu0 0.0
        %893 = vmatpush1.msra.mxu0 0.0
        %894 = vmatprep.subr.mxu0 0.0
        %895 = vmatpush1.msra.mxu0 0.0
        %896 = vmatprep.subr.mxu0 0.0
        %897 = vmatpush1.msra.mxu0 0.0
        %898 = vmatprep.subr.mxu0 0.0
        %899 = vmatpush1.msra.mxu0 0.0
        %900 = vmatprep.subr.mxu0 0.0
        %901 = vmatpush1.msra.mxu0 0.0
        %902 = vmatprep.subr.mxu0 0.0
        %903 = vmatpush1.msra.mxu0 0.0
        %904 = vmatprep.subr.mxu0 0.0
        %905 = vmatpush1.msra.mxu0 0.0
        %906 = vmatprep.mubr.f32.mxu0 %v838
        %907 = vmatmul.mubr.f32.gmra.mrb[0].mxu0 %v523
        %v908 = vpop.f32.mrb[0].mxu0
        %v909 = vadd.f32 %v753, %v908
        %v910 = vpop.f32.mrb[0].mxu0
        %v911 = vadd.f32 %v755, %v910
        %912 = vmatprep.mubr.f32.mxu0 %v840
        %913 = vmatmul.mubr.f32.gmra.mrb[0].mxu0 %v525
        %v914 = vpop.f32.mrb[0].mxu0
        %v915 = vadd.f32 %v759, %v914
        %v916 = vpop.f32.mrb[0].mxu0
        %v917 = vadd.f32 %v761, %v916
        %918 = vdwg.mxu0
        %919 = vmatprep.subr.mxu0 0.0
        %920 = vmatpush1.msra.mxu0 %v531
        %921 = vmatprep.subr.mxu0 0.0
        %922 = vmatpush1.msra.mxu0 %v534
        %923 = vmatprep.subr.mxu0 0.0
        %924 = vmatpush1.msra.mxu0 %v537
        %925 = vmatprep.subr.mxu0 0.0
        %926 = vmatpush1.msra.mxu0 %v540
        %927 = vmatprep.subr.mxu0 0.0
        %928 = vmatpush1.msra.mxu0 %v543
        %929 = vmatprep.subr.mxu0 0.0
        %930 = vmatpush1.msra.mxu0 %v546
        %931 = vmatprep.subr.mxu0 0.0
        %932 = vmatpush1.msra.mxu0 %v549
        %933 = vmatprep.subr.mxu0 0.0
        %934 = vmatpush1.msra.mxu0 %v552
        %935 = vmatprep.subr.mxu0 0.0
        %936 = vmatpush1.msra.mxu0 %v555
        %937 = vmatprep.subr.mxu0 0.0
        %938 = vmatpush1.msra.mxu0 %v558
        %939 = vmatprep.subr.mxu0 0.0
        %940 = vmatpush1.msra.mxu0 %v561
        %941 = vmatprep.subr.mxu0 0.0
        %942 = vmatpush1.msra.mxu0 %v564
        %943 = vmatprep.subr.mxu0 0.0
        %944 = vmatpush1.msra.mxu0 %v567
        %945 = vmatprep.subr.mxu0 0.0
        %946 = vmatpush1.msra.mxu0 %v570
        %947 = vmatprep.subr.mxu0 0.0
        %948 = vmatpush1.msra.mxu0 %v573
        %949 = vmatprep.subr.mxu0 0.0
        %950 = vmatpush1.msra.mxu0 %v576
        %951 = vmatprep.subr.mxu0 0.0
        %952 = vmatpush1.msra.mxu0 %v579
        %953 = vmatprep.subr.mxu0 0.0
        %954 = vmatpush1.msra.mxu0 %v582
        %955 = vmatprep.subr.mxu0 0.0
        %956 = vmatpush1.msra.mxu0 %v585
        %957 = vmatprep.subr.mxu0 0.0
        %958 = vmatpush1.msra.mxu0 %v588
        %959 = vmatprep.subr.mxu0 0.0
        %960 = vmatpush1.msra.mxu0 %v591
        %961 = vmatprep.subr.mxu0 0.0
        %962 = vmatpush1.msra.mxu0 %v594
        %963 = vmatprep.subr.mxu0 0.0
        %964 = vmatpush1.msra.mxu0 0.0
        %965 = vmatprep.subr.mxu0 0.0
        %966 = vmatpush1.msra.mxu0 0.0
        %967 = vmatprep.subr.mxu0 0.0
        %968 = vmatpush1.msra.mxu0 0.0
        %969 = vmatprep.subr.mxu0 0.0
        %970 = vmatpush1.msra.mxu0 0.0
        %971 = vmatprep.subr.mxu0 0.0
        %972 = vmatpush1.msra.mxu0 0.0
        %973 = vmatprep.subr.mxu0 0.0
        %974 = vmatpush1.msra.mxu0 0.0
        %975 = vmatprep.subr.mxu0 0.0
        %976 = vmatpush1.msra.mxu0 0.0
        %977 = vmatprep.subr.mxu0 0.0
        %978 = vmatpush1.msra.mxu0 0.0
        %979 = vmatprep.subr.mxu0 0.0
        %980 = vmatpush1.msra.mxu0 0.0
        %981 = vmatprep.subr.mxu0 0.0
        %982 = vmatpush1.msra.mxu0 0.0
        %983 = vmatprep.mubr.f32.mxu0 %v838
        %984 = vmatmul.mubr.f32.gmra.mrb[0].mxu0 %v523
        %v985 = vpop.f32.mrb[0].mxu0
        %v986 = vadd.f32 %v830, %v985
        %v987 = vpop.f32.mrb[0].mxu0
        %988 = vmatprep.mubr.f32.mxu0 %v840
        %989 = vmatmul.mubr.f32.gmra.mrb[0].mxu0 %v525
        %v990 = vpop.f32.mrb[0].mxu0
        %v991 = vadd.f32 %v835, %v990
        %v992 = vpop.f32.mrb[0].mxu0
        %993 = vdwg.mxu0
        %s994 = scalar_lea.vmem [#allocation2], 1056
        %v995 = vld [vmem:[%s994] sm:$0xff]
        %v996 = vld [vmem:[%s994 + $0x8] sm:$0xff]
        %v997 = vld [vmem:[%s994 + $0x10] sm:$0xff]
        %v998 = vld [vmem:[%s994 + $0x18] sm:$0xff]
        %v999 = vld [vmem:[%s994 + $0x20] sm:$0xff]
        %v1000 = vld [vmem:[%s994 + $0x28] sm:$0xff]
        %v1001 = vld [vmem:[%s994 + $0x30] sm:$0xff]
        %v1002 = vld [vmem:[%s994 + $0x38] sm:$0xff]
        %v1003 = vld [vmem:[%s994 + $0x40] sm:$0xff]
        %v1004 = vld [vmem:[%s994 + $0x48] sm:$0xff]
        %v1005 = vld [vmem:[%s994 + $0x50] sm:$0xff]
        %v1006 = vld [vmem:[%s994 + $0x58] sm:$0xff]
        %v1007 = vld [vmem:[%s994 + $0x60] sm:$0xff]
        %v1008 = vld [vmem:[%s994 + $0x68] sm:$0xff]
        %v1009 = vld [vmem:[%s994 + $0x70] sm:$0xff]
        %v1010 = vld [vmem:[%s994 + $0x78] sm:$0xff]
        %v1011 = vld [vmem:[%s994 + $0x80] sm:$0xff]
        %v1012 = vld [vmem:[%s994 + $0x88] sm:$0xff]
        %v1013 = vld [vmem:[%s994 + $0x90] sm:$0xff]
        %v1014 = vld [vmem:[%s994 + $0x98] sm:$0xff]
        %v1015 = vld [vmem:[%s994 + $0xa0] sm:$0xff]
        %v1016 = vld [vmem:[%s994 + $0xa8] sm:$0xff]
        %v1017 = vld [vmem:[%s994 + $0xb0] sm:$0xff]
        %v1018 = vld [vmem:[%s994 + $0xb8] sm:$0xff]
        %v1019 = vld [vmem:[%s994 + $0xc0] sm:$0xff]
        %v1020 = vld [vmem:[%s994 + $0xc8] sm:$0xff]
        %v1021 = vld [vmem:[%s994 + $0xd0] sm:$0xff]
        %v1022 = vld [vmem:[%s994 + $0xd8] sm:$0xff]
        %v1023 = vld [vmem:[%s994 + $0xe0] sm:$0xff]
        %v1024 = vld [vmem:[%s994 + $0xe8] sm:$0xff]
        %v1025 = vld [vmem:[%s994 + $0xf0] sm:$0xff]
        %v1026 = vld [vmem:[%s994 + $0xf8] sm:$0xff]
        %v1027 = vld [vmem:[%s994 + $0x100] sm:$0xff]
        %v1028 = vld [vmem:[%s994 + $0x108] sm:$0xff]
        %v1029 = vld [vmem:[%s994 + $0x110] sm:$0xff]
        %v1030 = vld [vmem:[%s994 + $0x118] sm:$0xff]
        %v1031 = vld [vmem:[%s994 + $0x120] sm:$0xff]
        %v1032 = vld [vmem:[%s994 + $0x128] sm:$0xff]
        %v1033 = vld [vmem:[%s994 + $0x130] sm:$0xff]
        %v1034 = vld [vmem:[%s994 + $0x138] sm:$0xff]
        %v1035 = vld [vmem:[%s994 + $0x140] sm:$0xff]
        %v1036 = vld [vmem:[%s994 + $0x148] sm:$0xff]
        %v1037 = vld [vmem:[%s994 + $0x150] sm:$0xff]
        %v1038 = vld [vmem:[%s994 + $0x158] sm:$0xff]
        %v1039 = vld [vmem:[%s994 + $0x160] sm:$0xff]
        %v1040 = vld [vmem:[%s994 + $0x168] sm:$0xff]
        %v1041 = vld [vmem:[%s994 + $0x170] sm:$0xff]
        %v1042 = vld [vmem:[%s994 + $0x178] sm:$0xff]
        %v1043 = vld [vmem:[%s994 + $0x180] sm:$0xff]
        %v1044 = vld [vmem:[%s994 + $0x188] sm:$0xff]
        %v1045 = vld [vmem:[%s994 + $0x190] sm:$0xff]
        %v1046 = vld [vmem:[%s994 + $0x198] sm:$0xff]
        %v1047 = vld [vmem:[%s994 + $0x1a0] sm:$0xff]
        %v1048 = vld [vmem:[%s994 + $0x1a8] sm:$0xff]
        %v1049 = vld [vmem:[%s994 + $0x1b0] sm:$0xff]
        %v1050 = vld [vmem:[%s994 + $0x1b8] sm:$0xff]
        %v1051 = vld [vmem:[%s994 + $0x1c0] sm:$0xff]
        %v1052 = vld [vmem:[%s994 + $0x1c8] sm:$0xff]
        %v1053 = vld [vmem:[%s994 + $0x1d0] sm:$0xff]
        %v1054 = vld [vmem:[%s994 + $0x1d8] sm:$0xff]
        %v1055 = vld [vmem:[%s994 + $0x1e0] sm:$0xff]
        %v1056 = vld [vmem:[%s994 + $0x1e8] sm:$0xff]
        %v1057 = vld [vmem:[%s994 + $0x1f0] sm:$0xff]
        %v1058 = vld [vmem:[%s994 + $0x1f8] sm:$0xff]
        %v1059 = vld [vmem:[%s994 + $0x200] sm:$0xff]
        %v1060 = vld [vmem:[%s994 + $0x208] sm:$0xff]
        %vm1061 = vcmask 1045504
        %v1062 = vrot.slane %v523, 2
        %v1063 = vrot.slane %v525, 2
        %v1064 = vsel %vm1061, %v1062, %v1063
        %v1065 = vrot.slane %v524, 2
        %v1066 = vrot.slane %v526, 2
        %v1067 = vsel %vm1061, %v1065, %v1066
        %v1068 = vrot.slane %v527, 2
        %v1069 = vsel %vm1061, %v1063, %v1068
        %v1070 = vrot.slane %v528, 2
        %v1071 = vsel %vm1061, %v1066, %v1070
        %v1074 = vsel %vm681, %v1067, 0
        %v1076 = vsel %vm681, %v1071, 0
        %1078 = vmatprep.subr.mxu0 %v996
        %1079 = vmatpush1.msra.mxu0 %v995
        %1080 = vmatprep.subr.mxu0 %v999
        %1081 = vmatpush1.msra.mxu0 %v998
        %1082 = vmatprep.subr.mxu0 %v1002
        %1083 = vmatpush1.msra.mxu0 %v1001
        %1084 = vmatprep.subr.mxu0 %v1005
        %1085 = vmatpush1.msra.mxu0 %v1004
        %1086 = vmatprep.subr.mxu0 %v1008
        %1087 = vmatpush1.msra.mxu0 %v1007
        %1088 = vmatprep.subr.mxu0 %v1011
        %1089 = vmatpush1.msra.mxu0 %v1010
        %1090 = vmatprep.subr.mxu0 %v1014
        %1091 = vmatpush1.msra.mxu0 %v1013
        %1092 = vmatprep.subr.mxu0 %v1017
        %1093 = vmatpush1.msra.mxu0 %v1016
        %1094 = vmatprep.subr.mxu0 %v1020
        %1095 = vmatpush1.msra.mxu0 %v1019
        %1096 = vmatprep.subr.mxu0 %v1023
        %1097 = vmatpush1.msra.mxu0 %v1022
        %1098 = vmatprep.subr.mxu0 %v1026
        %1099 = vmatpush1.msra.mxu0 %v1025
        %1100 = vmatprep.subr.mxu0 %v1029
        %1101 = vmatpush1.msra.mxu0 %v1028
        %1102 = vmatprep.subr.mxu0 %v1032
        %1103 = vmatpush1.msra.mxu0 %v1031
        %1104 = vmatprep.subr.mxu0 %v1035
        %1105 = vmatpush1.msra.mxu0 %v1034
        %1106 = vmatprep.subr.mxu0 %v1038
        %1107 = vmatpush1.msra.mxu0 %v1037
        %1108 = vmatprep.subr.mxu0 %v1041
        %1109 = vmatpush1.msra.mxu0 %v1040
        %1110 = vmatprep.subr.mxu0 %v1044
        %1111 = vmatpush1.msra.mxu0 %v1043
        %1112 = vmatprep.subr.mxu0 %v1047
        %1113 = vmatpush1.msra.mxu0 %v1046
        %1114 = vmatprep.subr.mxu0 %v1050
        %1115 = vmatpush1.msra.mxu0 %v1049
        %1116 = vmatprep.subr.mxu0 %v1053
        %1117 = vmatpush1.msra.mxu0 %v1052
        %1118 = vmatprep.subr.mxu0 %v1056
        %1119 = vmatpush1.msra.mxu0 %v1055
        %1120 = vmatprep.subr.mxu0 %v1059
        %1121 = vmatpush1.msra.mxu0 %v1058
        %1122 = vmatprep.subr.mxu0 0.0
        %1123 = vmatpush1.msra.mxu0 0.0
        %1124 = vmatprep.subr.mxu0 0.0
        %1125 = vmatpush1.msra.mxu0 0.0
        %1126 = vmatprep.subr.mxu0 0.0
        %1127 = vmatpush1.msra.mxu0 0.0
        %1128 = vmatprep.subr.mxu0 0.0
        %1129 = vmatpush1.msra.mxu0 0.0
        %1130 = vmatprep.subr.mxu0 0.0
        %1131 = vmatpush1.msra.mxu0 0.0
        %1132 = vmatprep.subr.mxu0 0.0
        %1133 = vmatpush1.msra.mxu0 0.0
        %1134 = vmatprep.subr.mxu0 0.0
        %1135 = vmatpush1.msra.mxu0 0.0
        %1136 = vmatprep.subr.mxu0 0.0
        %1137 = vmatpush1.msra.mxu0 0.0
        %1138 = vmatprep.subr.mxu0 0.0
        %1139 = vmatpush1.msra.mxu0 0.0
        %1140 = vmatprep.subr.mxu0 0.0
        %1141 = vmatpush1.msra.mxu0 0.0
        %1142 = vmatprep.mubr.f32.mxu0 %v1074
        %1143 = vmatmul.mubr.f32.gmra.mrb[0].mxu0 %v1064
        %v1144 = vpop.f32.mrb[0].mxu0
        %v1145 = vadd.f32 0.0, %v1144
        %v1146 = vpop.f32.mrb[0].mxu0
        %v1147 = vadd.f32 0.0, %v1146
        %1148 = vmatprep.mubr.f32.mxu0 %v1076
        %1149 = vmatmul.mubr.f32.gmra.mrb[0].mxu0 %v1069
        %v1150 = vpop.f32.mrb[0].mxu0
        %v1151 = vadd.f32 0.0, %v1150
        %v1152 = vpop.f32.mrb[0].mxu0
        %v1153 = vadd.f32 0.0, %v1152
        %1154 = vdwg.mxu0
        %1155 = vmatprep.subr.mxu0 0.0
        %1156 = vmatpush1.msra.mxu0 %v997
        %1157 = vmatprep.subr.mxu0 0.0
        %1158 = vmatpush1.msra.mxu0 %v1000
        %1159 = vmatprep.subr.mxu0 0.0
        %1160 = vmatpush1.msra.mxu0 %v1003
        %1161 = vmatprep.subr.mxu0 0.0
        %1162 = vmatpush1.msra.mxu0 %v1006
        %1163 = vmatprep.subr.mxu0 0.0
        %1164 = vmatpush1.msra.mxu0 %v1009
        %1165 = vmatprep.subr.mxu0 0.0
        %1166 = vmatpush1.msra.mxu0 %v1012
        %1167 = vmatprep.subr.mxu0 0.0
        %1168 = vmatpush1.msra.mxu0 %v1015
        %1169 = vmatprep.subr.mxu0 0.0
        %1170 = vmatpush1.msra.mxu0 %v1018
        %1171 = vmatprep.subr.mxu0 0.0
        %1172 = vmatpush1.msra.mxu0 %v1021
        %1173 = vmatprep.subr.mxu0 0.0
        %1174 = vmatpush1.msra.mxu0 %v1024
        %1175 = vmatprep.subr.mxu0 0.0
        %1176 = vmatpush1.msra.mxu0 %v1027
        %1177 = vmatprep.subr.mxu0 0.0
        %1178 = vmatpush1.msra.mxu0 %v1030
        %1179 = vmatprep.subr.mxu0 0.0
        %1180 = vmatpush1.msra.mxu0 %v1033
        %1181 = vmatprep.subr.mxu0 0.0
        %1182 = vmatpush1.msra.mxu0 %v1036
        %1183 = vmatprep.subr.mxu0 0.0
        %1184 = vmatpush1.msra.mxu0 %v1039
        %1185 = vmatprep.subr.mxu0 0.0
        %1186 = vmatpush1.msra.mxu0 %v1042
        %1187 = vmatprep.subr.mxu0 0.0
        %1188 = vmatpush1.msra.mxu0 %v1045
        %1189 = vmatprep.subr.mxu0 0.0
        %1190 = vmatpush1.msra.mxu0 %v1048
        %1191 = vmatprep.subr.mxu0 0.0
        %1192 = vmatpush1.msra.mxu0 %v1051
        %1193 = vmatprep.subr.mxu0 0.0
        %1194 = vmatpush1.msra.mxu0 %v1054
        %1195 = vmatprep.subr.mxu0 0.0
        %1196 = vmatpush1.msra.mxu0 %v1057
        %1197 = vmatprep.subr.mxu0 0.0
        %1198 = vmatpush1.msra.mxu0 %v1060
        %1199 = vmatprep.subr.mxu0 0.0
        %1200 = vmatpush1.msra.mxu0 0.0
        %1201 = vmatprep.subr.mxu0 0.0
        %1202 = vmatpush1.msra.mxu0 0.0
        %1203 = vmatprep.subr.mxu0 0.0
        %1204 = vmatpush1.msra.mxu0 0.0
        %1205 = vmatprep.subr.mxu0 0.0
        %1206 = vmatpush1.msra.mxu0 0.0
        %1207 = vmatprep.subr.mxu0 0.0
        %1208 = vmatpush1.msra.mxu0 0.0
        %1209 = vmatprep.subr.mxu0 0.0
        %1210 = vmatpush1.msra.mxu0 0.0
        %1211 = vmatprep.subr.mxu0 0.0
        %1212 = vmatpush1.msra.mxu0 0.0
        %1213 = vmatprep.subr.mxu0 0.0
        %1214 = vmatpush1.msra.mxu0 0.0
        %1215 = vmatprep.subr.mxu0 0.0
        %1216 = vmatpush1.msra.mxu0 0.0
        %1217 = vmatprep.subr.mxu0 0.0
        %1218 = vmatpush1.msra.mxu0 0.0
        %1219 = vmatprep.mubr.f32.mxu0 %v1074
        %1220 = vmatmul.mubr.f32.gmra.mrb[0].mxu0 %v1064
        %v1221 = vpop.f32.mrb[0].mxu0
        %v1222 = vadd.f32 0.0, %v1221
        %v1223 = vpop.f32.mrb[0].mxu0
        %1224 = vmatprep.mubr.f32.mxu0 %v1076
        %1225 = vmatmul.mubr.f32.gmra.mrb[0].mxu0 %v1069
        %v1226 = vpop.f32.mrb[0].mxu0
        %v1227 = vadd.f32 0.0, %v1226
        %v1228 = vpop.f32.mrb[0].mxu0
        %1229 = vdwg.mxu0
        %v1230 = vadd.f32 %v909, %v1145
        %v1231 = vadd.f32 %v911, %v1147
        %v1232 = vadd.f32 %v986, %v1222
        %v1233 = vadd.f32 %v915, %v1151
        %v1234 = vadd.f32 %v917, %v1153
        %v1235 = vadd.f32 %v991, %v1227
        %s1236 = scalar_lea.vmem [#allocation2], 1584
        %v1237 = vld [vmem:[%s1236] sm:$0xff]
        %v1238 = vld [vmem:[%s1236 + $0x8] sm:$0xff]
        %v1239 = vld [vmem:[%s1236 + $0x10] sm:$0xff]
        %v1240 = vld [vmem:[%s1236 + $0x18] sm:$0xff]
        %v1241 = vld [vmem:[%s1236 + $0x20] sm:$0xff]
        %v1242 = vld [vmem:[%s1236 + $0x28] sm:$0xff]
        %v1243 = vld [vmem:[%s1236 + $0x30] sm:$0xff]
        %v1244 = vld [vmem:[%s1236 + $0x38] sm:$0xff]
        %v1245 = vld [vmem:[%s1236 + $0x40] sm:$0xff]
        %v1246 = vld [vmem:[%s1236 + $0x48] sm:$0xff]
        %v1247 = vld [vmem:[%s1236 + $0x50] sm:$0xff]
        %v1248 = vld [vmem:[%s1236 + $0x58] sm:$0xff]
        %v1249 = vld [vmem:[%s1236 + $0x60] sm:$0xff]
        %v1250 = vld [vmem:[%s1236 + $0x68] sm:$0xff]
        %v1251 = vld [vmem:[%s1236 + $0x70] sm:$0xff]
        %v1252 = vld [vmem:[%s1236 + $0x78] sm:$0xff]
        %v1253 = vld [vmem:[%s1236 + $0x80] sm:$0xff]
        %v1254 = vld [vmem:[%s1236 + $0x88] sm:$0xff]
        %v1255 = vld [vmem:[%s1236 + $0x90] sm:$0xff]
        %v1256 = vld [vmem:[%s1236 + $0x98] sm:$0xff]
        %v1257 = vld [vmem:[%s1236 + $0xa0] sm:$0xff]
        %v1258 = vld [vmem:[%s1236 + $0xa8] sm:$0xff]
        %v1259 = vld [vmem:[%s1236 + $0xb0] sm:$0xff]
        %v1260 = vld [vmem:[%s1236 + $0xb8] sm:$0xff]
        %v1261 = vld [vmem:[%s1236 + $0xc0] sm:$0xff]
        %v1262 = vld [vmem:[%s1236 + $0xc8] sm:$0xff]
        %v1263 = vld [vmem:[%s1236 + $0xd0] sm:$0xff]
        %v1264 = vld [vmem:[%s1236 + $0xd8] sm:$0xff]
        %v1265 = vld [vmem:[%s1236 + $0xe0] sm:$0xff]
        %v1266 = vld [vmem:[%s1236 + $0xe8] sm:$0xff]
        %v1267 = vld [vmem:[%s1236 + $0xf0] sm:$0xff]
        %v1268 = vld [vmem:[%s1236 + $0xf8] sm:$0xff]
        %v1269 = vld [vmem:[%s1236 + $0x100] sm:$0xff]
        %v1270 = vld [vmem:[%s1236 + $0x108] sm:$0xff]
        %v1271 = vld [vmem:[%s1236 + $0x110] sm:$0xff]
        %v1272 = vld [vmem:[%s1236 + $0x118] sm:$0xff]
        %v1273 = vld [vmem:[%s1236 + $0x120] sm:$0xff]
        %v1274 = vld [vmem:[%s1236 + $0x128] sm:$0xff]
        %v1275 = vld [vmem:[%s1236 + $0x130] sm:$0xff]
        %v1276 = vld [vmem:[%s1236 + $0x138] sm:$0xff]
        %v1277 = vld [vmem:[%s1236 + $0x140] sm:$0xff]
        %v1278 = vld [vmem:[%s1236 + $0x148] sm:$0xff]
        %v1279 = vld [vmem:[%s1236 + $0x150] sm:$0xff]
        %v1280 = vld [vmem:[%s1236 + $0x158] sm:$0xff]
        %v1281 = vld [vmem:[%s1236 + $0x160] sm:$0xff]
        %v1282 = vld [vmem:[%s1236 + $0x168] sm:$0xff]
        %v1283 = vld [vmem:[%s1236 + $0x170] sm:$0xff]
        %v1284 = vld [vmem:[%s1236 + $0x178] sm:$0xff]
        %v1285 = vld [vmem:[%s1236 + $0x180] sm:$0xff]
        %v1286 = vld [vmem:[%s1236 + $0x188] sm:$0xff]
        %v1287 = vld [vmem:[%s1236 + $0x190] sm:$0xff]
        %v1288 = vld [vmem:[%s1236 + $0x198] sm:$0xff]
        %v1289 = vld [vmem:[%s1236 + $0x1a0] sm:$0xff]
        %v1290 = vld [vmem:[%s1236 + $0x1a8] sm:$0xff]
        %v1291 = vld [vmem:[%s1236 + $0x1b0] sm:$0xff]
        %v1292 = vld [vmem:[%s1236 + $0x1b8] sm:$0xff]
        %v1293 = vld [vmem:[%s1236 + $0x1c0] sm:$0xff]
        %v1294 = vld [vmem:[%s1236 + $0x1c8] sm:$0xff]
        %v1295 = vld [vmem:[%s1236 + $0x1d0] sm:$0xff]
        %v1296 = vld [vmem:[%s1236 + $0x1d8] sm:$0xff]
        %v1297 = vld [vmem:[%s1236 + $0x1e0] sm:$0xff]
        %v1298 = vld [vmem:[%s1236 + $0x1e8] sm:$0xff]
        %v1299 = vld [vmem:[%s1236 + $0x1f0] sm:$0xff]
        %v1300 = vld [vmem:[%s1236 + $0x1f8] sm:$0xff]
        %v1301 = vld [vmem:[%s1236 + $0x200] sm:$0xff]
        %v1302 = vld [vmem:[%s1236 + $0x208] sm:$0xff]
        %vm1303 = vcmask 1044480
        %v1304 = vrot.slane %v523, 3
        %v1305 = vrot.slane %v525, 3
        %v1306 = vsel %vm1303, %v1304, %v1305
        %v1307 = vrot.slane %v524, 3
        %v1308 = vrot.slane %v526, 3
        %v1309 = vsel %vm1303, %v1307, %v1308
        %v1310 = vrot.slane %v527, 3
        %v1311 = vsel %vm1303, %v1305, %v1310
        %v1312 = vrot.slane %v528, 3
        %v1313 = vsel %vm1303, %v1308, %v1312
        %v1316 = vsel %vm681, %v1309, 0
        %v1318 = vsel %vm681, %v1313, 0
        %1320 = vmatprep.subr.mxu0 %v1238
        %1321 = vmatpush1.msra.mxu0 %v1237
        %1322 = vmatprep.subr.mxu0 %v1241
        %1323 = vmatpush1.msra.mxu0 %v1240
        %1324 = vmatprep.subr.mxu0 %v1244
        %1325 = vmatpush1.msra.mxu0 %v1243
        %1326 = vmatprep.subr.mxu0 %v1247
        %1327 = vmatpush1.msra.mxu0 %v1246
        %1328 = vmatprep.subr.mxu0 %v1250
        %1329 = vmatpush1.msra.mxu0 %v1249
        %1330 = vmatprep.subr.mxu0 %v1253
        %1331 = vmatpush1.msra.mxu0 %v1252
        %1332 = vmatprep.subr.mxu0 %v1256
        %1333 = vmatpush1.msra.mxu0 %v1255
        %1334 = vmatprep.subr.mxu0 %v1259
        %1335 = vmatpush1.msra.mxu0 %v1258
        %1336 = vmatprep.subr.mxu0 %v1262
        %1337 = vmatpush1.msra.mxu0 %v1261
        %1338 = vmatprep.subr.mxu0 %v1265
        %1339 = vmatpush1.msra.mxu0 %v1264
        %1340 = vmatprep.subr.mxu0 %v1268
        %1341 = vmatpush1.msra.mxu0 %v1267
        %1342 = vmatprep.subr.mxu0 %v1271
        %1343 = vmatpush1.msra.mxu0 %v1270
        %1344 = vmatprep.subr.mxu0 %v1274
        %1345 = vmatpush1.msra.mxu0 %v1273
        %1346 = vmatprep.subr.mxu0 %v1277
        %1347 = vmatpush1.msra.mxu0 %v1276
        %1348 = vmatprep.subr.mxu0 %v1280
        %1349 = vmatpush1.msra.mxu0 %v1279
        %1350 = vmatprep.subr.mxu0 %v1283
        %1351 = vmatpush1.msra.mxu0 %v1282
        %1352 = vmatprep.subr.mxu0 %v1286
        %1353 = vmatpush1.msra.mxu0 %v1285
        %1354 = vmatprep.subr.mxu0 %v1289
        %1355 = vmatpush1.msra.mxu0 %v1288
        %1356 = vmatprep.subr.mxu0 %v1292
        %1357 = vmatpush1.msra.mxu0 %v1291
        %1358 = vmatprep.subr.mxu0 %v1295
        %1359 = vmatpush1.msra.mxu0 %v1294
        %1360 = vmatprep.subr.mxu0 %v1298
        %1361 = vmatpush1.msra.mxu0 %v1297
        %1362 = vmatprep.subr.mxu0 %v1301
        %1363 = vmatpush1.msra.mxu0 %v1300
        %1364 = vmatprep.subr.mxu0 0.0
        %1365 = vmatpush1.msra.mxu0 0.0
        %1366 = vmatprep.subr.mxu0 0.0
        %1367 = vmatpush1.msra.mxu0 0.0
        %1368 = vmatprep.subr.mxu0 0.0
        %1369 = vmatpush1.msra.mxu0 0.0
        %1370 = vmatprep.subr.mxu0 0.0
        %1371 = vmatpush1.msra.mxu0 0.0
        %1372 = vmatprep.subr.mxu0 0.0
        %1373 = vmatpush1.msra.mxu0 0.0
        %1374 = vmatprep.subr.mxu0 0.0
        %1375 = vmatpush1.msra.mxu0 0.0
        %1376 = vmatprep.subr.mxu0 0.0
        %1377 = vmatpush1.msra.mxu0 0.0
        %1378 = vmatprep.subr.mxu0 0.0
        %1379 = vmatpush1.msra.mxu0 0.0
        %1380 = vmatprep.subr.mxu0 0.0
        %1381 = vmatpush1.msra.mxu0 0.0
        %1382 = vmatprep.subr.mxu0 0.0
        %1383 = vmatpush1.msra.mxu0 0.0
        %1384 = vmatprep.mubr.f32.mxu0 %v1316
        %1385 = vmatmul.mubr.f32.gmra.mrb[0].mxu0 %v1306
        %v1386 = vpop.f32.mrb[0].mxu0
        %v1387 = vadd.f32 0.0, %v1386
        %v1388 = vpop.f32.mrb[0].mxu0
        %v1389 = vadd.f32 0.0, %v1388
        %1390 = vmatprep.mubr.f32.mxu0 %v1318
        %1391 = vmatmul.mubr.f32.gmra.mrb[0].mxu0 %v1311
        %v1392 = vpop.f32.mrb[0].mxu0
        %v1393 = vadd.f32 0.0, %v1392
        %v1394 = vpop.f32.mrb[0].mxu0
        %v1395 = vadd.f32 0.0, %v1394
        %1396 = vdwg.mxu0
        %1397 = vmatprep.subr.mxu0 0.0
        %1398 = vmatpush1.msra.mxu0 %v1239
        %1399 = vmatprep.subr.mxu0 0.0
        %1400 = vmatpush1.msra.mxu0 %v1242
        %1401 = vmatprep.subr.mxu0 0.0
        %1402 = vmatpush1.msra.mxu0 %v1245
        %1403 = vmatprep.subr.mxu0 0.0
        %1404 = vmatpush1.msra.mxu0 %v1248
        %1405 = vmatprep.subr.mxu0 0.0
        %1406 = vmatpush1.msra.mxu0 %v1251
        %1407 = vmatprep.subr.mxu0 0.0
        %1408 = vmatpush1.msra.mxu0 %v1254
        %1409 = vmatprep.subr.mxu0 0.0
        %1410 = vmatpush1.msra.mxu0 %v1257
        %1411 = vmatprep.subr.mxu0 0.0
        %1412 = vmatpush1.msra.mxu0 %v1260
        %1413 = vmatprep.subr.mxu0 0.0
        %1414 = vmatpush1.msra.mxu0 %v1263
        %1415 = vmatprep.subr.mxu0 0.0
        %1416 = vmatpush1.msra.mxu0 %v1266
        %1417 = vmatprep.subr.mxu0 0.0
        %1418 = vmatpush1.msra.mxu0 %v1269
        %1419 = vmatprep.subr.mxu0 0.0
        %1420 = vmatpush1.msra.mxu0 %v1272
        %1421 = vmatprep.subr.mxu0 0.0
        %1422 = vmatpush1.msra.mxu0 %v1275
        %1423 = vmatprep.subr.mxu0 0.0
        %1424 = vmatpush1.msra.mxu0 %v1278
        %1425 = vmatprep.subr.mxu0 0.0
        %1426 = vmatpush1.msra.mxu0 %v1281
        %1427 = vmatprep.subr.mxu0 0.0
        %1428 = vmatpush1.msra.mxu0 %v1284
        %1429 = vmatprep.subr.mxu0 0.0
        %1430 = vmatpush1.msra.mxu0 %v1287
        %1431 = vmatprep.subr.mxu0 0.0
        %1432 = vmatpush1.msra.mxu0 %v1290
        %1433 = vmatprep.subr.mxu0 0.0
        %1434 = vmatpush1.msra.mxu0 %v1293
        %1435 = vmatprep.subr.mxu0 0.0
        %1436 = vmatpush1.msra.mxu0 %v1296
        %1437 = vmatprep.subr.mxu0 0.0
        %1438 = vmatpush1.msra.mxu0 %v1299
        %1439 = vmatprep.subr.mxu0 0.0
        %1440 = vmatpush1.msra.mxu0 %v1302
        %1441 = vmatprep.subr.mxu0 0.0
        %1442 = vmatpush1.msra.mxu0 0.0
        %1443 = vmatprep.subr.mxu0 0.0
        %1444 = vmatpush1.msra.mxu0 0.0
        %1445 = vmatprep.subr.mxu0 0.0
        %1446 = vmatpush1.msra.mxu0 0.0
        %1447 = vmatprep.subr.mxu0 0.0
        %1448 = vmatpush1.msra.mxu0 0.0
        %1449 = vmatprep.subr.mxu0 0.0
        %1450 = vmatpush1.msra.mxu0 0.0
        %1451 = vmatprep.subr.mxu0 0.0
        %1452 = vmatpush1.msra.mxu0 0.0
        %1453 = vmatprep.subr.mxu0 0.0
        %1454 = vmatpush1.msra.mxu0 0.0
        %1455 = vmatprep.subr.mxu0 0.0
        %1456 = vmatpush1.msra.mxu0 0.0
        %1457 = vmatprep.subr.mxu0 0.0
        %1458 = vmatpush1.msra.mxu0 0.0
        %1459 = vmatprep.subr.mxu0 0.0
        %1460 = vmatpush1.msra.mxu0 0.0
        %1461 = vmatprep.mubr.f32.mxu0 %v1316
        %1462 = vmatmul.mubr.f32.gmra.mrb[0].mxu0 %v1306
        %v1463 = vpop.f32.mrb[0].mxu0
        %v1464 = vadd.f32 0.0, %v1463
        %v1465 = vpop.f32.mrb[0].mxu0
        %1466 = vmatprep.mubr.f32.mxu0 %v1318
        %1467 = vmatmul.mubr.f32.gmra.mrb[0].mxu0 %v1311
        %v1468 = vpop.f32.mrb[0].mxu0
        %v1469 = vadd.f32 0.0, %v1468
        %v1470 = vpop.f32.mrb[0].mxu0
        %1471 = vdwg.mxu0
        %v1472 = vadd.f32 %v1230, %v1387
        %v1473 = vadd.f32 %v1231, %v1389
        %v1474 = vadd.f32 %v1232, %v1464
        %v1475 = vadd.f32 %v1233, %v1393
        %v1476 = vadd.f32 %v1234, %v1395
        %v1477 = vadd.f32 %v1235, %v1469
        %s1478 = scalar_lea.vmem [#allocation2], 2112
        %v1479 = vld [vmem:[%s1478] sm:$0xff]
        %v1480 = vld [vmem:[%s1478 + $0x8] sm:$0xff]
        %v1481 = vld [vmem:[%s1478 + $0x10] sm:$0xff]
        %v1482 = vld [vmem:[%s1478 + $0x18] sm:$0xff]
        %v1483 = vld [vmem:[%s1478 + $0x20] sm:$0xff]
        %v1484 = vld [vmem:[%s1478 + $0x28] sm:$0xff]
        %v1485 = vld [vmem:[%s1478 + $0x30] sm:$0xff]
        %v1486 = vld [vmem:[%s1478 + $0x38] sm:$0xff]
        %v1487 = vld [vmem:[%s1478 + $0x40] sm:$0xff]
        %v1488 = vld [vmem:[%s1478 + $0x48] sm:$0xff]
        %v1489 = vld [vmem:[%s1478 + $0x50] sm:$0xff]
        %v1490 = vld [vmem:[%s1478 + $0x58] sm:$0xff]
        %v1491 = vld [vmem:[%s1478 + $0x60] sm:$0xff]
        %v1492 = vld [vmem:[%s1478 + $0x68] sm:$0xff]
        %v1493 = vld [vmem:[%s1478 + $0x70] sm:$0xff]
        %v1494 = vld [vmem:[%s1478 + $0x78] sm:$0xff]
        %v1495 = vld [vmem:[%s1478 + $0x80] sm:$0xff]
        %v1496 = vld [vmem:[%s1478 + $0x88] sm:$0xff]
        %v1497 = vld [vmem:[%s1478 + $0x90] sm:$0xff]
        %v1498 = vld [vmem:[%s1478 + $0x98] sm:$0xff]
        %v1499 = vld [vmem:[%s1478 + $0xa0] sm:$0xff]
        %v1500 = vld [vmem:[%s1478 + $0xa8] sm:$0xff]
        %v1501 = vld [vmem:[%s1478 + $0xb0] sm:$0xff]
        %v1502 = vld [vmem:[%s1478 + $0xb8] sm:$0xff]
        %v1503 = vld [vmem:[%s1478 + $0xc0] sm:$0xff]
        %v1504 = vld [vmem:[%s1478 + $0xc8] sm:$0xff]
        %v1505 = vld [vmem:[%s1478 + $0xd0] sm:$0xff]
        %v1506 = vld [vmem:[%s1478 + $0xd8] sm:$0xff]
        %v1507 = vld [vmem:[%s1478 + $0xe0] sm:$0xff]
        %v1508 = vld [vmem:[%s1478 + $0xe8] sm:$0xff]
        %v1509 = vld [vmem:[%s1478 + $0xf0] sm:$0xff]
        %v1510 = vld [vmem:[%s1478 + $0xf8] sm:$0xff]
        %v1511 = vld [vmem:[%s1478 + $0x100] sm:$0xff]
        %v1512 = vld [vmem:[%s1478 + $0x108] sm:$0xff]
        %v1513 = vld [vmem:[%s1478 + $0x110] sm:$0xff]
        %v1514 = vld [vmem:[%s1478 + $0x118] sm:$0xff]
        %v1515 = vld [vmem:[%s1478 + $0x120] sm:$0xff]
        %v1516 = vld [vmem:[%s1478 + $0x128] sm:$0xff]
        %v1517 = vld [vmem:[%s1478 + $0x130] sm:$0xff]
        %v1518 = vld [vmem:[%s1478 + $0x138] sm:$0xff]
        %v1519 = vld [vmem:[%s1478 + $0x140] sm:$0xff]
        %v1520 = vld [vmem:[%s1478 + $0x148] sm:$0xff]
        %v1521 = vld [vmem:[%s1478 + $0x150] sm:$0xff]
        %v1522 = vld [vmem:[%s1478 + $0x158] sm:$0xff]
        %v1523 = vld [vmem:[%s1478 + $0x160] sm:$0xff]
        %v1524 = vld [vmem:[%s1478 + $0x168] sm:$0xff]
        %v1525 = vld [vmem:[%s1478 + $0x170] sm:$0xff]
        %v1526 = vld [vmem:[%s1478 + $0x178] sm:$0xff]
        %v1527 = vld [vmem:[%s1478 + $0x180] sm:$0xff]
        %v1528 = vld [vmem:[%s1478 + $0x188] sm:$0xff]
        %v1529 = vld [vmem:[%s1478 + $0x190] sm:$0xff]
        %v1530 = vld [vmem:[%s1478 + $0x198] sm:$0xff]
        %v1531 = vld [vmem:[%s1478 + $0x1a0] sm:$0xff]
        %v1532 = vld [vmem:[%s1478 + $0x1a8] sm:$0xff]
        %v1533 = vld [vmem:[%s1478 + $0x1b0] sm:$0xff]
        %v1534 = vld [vmem:[%s1478 + $0x1b8] sm:$0xff]
        %v1535 = vld [vmem:[%s1478 + $0x1c0] sm:$0xff]
        %v1536 = vld [vmem:[%s1478 + $0x1c8] sm:$0xff]
        %v1537 = vld [vmem:[%s1478 + $0x1d0] sm:$0xff]
        %v1538 = vld [vmem:[%s1478 + $0x1d8] sm:$0xff]
        %v1539 = vld [vmem:[%s1478 + $0x1e0] sm:$0xff]
        %v1540 = vld [vmem:[%s1478 + $0x1e8] sm:$0xff]
        %v1541 = vld [vmem:[%s1478 + $0x1f0] sm:$0xff]
        %v1542 = vld [vmem:[%s1478 + $0x1f8] sm:$0xff]
        %v1543 = vld [vmem:[%s1478 + $0x200] sm:$0xff]
        %v1544 = vld [vmem:[%s1478 + $0x208] sm:$0xff]
        %vm1545 = vcmask 1043456
        %v1546 = vrot.slane %v523, 4
        %v1547 = vrot.slane %v525, 4
        %v1548 = vsel %vm1545, %v1546, %v1547
        %v1549 = vrot.slane %v524, 4
        %v1550 = vrot.slane %v526, 4
        %v1551 = vsel %vm1545, %v1549, %v1550
        %v1552 = vrot.slane %v527, 4
        %v1553 = vsel %vm1545, %v1547, %v1552
        %v1554 = vrot.slane %v528, 4
        %v1555 = vsel %vm1545, %v1550, %v1554
        %v1558 = vsel %vm681, %v1551, 0
        %v1560 = vsel %vm681, %v1555, 0
        %1562 = vmatprep.subr.mxu0 %v1480
        %1563 = vmatpush1.msra.mxu0 %v1479
        %1564 = vmatprep.subr.mxu0 %v1483
        %1565 = vmatpush1.msra.mxu0 %v1482
        %1566 = vmatprep.subr.mxu0 %v1486
        %1567 = vmatpush1.msra.mxu0 %v1485
        %1568 = vmatprep.subr.mxu0 %v1489
        %1569 = vmatpush1.msra.mxu0 %v1488
        %1570 = vmatprep.subr.mxu0 %v1492
        %1571 = vmatpush1.msra.mxu0 %v1491
        %1572 = vmatprep.subr.mxu0 %v1495
        %1573 = vmatpush1.msra.mxu0 %v1494
        %1574 = vmatprep.subr.mxu0 %v1498
        %1575 = vmatpush1.msra.mxu0 %v1497
        %1576 = vmatprep.subr.mxu0 %v1501
        %1577 = vmatpush1.msra.mxu0 %v1500
        %1578 = vmatprep.subr.mxu0 %v1504
        %1579 = vmatpush1.msra.mxu0 %v1503
        %1580 = vmatprep.subr.mxu0 %v1507
        %1581 = vmatpush1.msra.mxu0 %v1506
        %1582 = vmatprep.subr.mxu0 %v1510
        %1583 = vmatpush1.msra.mxu0 %v1509
        %1584 = vmatprep.subr.mxu0 %v1513
        %1585 = vmatpush1.msra.mxu0 %v1512
        %1586 = vmatprep.subr.mxu0 %v1516
        %1587 = vmatpush1.msra.mxu0 %v1515
        %1588 = vmatprep.subr.mxu0 %v1519
        %1589 = vmatpush1.msra.mxu0 %v1518
        %1590 = vmatprep.subr.mxu0 %v1522
        %1591 = vmatpush1.msra.mxu0 %v1521
        %1592 = vmatprep.subr.mxu0 %v1525
        %1593 = vmatpush1.msra.mxu0 %v1524
        %1594 = vmatprep.subr.mxu0 %v1528
        %1595 = vmatpush1.msra.mxu0 %v1527
        %1596 = vmatprep.subr.mxu0 %v1531
        %1597 = vmatpush1.msra.mxu0 %v1530
        %1598 = vmatprep.subr.mxu0 %v1534
        %1599 = vmatpush1.msra.mxu0 %v1533
        %1600 = vmatprep.subr.mxu0 %v1537
        %1601 = vmatpush1.msra.mxu0 %v1536
        %1602 = vmatprep.subr.mxu0 %v1540
        %1603 = vmatpush1.msra.mxu0 %v1539
        %1604 = vmatprep.subr.mxu0 %v1543
        %1605 = vmatpush1.msra.mxu0 %v1542
        %1606 = vmatprep.subr.mxu0 0.0
        %1607 = vmatpush1.msra.mxu0 0.0
        %1608 = vmatprep.subr.mxu0 0.0
        %1609 = vmatpush1.msra.mxu0 0.0
        %1610 = vmatprep.subr.mxu0 0.0
        %1611 = vmatpush1.msra.mxu0 0.0
        %1612 = vmatprep.subr.mxu0 0.0
        %1613 = vmatpush1.msra.mxu0 0.0
        %1614 = vmatprep.subr.mxu0 0.0
        %1615 = vmatpush1.msra.mxu0 0.0
        %1616 = vmatprep.subr.mxu0 0.0
        %1617 = vmatpush1.msra.mxu0 0.0
        %1618 = vmatprep.subr.mxu0 0.0
        %1619 = vmatpush1.msra.mxu0 0.0
        %1620 = vmatprep.subr.mxu0 0.0
        %1621 = vmatpush1.msra.mxu0 0.0
        %1622 = vmatprep.subr.mxu0 0.0
        %1623 = vmatpush1.msra.mxu0 0.0
        %1624 = vmatprep.subr.mxu0 0.0
        %1625 = vmatpush1.msra.mxu0 0.0
        %1626 = vmatprep.mubr.f32.mxu0 %v1558
        %1627 = vmatmul.mubr.f32.gmra.mrb[0].mxu0 %v1548
        %v1628 = vpop.f32.mrb[0].mxu0
        %v1629 = vadd.f32 0.0, %v1628
        %v1630 = vpop.f32.mrb[0].mxu0
        %v1631 = vadd.f32 0.0, %v1630
        %1632 = vmatprep.mubr.f32.mxu0 %v1560
        %1633 = vmatmul.mubr.f32.gmra.mrb[0].mxu0 %v1553
        %v1634 = vpop.f32.mrb[0].mxu0
        %v1635 = vadd.f32 0.0, %v1634
        %v1636 = vpop.f32.mrb[0].mxu0
        %v1637 = vadd.f32 0.0, %v1636
        %1638 = vdwg.mxu0
        %1639 = vmatprep.subr.mxu0 0.0
        %1640 = vmatpush1.msra.mxu0 %v1481
        %1641 = vmatprep.subr.mxu0 0.0
        %1642 = vmatpush1.msra.mxu0 %v1484
        %1643 = vmatprep.subr.mxu0 0.0
        %1644 = vmatpush1.msra.mxu0 %v1487
        %1645 = vmatprep.subr.mxu0 0.0
        %1646 = vmatpush1.msra.mxu0 %v1490
        %1647 = vmatprep.subr.mxu0 0.0
        %1648 = vmatpush1.msra.mxu0 %v1493
        %1649 = vmatprep.subr.mxu0 0.0
        %1650 = vmatpush1.msra.mxu0 %v1496
        %1651 = vmatprep.subr.mxu0 0.0
        %1652 = vmatpush1.msra.mxu0 %v1499
        %1653 = vmatprep.subr.mxu0 0.0
        %1654 = vmatpush1.msra.mxu0 %v1502
        %1655 = vmatprep.subr.mxu0 0.0
        %1656 = vmatpush1.msra.mxu0 %v1505
        %1657 = vmatprep.subr.mxu0 0.0
        %1658 = vmatpush1.msra.mxu0 %v1508
        %1659 = vmatprep.subr.mxu0 0.0
        %1660 = vmatpush1.msra.mxu0 %v1511
        %1661 = vmatprep.subr.mxu0 0.0
        %1662 = vmatpush1.msra.mxu0 %v1514
        %1663 = vmatprep.subr.mxu0 0.0
        %1664 = vmatpush1.msra.mxu0 %v1517
        %1665 = vmatprep.subr.mxu0 0.0
        %1666 = vmatpush1.msra.mxu0 %v1520
        %1667 = vmatprep.subr.mxu0 0.0
        %1668 = vmatpush1.msra.mxu0 %v1523
        %1669 = vmatprep.subr.mxu0 0.0
        %1670 = vmatpush1.msra.mxu0 %v1526
        %1671 = vmatprep.subr.mxu0 0.0
        %1672 = vmatpush1.msra.mxu0 %v1529
        %1673 = vmatprep.subr.mxu0 0.0
        %1674 = vmatpush1.msra.mxu0 %v1532
        %1675 = vmatprep.subr.mxu0 0.0
        %1676 = vmatpush1.msra.mxu0 %v1535
        %1677 = vmatprep.subr.mxu0 0.0
        %1678 = vmatpush1.msra.mxu0 %v1538
        %1679 = vmatprep.subr.mxu0 0.0
        %1680 = vmatpush1.msra.mxu0 %v1541
        %1681 = vmatprep.subr.mxu0 0.0
        %1682 = vmatpush1.msra.mxu0 %v1544
        %1683 = vmatprep.subr.mxu0 0.0
        %1684 = vmatpush1.msra.mxu0 0.0
        %1685 = vmatprep.subr.mxu0 0.0
        %1686 = vmatpush1.msra.mxu0 0.0
        %1687 = vmatprep.subr.mxu0 0.0
        %1688 = vmatpush1.msra.mxu0 0.0
        %1689 = vmatprep.subr.mxu0 0.0
        %1690 = vmatpush1.msra.mxu0 0.0
        %1691 = vmatprep.subr.mxu0 0.0
        %1692 = vmatpush1.msra.mxu0 0.0
        %1693 = vmatprep.subr.mxu0 0.0
        %1694 = vmatpush1.msra.mxu0 0.0
        %1695 = vmatprep.subr.mxu0 0.0
        %1696 = vmatpush1.msra.mxu0 0.0
        %1697 = vmatprep.subr.mxu0 0.0
        %1698 = vmatpush1.msra.mxu0 0.0
        %1699 = vmatprep.subr.mxu0 0.0
        %1700 = vmatpush1.msra.mxu0 0.0
        %1701 = vmatprep.subr.mxu0 0.0
        %1702 = vmatpush1.msra.mxu0 0.0
        %1703 = vmatprep.mubr.f32.mxu0 %v1558
        %1704 = vmatmul.mubr.f32.gmra.mrb[0].mxu0 %v1548
        %v1705 = vpop.f32.mrb[0].mxu0
        %v1706 = vadd.f32 0.0, %v1705
        %v1707 = vpop.f32.mrb[0].mxu0
        %1708 = vmatprep.mubr.f32.mxu0 %v1560
        %1709 = vmatmul.mubr.f32.gmra.mrb[0].mxu0 %v1553
        %v1710 = vpop.f32.mrb[0].mxu0
        %v1711 = vadd.f32 0.0, %v1710
        %v1712 = vpop.f32.mrb[0].mxu0
        %1713 = vdwg.mxu0
        %v1714 = vadd.f32 %v1472, %v1629
        %v1715 = vadd.f32 %v1473, %v1631
        %v1716 = vadd.f32 %v1474, %v1706
        %v1717 = vadd.f32 %v1475, %v1635
        %v1718 = vadd.f32 %v1476, %v1637
        %v1719 = vadd.f32 %v1477, %v1711
        %s1720 = scalar_lea.vmem [#allocation2], 2640
        %v1721 = vld [vmem:[%s1720] sm:$0xff]
        %v1722 = vld [vmem:[%s1720 + $0x8] sm:$0xff]
        %v1723 = vld [vmem:[%s1720 + $0x10] sm:$0xff]
        %v1724 = vld [vmem:[%s1720 + $0x18] sm:$0xff]
        %v1725 = vld [vmem:[%s1720 + $0x20] sm:$0xff]
        %v1726 = vld [vmem:[%s1720 + $0x28] sm:$0xff]
        %v1727 = vld [vmem:[%s1720 + $0x30] sm:$0xff]
        %v1728 = vld [vmem:[%s1720 + $0x38] sm:$0xff]
        %v1729 = vld [vmem:[%s1720 + $0x40] sm:$0xff]
        %v1730 = vld [vmem:[%s1720 + $0x48] sm:$0xff]
        %v1731 = vld [vmem:[%s1720 + $0x50] sm:$0xff]
        %v1732 = vld [vmem:[%s1720 + $0x58] sm:$0xff]
        %v1733 = vld [vmem:[%s1720 + $0x60] sm:$0xff]
        %v1734 = vld [vmem:[%s1720 + $0x68] sm:$0xff]
        %v1735 = vld [vmem:[%s1720 + $0x70] sm:$0xff]
        %v1736 = vld [vmem:[%s1720 + $0x78] sm:$0xff]
        %v1737 = vld [vmem:[%s1720 + $0x80] sm:$0xff]
        %v1738 = vld [vmem:[%s1720 + $0x88] sm:$0xff]
        %v1739 = vld [vmem:[%s1720 + $0x90] sm:$0xff]
        %v1740 = vld [vmem:[%s1720 + $0x98] sm:$0xff]
        %v1741 = vld [vmem:[%s1720 + $0xa0] sm:$0xff]
        %v1742 = vld [vmem:[%s1720 + $0xa8] sm:$0xff]
        %v1743 = vld [vmem:[%s1720 + $0xb0] sm:$0xff]
        %v1744 = vld [vmem:[%s1720 + $0xb8] sm:$0xff]
        %v1745 = vld [vmem:[%s1720 + $0xc0] sm:$0xff]
        %v1746 = vld [vmem:[%s1720 + $0xc8] sm:$0xff]
        %v1747 = vld [vmem:[%s1720 + $0xd0] sm:$0xff]
        %v1748 = vld [vmem:[%s1720 + $0xd8] sm:$0xff]
        %v1749 = vld [vmem:[%s1720 + $0xe0] sm:$0xff]
        %v1750 = vld [vmem:[%s1720 + $0xe8] sm:$0xff]
        %v1751 = vld [vmem:[%s1720 + $0xf0] sm:$0xff]
        %v1752 = vld [vmem:[%s1720 + $0xf8] sm:$0xff]
        %v1753 = vld [vmem:[%s1720 + $0x100] sm:$0xff]
        %v1754 = vld [vmem:[%s1720 + $0x108] sm:$0xff]
        %v1755 = vld [vmem:[%s1720 + $0x110] sm:$0xff]
        %v1756 = vld [vmem:[%s1720 + $0x118] sm:$0xff]
        %v1757 = vld [vmem:[%s1720 + $0x120] sm:$0xff]
        %v1758 = vld [vmem:[%s1720 + $0x128] sm:$0xff]
        %v1759 = vld [vmem:[%s1720 + $0x130] sm:$0xff]
        %v1760 = vld [vmem:[%s1720 + $0x138] sm:$0xff]
        %v1761 = vld [vmem:[%s1720 + $0x140] sm:$0xff]
        %v1762 = vld [vmem:[%s1720 + $0x148] sm:$0xff]
        %v1763 = vld [vmem:[%s1720 + $0x150] sm:$0xff]
        %v1764 = vld [vmem:[%s1720 + $0x158] sm:$0xff]
        %v1765 = vld [vmem:[%s1720 + $0x160] sm:$0xff]
        %v1766 = vld [vmem:[%s1720 + $0x168] sm:$0xff]
        %v1767 = vld [vmem:[%s1720 + $0x170] sm:$0xff]
        %v1768 = vld [vmem:[%s1720 + $0x178] sm:$0xff]
        %v1769 = vld [vmem:[%s1720 + $0x180] sm:$0xff]
        %v1770 = vld [vmem:[%s1720 + $0x188] sm:$0xff]
        %v1771 = vld [vmem:[%s1720 + $0x190] sm:$0xff]
        %v1772 = vld [vmem:[%s1720 + $0x198] sm:$0xff]
        %v1773 = vld [vmem:[%s1720 + $0x1a0] sm:$0xff]
        %v1774 = vld [vmem:[%s1720 + $0x1a8] sm:$0xff]
        %v1775 = vld [vmem:[%s1720 + $0x1b0] sm:$0xff]
        %v1776 = vld [vmem:[%s1720 + $0x1b8] sm:$0xff]
        %v1777 = vld [vmem:[%s1720 + $0x1c0] sm:$0xff]
        %v1778 = vld [vmem:[%s1720 + $0x1c8] sm:$0xff]
        %v1779 = vld [vmem:[%s1720 + $0x1d0] sm:$0xff]
        %v1780 = vld [vmem:[%s1720 + $0x1d8] sm:$0xff]
        %v1781 = vld [vmem:[%s1720 + $0x1e0] sm:$0xff]
        %v1782 = vld [vmem:[%s1720 + $0x1e8] sm:$0xff]
        %v1783 = vld [vmem:[%s1720 + $0x1f0] sm:$0xff]
        %v1784 = vld [vmem:[%s1720 + $0x1f8] sm:$0xff]
        %v1785 = vld [vmem:[%s1720 + $0x200] sm:$0xff]
        %v1786 = vld [vmem:[%s1720 + $0x208] sm:$0xff]
        %vm1787 = vcmask 1042432
        %v1788 = vrot.slane %v523, 5
        %v1789 = vrot.slane %v525, 5
        %v1790 = vsel %vm1787, %v1788, %v1789
        %v1791 = vrot.slane %v524, 5
        %v1792 = vrot.slane %v526, 5
        %v1793 = vsel %vm1787, %v1791, %v1792
        %v1794 = vrot.slane %v527, 5
        %v1795 = vsel %vm1787, %v1789, %v1794
        %v1796 = vrot.slane %v528, 5
        %v1797 = vsel %vm1787, %v1792, %v1796
        %v1800 = vsel %vm681, %v1793, 0
        %v1802 = vsel %vm681, %v1797, 0
        %1804 = vmatprep.subr.mxu0 %v1722
        %1805 = vmatpush1.msra.mxu0 %v1721
        %1806 = vmatprep.subr.mxu0 %v1725
        %1807 = vmatpush1.msra.mxu0 %v1724
        %1808 = vmatprep.subr.mxu0 %v1728
        %1809 = vmatpush1.msra.mxu0 %v1727
        %1810 = vmatprep.subr.mxu0 %v1731
        %1811 = vmatpush1.msra.mxu0 %v1730
        %1812 = vmatprep.subr.mxu0 %v1734
        %1813 = vmatpush1.msra.mxu0 %v1733
        %1814 = vmatprep.subr.mxu0 %v1737
        %1815 = vmatpush1.msra.mxu0 %v1736
        %1816 = vmatprep.subr.mxu0 %v1740
        %1817 = vmatpush1.msra.mxu0 %v1739
        %1818 = vmatprep.subr.mxu0 %v1743
        %1819 = vmatpush1.msra.mxu0 %v1742
        %1820 = vmatprep.subr.mxu0 %v1746
        %1821 = vmatpush1.msra.mxu0 %v1745
        %1822 = vmatprep.subr.mxu0 %v1749
        %1823 = vmatpush1.msra.mxu0 %v1748
        %1824 = vmatprep.subr.mxu0 %v1752
        %1825 = vmatpush1.msra.mxu0 %v1751
        %1826 = vmatprep.subr.mxu0 %v1755
        %1827 = vmatpush1.msra.mxu0 %v1754
        %1828 = vmatprep.subr.mxu0 %v1758
        %1829 = vmatpush1.msra.mxu0 %v1757
        %1830 = vmatprep.subr.mxu0 %v1761
        %1831 = vmatpush1.msra.mxu0 %v1760
        %1832 = vmatprep.subr.mxu0 %v1764
        %1833 = vmatpush1.msra.mxu0 %v1763
        %1834 = vmatprep.subr.mxu0 %v1767
        %1835 = vmatpush1.msra.mxu0 %v1766
        %1836 = vmatprep.subr.mxu0 %v1770
        %1837 = vmatpush1.msra.mxu0 %v1769
        %1838 = vmatprep.subr.mxu0 %v1773
        %1839 = vmatpush1.msra.mxu0 %v1772
        %1840 = vmatprep.subr.mxu0 %v1776
        %1841 = vmatpush1.msra.mxu0 %v1775
        %1842 = vmatprep.subr.mxu0 %v1779
        %1843 = vmatpush1.msra.mxu0 %v1778
        %1844 = vmatprep.subr.mxu0 %v1782
        %1845 = vmatpush1.msra.mxu0 %v1781
        %1846 = vmatprep.subr.mxu0 %v1785
        %1847 = vmatpush1.msra.mxu0 %v1784
        %1848 = vmatprep.subr.mxu0 0.0
        %1849 = vmatpush1.msra.mxu0 0.0
        %1850 = vmatprep.subr.mxu0 0.0
        %1851 = vmatpush1.msra.mxu0 0.0
        %1852 = vmatprep.subr.mxu0 0.0
        %1853 = vmatpush1.msra.mxu0 0.0
        %1854 = vmatprep.subr.mxu0 0.0
        %1855 = vmatpush1.msra.mxu0 0.0
        %1856 = vmatprep.subr.mxu0 0.0
        %1857 = vmatpush1.msra.mxu0 0.0
        %1858 = vmatprep.subr.mxu0 0.0
        %1859 = vmatpush1.msra.mxu0 0.0
        %1860 = vmatprep.subr.mxu0 0.0
        %1861 = vmatpush1.msra.mxu0 0.0
        %1862 = vmatprep.subr.mxu0 0.0
        %1863 = vmatpush1.msra.mxu0 0.0
        %1864 = vmatprep.subr.mxu0 0.0
        %1865 = vmatpush1.msra.mxu0 0.0
        %1866 = vmatprep.subr.mxu0 0.0
        %1867 = vmatpush1.msra.mxu0 0.0
        %1868 = vmatprep.mubr.f32.mxu0 %v1800
        %1869 = vmatmul.mubr.f32.gmra.mrb[0].mxu0 %v1790
        %v1870 = vpop.f32.mrb[0].mxu0
        %v1871 = vadd.f32 0.0, %v1870
        %v1872 = vpop.f32.mrb[0].mxu0
        %v1873 = vadd.f32 0.0, %v1872
        %1874 = vmatprep.mubr.f32.mxu0 %v1802
        %1875 = vmatmul.mubr.f32.gmra.mrb[0].mxu0 %v1795
        %v1876 = vpop.f32.mrb[0].mxu0
        %v1877 = vadd.f32 0.0, %v1876
        %v1878 = vpop.f32.mrb[0].mxu0
        %v1879 = vadd.f32 0.0, %v1878
        %1880 = vdwg.mxu0
        %1881 = vmatprep.subr.mxu0 0.0
        %1882 = vmatpush1.msra.mxu0 %v1723
        %1883 = vmatprep.subr.mxu0 0.0
        %1884 = vmatpush1.msra.mxu0 %v1726
        %1885 = vmatprep.subr.mxu0 0.0
        %1886 = vmatpush1.msra.mxu0 %v1729
        %1887 = vmatprep.subr.mxu0 0.0
        %1888 = vmatpush1.msra.mxu0 %v1732
        %1889 = vmatprep.subr.mxu0 0.0
        %1890 = vmatpush1.msra.mxu0 %v1735
        %1891 = vmatprep.subr.mxu0 0.0
        %1892 = vmatpush1.msra.mxu0 %v1738
        %1893 = vmatprep.subr.mxu0 0.0
        %1894 = vmatpush1.msra.mxu0 %v1741
        %1895 = vmatprep.subr.mxu0 0.0
        %1896 = vmatpush1.msra.mxu0 %v1744
        %1897 = vmatprep.subr.mxu0 0.0
        %1898 = vmatpush1.msra.mxu0 %v1747
        %1899 = vmatprep.subr.mxu0 0.0
        %1900 = vmatpush1.msra.mxu0 %v1750
        %1901 = vmatprep.subr.mxu0 0.0
        %1902 = vmatpush1.msra.mxu0 %v1753
        %1903 = vmatprep.subr.mxu0 0.0
        %1904 = vmatpush1.msra.mxu0 %v1756
        %1905 = vmatprep.subr.mxu0 0.0
        %1906 = vmatpush1.msra.mxu0 %v1759
        %1907 = vmatprep.subr.mxu0 0.0
        %1908 = vmatpush1.msra.mxu0 %v1762
        %1909 = vmatprep.subr.mxu0 0.0
        %1910 = vmatpush1.msra.mxu0 %v1765
        %1911 = vmatprep.subr.mxu0 0.0
        %1912 = vmatpush1.msra.mxu0 %v1768
        %1913 = vmatprep.subr.mxu0 0.0
        %1914 = vmatpush1.msra.mxu0 %v1771
        %1915 = vmatprep.subr.mxu0 0.0
        %1916 = vmatpush1.msra.mxu0 %v1774
        %1917 = vmatprep.subr.mxu0 0.0
        %1918 = vmatpush1.msra.mxu0 %v1777
        %1919 = vmatprep.subr.mxu0 0.0
        %1920 = vmatpush1.msra.mxu0 %v1780
        %1921 = vmatprep.subr.mxu0 0.0
        %1922 = vmatpush1.msra.mxu0 %v1783
        %1923 = vmatprep.subr.mxu0 0.0
        %1924 = vmatpush1.msra.mxu0 %v1786
        %1925 = vmatprep.subr.mxu0 0.0
        %1926 = vmatpush1.msra.mxu0 0.0
        %1927 = vmatprep.subr.mxu0 0.0
        %1928 = vmatpush1.msra.mxu0 0.0
        %1929 = vmatprep.subr.mxu0 0.0
        %1930 = vmatpush1.msra.mxu0 0.0
        %1931 = vmatprep.subr.mxu0 0.0
        %1932 = vmatpush1.msra.mxu0 0.0
        %1933 = vmatprep.subr.mxu0 0.0
        %1934 = vmatpush1.msra.mxu0 0.0
        %1935 = vmatprep.subr.mxu0 0.0
        %1936 = vmatpush1.msra.mxu0 0.0
        %1937 = vmatprep.subr.mxu0 0.0
        %1938 = vmatpush1.msra.mxu0 0.0
        %1939 = vmatprep.subr.mxu0 0.0
        %1940 = vmatpush1.msra.mxu0 0.0
        %1941 = vmatprep.subr.mxu0 0.0
        %1942 = vmatpush1.msra.mxu0 0.0
        %1943 = vmatprep.subr.mxu0 0.0
        %1944 = vmatpush1.msra.mxu0 0.0
        %1945 = vmatprep.mubr.f32.mxu0 %v1800
        %1946 = vmatmul.mubr.f32.gmra.mrb[0].mxu0 %v1790
        %v1947 = vpop.f32.mrb[0].mxu0
        %v1948 = vadd.f32 0.0, %v1947
        %v1949 = vpop.f32.mrb[0].mxu0
        %1950 = vmatprep.mubr.f32.mxu0 %v1802
        %1951 = vmatmul.mubr.f32.gmra.mrb[0].mxu0 %v1795
        %v1952 = vpop.f32.mrb[0].mxu0
        %v1953 = vadd.f32 0.0, %v1952
        %v1954 = vpop.f32.mrb[0].mxu0
        %1955 = vdwg.mxu0
        %v1956 = vadd.f32 %v1714, %v1871
        %v1957 = vadd.f32 %v1715, %v1873
        %v1958 = vadd.f32 %v1716, %v1948
        %v1959 = vadd.f32 %v1717, %v1877
        %v1960 = vadd.f32 %v1718, %v1879
        %v1961 = vadd.f32 %v1719, %v1953
        %s1962 = scalar_lea.vmem [#allocation2], 3168
        %v1963 = vld [vmem:[%s1962] sm:$0xff]
        %v1964 = vld [vmem:[%s1962 + $0x8] sm:$0xff]
        %v1965 = vld [vmem:[%s1962 + $0x10] sm:$0xff]
        %v1966 = vld [vmem:[%s1962 + $0x18] sm:$0xff]
        %v1967 = vld [vmem:[%s1962 + $0x20] sm:$0xff]
        %v1968 = vld [vmem:[%s1962 + $0x28] sm:$0xff]
        %v1969 = vld [vmem:[%s1962 + $0x30] sm:$0xff]
        %v1970 = vld [vmem:[%s1962 + $0x38] sm:$0xff]
        %v1971 = vld [vmem:[%s1962 + $0x40] sm:$0xff]
        %v1972 = vld [vmem:[%s1962 + $0x48] sm:$0xff]
        %v1973 = vld [vmem:[%s1962 + $0x50] sm:$0xff]
        %v1974 = vld [vmem:[%s1962 + $0x58] sm:$0xff]
        %v1975 = vld [vmem:[%s1962 + $0x60] sm:$0xff]
        %v1976 = vld [vmem:[%s1962 + $0x68] sm:$0xff]
        %v1977 = vld [vmem:[%s1962 + $0x70] sm:$0xff]
        %v1978 = vld [vmem:[%s1962 + $0x78] sm:$0xff]
        %v1979 = vld [vmem:[%s1962 + $0x80] sm:$0xff]
        %v1980 = vld [vmem:[%s1962 + $0x88] sm:$0xff]
        %v1981 = vld [vmem:[%s1962 + $0x90] sm:$0xff]
        %v1982 = vld [vmem:[%s1962 + $0x98] sm:$0xff]
        %v1983 = vld [vmem:[%s1962 + $0xa0] sm:$0xff]
        %v1984 = vld [vmem:[%s1962 + $0xa8] sm:$0xff]
        %v1985 = vld [vmem:[%s1962 + $0xb0] sm:$0xff]
        %v1986 = vld [vmem:[%s1962 + $0xb8] sm:$0xff]
        %v1987 = vld [vmem:[%s1962 + $0xc0] sm:$0xff]
        %v1988 = vld [vmem:[%s1962 + $0xc8] sm:$0xff]
        %v1989 = vld [vmem:[%s1962 + $0xd0] sm:$0xff]
        %v1990 = vld [vmem:[%s1962 + $0xd8] sm:$0xff]
        %v1991 = vld [vmem:[%s1962 + $0xe0] sm:$0xff]
        %v1992 = vld [vmem:[%s1962 + $0xe8] sm:$0xff]
        %v1993 = vld [vmem:[%s1962 + $0xf0] sm:$0xff]
        %v1994 = vld [vmem:[%s1962 + $0xf8] sm:$0xff]
        %v1995 = vld [vmem:[%s1962 + $0x100] sm:$0xff]
        %v1996 = vld [vmem:[%s1962 + $0x108] sm:$0xff]
        %v1997 = vld [vmem:[%s1962 + $0x110] sm:$0xff]
        %v1998 = vld [vmem:[%s1962 + $0x118] sm:$0xff]
        %v1999 = vld [vmem:[%s1962 + $0x120] sm:$0xff]
        %v2000 = vld [vmem:[%s1962 + $0x128] sm:$0xff]
        %v2001 = vld [vmem:[%s1962 + $0x130] sm:$0xff]
        %v2002 = vld [vmem:[%s1962 + $0x138] sm:$0xff]
        %v2003 = vld [vmem:[%s1962 + $0x140] sm:$0xff]
        %v2004 = vld [vmem:[%s1962 + $0x148] sm:$0xff]
        %v2005 = vld [vmem:[%s1962 + $0x150] sm:$0xff]
        %v2006 = vld [vmem:[%s1962 + $0x158] sm:$0xff]
        %v2007 = vld [vmem:[%s1962 + $0x160] sm:$0xff]
        %v2008 = vld [vmem:[%s1962 + $0x168] sm:$0xff]
        %v2009 = vld [vmem:[%s1962 + $0x170] sm:$0xff]
        %v2010 = vld [vmem:[%s1962 + $0x178] sm:$0xff]
        %v2011 = vld [vmem:[%s1962 + $0x180] sm:$0xff]
        %v2012 = vld [vmem:[%s1962 + $0x188] sm:$0xff]
        %v2013 = vld [vmem:[%s1962 + $0x190] sm:$0xff]
        %v2014 = vld [vmem:[%s1962 + $0x198] sm:$0xff]
        %v2015 = vld [vmem:[%s1962 + $0x1a0] sm:$0xff]
        %v2016 = vld [vmem:[%s1962 + $0x1a8] sm:$0xff]
        %v2017 = vld [vmem:[%s1962 + $0x1b0] sm:$0xff]
        %v2018 = vld [vmem:[%s1962 + $0x1b8] sm:$0xff]
        %v2019 = vld [vmem:[%s1962 + $0x1c0] sm:$0xff]
        %v2020 = vld [vmem:[%s1962 + $0x1c8] sm:$0xff]
        %v2021 = vld [vmem:[%s1962 + $0x1d0] sm:$0xff]
        %v2022 = vld [vmem:[%s1962 + $0x1d8] sm:$0xff]
        %v2023 = vld [vmem:[%s1962 + $0x1e0] sm:$0xff]
        %v2024 = vld [vmem:[%s1962 + $0x1e8] sm:$0xff]
        %v2025 = vld [vmem:[%s1962 + $0x1f0] sm:$0xff]
        %v2026 = vld [vmem:[%s1962 + $0x1f8] sm:$0xff]
        %v2027 = vld [vmem:[%s1962 + $0x200] sm:$0xff]
        %v2028 = vld [vmem:[%s1962 + $0x208] sm:$0xff]
        %vm2029 = vcmask 1041408
        %v2030 = vrot.slane %v523, 6
        %v2031 = vrot.slane %v525, 6
        %v2032 = vsel %vm2029, %v2030, %v2031
        %v2033 = vrot.slane %v524, 6
        %v2034 = vrot.slane %v526, 6
        %v2035 = vsel %vm2029, %v2033, %v2034
        %v2036 = vrot.slane %v527, 6
        %v2037 = vsel %vm2029, %v2031, %v2036
        %v2038 = vrot.slane %v528, 6
        %v2039 = vsel %vm2029, %v2034, %v2038
        %v2042 = vsel %vm681, %v2035, 0
        %v2044 = vsel %vm681, %v2039, 0
        %2046 = vmatprep.subr.mxu0 %v1964
        %2047 = vmatpush1.msra.mxu0 %v1963
        %2048 = vmatprep.subr.mxu0 %v1967
        %2049 = vmatpush1.msra.mxu0 %v1966
        %2050 = vmatprep.subr.mxu0 %v1970
        %2051 = vmatpush1.msra.mxu0 %v1969
        %2052 = vmatprep.subr.mxu0 %v1973
        %2053 = vmatpush1.msra.mxu0 %v1972
        %2054 = vmatprep.subr.mxu0 %v1976
        %2055 = vmatpush1.msra.mxu0 %v1975
        %2056 = vmatprep.subr.mxu0 %v1979
        %2057 = vmatpush1.msra.mxu0 %v1978
        %2058 = vmatprep.subr.mxu0 %v1982
        %2059 = vmatpush1.msra.mxu0 %v1981
        %2060 = vmatprep.subr.mxu0 %v1985
        %2061 = vmatpush1.msra.mxu0 %v1984
        %2062 = vmatprep.subr.mxu0 %v1988
        %2063 = vmatpush1.msra.mxu0 %v1987
        %2064 = vmatprep.subr.mxu0 %v1991
        %2065 = vmatpush1.msra.mxu0 %v1990
        %2066 = vmatprep.subr.mxu0 %v1994
        %2067 = vmatpush1.msra.mxu0 %v1993
        %2068 = vmatprep.subr.mxu0 %v1997
        %2069 = vmatpush1.msra.mxu0 %v1996
        %2070 = vmatprep.subr.mxu0 %v2000
        %2071 = vmatpush1.msra.mxu0 %v1999
        %2072 = vmatprep.subr.mxu0 %v2003
        %2073 = vmatpush1.msra.mxu0 %v2002
        %2074 = vmatprep.subr.mxu0 %v2006
        %2075 = vmatpush1.msra.mxu0 %v2005
        %2076 = vmatprep.subr.mxu0 %v2009
        %2077 = vmatpush1.msra.mxu0 %v2008
        %2078 = vmatprep.subr.mxu0 %v2012
        %2079 = vmatpush1.msra.mxu0 %v2011
        %2080 = vmatprep.subr.mxu0 %v2015
        %2081 = vmatpush1.msra.mxu0 %v2014
        %2082 = vmatprep.subr.mxu0 %v2018
        %2083 = vmatpush1.msra.mxu0 %v2017
        %2084 = vmatprep.subr.mxu0 %v2021
        %2085 = vmatpush1.msra.mxu0 %v2020
        %2086 = vmatprep.subr.mxu0 %v2024
        %2087 = vmatpush1.msra.mxu0 %v2023
        %2088 = vmatprep.subr.mxu0 %v2027
        %2089 = vmatpush1.msra.mxu0 %v2026
        %2090 = vmatprep.subr.mxu0 0.0
        %2091 = vmatpush1.msra.mxu0 0.0
        %2092 = vmatprep.subr.mxu0 0.0
        %2093 = vmatpush1.msra.mxu0 0.0
        %2094 = vmatprep.subr.mxu0 0.0
        %2095 = vmatpush1.msra.mxu0 0.0
        %2096 = vmatprep.subr.mxu0 0.0
        %2097 = vmatpush1.msra.mxu0 0.0
        %2098 = vmatprep.subr.mxu0 0.0
        %2099 = vmatpush1.msra.mxu0 0.0
        %2100 = vmatprep.subr.mxu0 0.0
        %2101 = vmatpush1.msra.mxu0 0.0
        %2102 = vmatprep.subr.mxu0 0.0
        %2103 = vmatpush1.msra.mxu0 0.0
        %2104 = vmatprep.subr.mxu0 0.0
        %2105 = vmatpush1.msra.mxu0 0.0
        %2106 = vmatprep.subr.mxu0 0.0
        %2107 = vmatpush1.msra.mxu0 0.0
        %2108 = vmatprep.subr.mxu0 0.0
        %2109 = vmatpush1.msra.mxu0 0.0
        %2110 = vmatprep.mubr.f32.mxu0 %v2042
        %2111 = vmatmul.mubr.f32.gmra.mrb[0].mxu0 %v2032
        %v2112 = vpop.f32.mrb[0].mxu0
        %v2113 = vadd.f32 0.0, %v2112
        %v2114 = vpop.f32.mrb[0].mxu0
        %v2115 = vadd.f32 0.0, %v2114
        %2116 = vmatprep.mubr.f32.mxu0 %v2044
        %2117 = vmatmul.mubr.f32.gmra.mrb[0].mxu0 %v2037
        %v2118 = vpop.f32.mrb[0].mxu0
        %v2119 = vadd.f32 0.0, %v2118
        %v2120 = vpop.f32.mrb[0].mxu0
        %v2121 = vadd.f32 0.0, %v2120
        %2122 = vdwg.mxu0
        %2123 = vmatprep.subr.mxu0 0.0
        %2124 = vmatpush1.msra.mxu0 %v1965
        %2125 = vmatprep.subr.mxu0 0.0
        %2126 = vmatpush1.msra.mxu0 %v1968
        %2127 = vmatprep.subr.mxu0 0.0
        %2128 = vmatpush1.msra.mxu0 %v1971
        %2129 = vmatprep.subr.mxu0 0.0
        %2130 = vmatpush1.msra.mxu0 %v1974
        %2131 = vmatprep.subr.mxu0 0.0
        %2132 = vmatpush1.msra.mxu0 %v1977
        %2133 = vmatprep.subr.mxu0 0.0
        %2134 = vmatpush1.msra.mxu0 %v1980
        %2135 = vmatprep.subr.mxu0 0.0
        %2136 = vmatpush1.msra.mxu0 %v1983
        %2137 = vmatprep.subr.mxu0 0.0
        %2138 = vmatpush1.msra.mxu0 %v1986
        %2139 = vmatprep.subr.mxu0 0.0
        %2140 = vmatpush1.msra.mxu0 %v1989
        %2141 = vmatprep.subr.mxu0 0.0
        %2142 = vmatpush1.msra.mxu0 %v1992
        %2143 = vmatprep.subr.mxu0 0.0
        %2144 = vmatpush1.msra.mxu0 %v1995
        %2145 = vmatprep.subr.mxu0 0.0
        %2146 = vmatpush1.msra.mxu0 %v1998
        %2147 = vmatprep.subr.mxu0 0.0
        %2148 = vmatpush1.msra.mxu0 %v2001
        %2149 = vmatprep.subr.mxu0 0.0
        %2150 = vmatpush1.msra.mxu0 %v2004
        %2151 = vmatprep.subr.mxu0 0.0
        %2152 = vmatpush1.msra.mxu0 %v2007
        %2153 = vmatprep.subr.mxu0 0.0
        %2154 = vmatpush1.msra.mxu0 %v2010
        %2155 = vmatprep.subr.mxu0 0.0
        %2156 = vmatpush1.msra.mxu0 %v2013
        %2157 = vmatprep.subr.mxu0 0.0
        %2158 = vmatpush1.msra.mxu0 %v2016
        %2159 = vmatprep.subr.mxu0 0.0
        %2160 = vmatpush1.msra.mxu0 %v2019
        %2161 = vmatprep.subr.mxu0 0.0
        %2162 = vmatpush1.msra.mxu0 %v2022
        %2163 = vmatprep.subr.mxu0 0.0
        %2164 = vmatpush1.msra.mxu0 %v2025
        %2165 = vmatprep.subr.mxu0 0.0
        %2166 = vmatpush1.msra.mxu0 %v2028
        %2167 = vmatprep.subr.mxu0 0.0
        %2168 = vmatpush1.msra.mxu0 0.0
        %2169 = vmatprep.subr.mxu0 0.0
        %2170 = vmatpush1.msra.mxu0 0.0
        %2171 = vmatprep.subr.mxu0 0.0
        %2172 = vmatpush1.msra.mxu0 0.0
        %2173 = vmatprep.subr.mxu0 0.0
        %2174 = vmatpush1.msra.mxu0 0.0
        %2175 = vmatprep.subr.mxu0 0.0
        %2176 = vmatpush1.msra.mxu0 0.0
        %2177 = vmatprep.subr.mxu0 0.0
        %2178 = vmatpush1.msra.mxu0 0.0
        %2179 = vmatprep.subr.mxu0 0.0
        %2180 = vmatpush1.msra.mxu0 0.0
        %2181 = vmatprep.subr.mxu0 0.0
        %2182 = vmatpush1.msra.mxu0 0.0
        %2183 = vmatprep.subr.mxu0 0.0
        %2184 = vmatpush1.msra.mxu0 0.0
        %2185 = vmatprep.subr.mxu0 0.0
        %2186 = vmatpush1.msra.mxu0 0.0
        %2187 = vmatprep.mubr.f32.mxu0 %v2042
        %2188 = vmatmul.mubr.f32.gmra.mrb[0].mxu0 %v2032
        %v2189 = vpop.f32.mrb[0].mxu0
        %v2190 = vadd.f32 0.0, %v2189
        %v2191 = vpop.f32.mrb[0].mxu0
        %2192 = vmatprep.mubr.f32.mxu0 %v2044
        %2193 = vmatmul.mubr.f32.gmra.mrb[0].mxu0 %v2037
        %v2194 = vpop.f32.mrb[0].mxu0
        %v2195 = vadd.f32 0.0, %v2194
        %v2196 = vpop.f32.mrb[0].mxu0
        %2197 = vdwg.mxu0
        %v2198 = vadd.f32 %v1956, %v2113
        %v2199 = vadd.f32 %v1957, %v2115
        %v2200 = vadd.f32 %v1958, %v2190
        %v2201 = vadd.f32 %v1959, %v2119
        %v2202 = vadd.f32 %v1960, %v2121
        %v2203 = vadd.f32 %v1961, %v2195
        %v2204 = vmax.f32 %v2198, 0.0
        %v2205 = vmax.f32 %v2199, 0.0
        %v2206 = vmax.f32 %v2200, 0.0
        %v2207 = vmax.f32 %v2201, 0.0
        %v2208 = vmax.f32 %v2202, 0.0
        %v2209 = vmax.f32 %v2203, 0.0
        %v2210 = vld [vmem:[#allocation5] sm:$0xff]
        %v2211 = vld [vmem:[#allocation5 + $0x8] sm:$0xff]
        %v2212 = vld [vmem:[#allocation5 + $0x10] sm:$0xff]
        %v2213 = vld [vmem:[#allocation5 + $0x18] sm:$0xff]
        %v2214 = vld [vmem:[#allocation5 + $0x20] sm:$0xff]
        %v2215 = vld [vmem:[#allocation5 + $0x28] sm:$0xff]
        %v2216 = vld [vmem:[#allocation5 + $0x30] sm:$0xff]
        %v2217 = vld [vmem:[#allocation5 + $0x38] sm:$0xff]
        %v2218 = vld [vmem:[#allocation5 + $0x40] sm:$0xff]
        %v2219 = vld [vmem:[#allocation5 + $0x48] sm:$0xff]
        %v2220 = vld [vmem:[#allocation5 + $0x50] sm:$0xff]
        %v2221 = vld [vmem:[#allocation5 + $0x58] sm:$0xff]
        %v2222 = vld [vmem:[#allocation5 + $0x60] sm:$0xff]
        %v2223 = vld [vmem:[#allocation5 + $0x68] sm:$0xff]
        %v2224 = vld [vmem:[#allocation5 + $0x70] sm:$0xff]
        %v2225 = vld [vmem:[#allocation5 + $0x78] sm:$0xff]
        %v2226 = vld [vmem:[#allocation5 + $0x80] sm:$0xff]
        %v2227 = vld [vmem:[#allocation5 + $0x88] sm:$0xff]
        %v2228 = vld [vmem:[#allocation5 + $0x90] sm:$0xff]
        %v2229 = vld [vmem:[#allocation5 + $0x98] sm:$0xff]
        %v2230 = vld [vmem:[#allocation5 + $0xa0] sm:$0xff]
        %v2231 = vld [vmem:[#allocation5 + $0xa8] sm:$0xff]
        %v2232 = vld [vmem:[#allocation5 + $0xb0] sm:$0xff]
        %v2233 = vld [vmem:[#allocation5 + $0xb8] sm:$0xff]
        %v2234 = vld [vmem:[#allocation5 + $0xc0] sm:$0xff]
        %v2235 = vld [vmem:[#allocation5 + $0xc8] sm:$0xff]
        %v2236 = vld [vmem:[#allocation5 + $0xd0] sm:$0xff]
        %v2237 = vld [vmem:[#allocation5 + $0xd8] sm:$0xff]
        %v2238 = vld [vmem:[#allocation5 + $0xe0] sm:$0xff]
        %v2239 = vld [vmem:[#allocation5 + $0xe8] sm:$0xff]
        %v2240 = vld [vmem:[#allocation5 + $0xf0] sm:$0xff]
        %v2241 = vld [vmem:[#allocation5 + $0xf8] sm:$0xff]
        %v2242 = vld [vmem:[#allocation5 + $0x100] sm:$0xff]
        %v2243 = vld [vmem:[#allocation5 + $0x108] sm:$0xff]
        %v2244 = vld [vmem:[#allocation5 + $0x110] sm:$0xff]
        %v2245 = vld [vmem:[#allocation5 + $0x118] sm:$0xff]
        %v2246 = vld [vmem:[#allocation5 + $0x120] sm:$0xff]
        %v2247 = vld [vmem:[#allocation5 + $0x128] sm:$0xff]
        %v2248 = vld [vmem:[#allocation5 + $0x130] sm:$0xff]
        %v2249 = vld [vmem:[#allocation5 + $0x138] sm:$0xff]
        %v2250 = vld [vmem:[#allocation5 + $0x140] sm:$0xff]
        %v2251 = vld [vmem:[#allocation5 + $0x148] sm:$0xff]
        %v2252 = vld [vmem:[#allocation5 + $0x150] sm:$0xff]
        %v2253 = vld [vmem:[#allocation5 + $0x158] sm:$0xff]
        %v2254 = vld [vmem:[#allocation5 + $0x160] sm:$0xff]
        %v2255 = vld [vmem:[#allocation5 + $0x168] sm:$0xff]
        %v2256 = vld [vmem:[#allocation5 + $0x170] sm:$0xff]
        %v2257 = vld [vmem:[#allocation5 + $0x178] sm:$0xff]
        %v2258 = vld [vmem:[#allocation7] sm:$0x7f]
        %vm2259 = vcmask 179200
        %v2261 = vsel %vm2259, %v2258, 0
        %v2263 = vsel %vm1061, %v527, 0
        %v2265 = vsel %vm1061, %v528, 0
        %2267 = vmatprep.subr.mxu0 %v524
        %2268 = vmatpush1.msra.mxu0 %v523
        %2269 = vmatprep.subr.mxu0 %v526
        %2270 = vmatpush1.msra.mxu0 %v525
        %2271 = vmatprep.subr.mxu0 %v2265
        %2272 = vmatpush1.msra.mxu0 %v2263
        %2273 = vmatprep.subr.mxu0 0.0
        %2274 = vmatpush1.msra.mxu0 0.0
        %2275 = vmatprep.subr.mxu0 0.0
        %2276 = vmatpush1.msra.mxu0 0.0
        %2277 = vmatprep.subr.mxu0 0.0
        %2278 = vmatpush1.msra.mxu0 0.0
        %2279 = vmatprep.subr.mxu0 0.0
        %2280 = vmatpush1.msra.mxu0 0.0
        %2281 = vmatprep.subr.mxu0 0.0
        %2282 = vmatpush1.msra.mxu0 0.0
        %2283 = vmatprep.subr.mxu0 0.0
        %2284 = vmatpush1.msra.mxu0 0.0
        %2285 = vmatprep.subr.mxu0 0.0
        %2286 = vmatpush1.msra.mxu0 0.0
        %2287 = vmatprep.subr.mxu0 0.0
        %2288 = vmatpush1.msra.mxu0 0.0
        %2289 = vmatprep.subr.mxu0 0.0
        %2290 = vmatpush1.msra.mxu0 0.0
        %2291 = vmatprep.subr.mxu0 0.0
        %2292 = vmatpush1.msra.mxu0 0.0
        %2293 = vmatprep.subr.mxu0 0.0
        %2294 = vmatpush1.msra.mxu0 0.0
        %2295 = vmatprep.subr.mxu0 0.0
        %2296 = vmatpush1.msra.mxu0 0.0
        %2297 = vmatprep.subr.mxu0 0.0
        %2298 = vmatpush1.msra.mxu0 0.0
        %2299 = vmatprep.subr.mxu0 0.0
        %2300 = vmatpush1.msra.mxu0 0.0
        %2301 = vmatprep.subr.mxu0 0.0
        %2302 = vmatpush1.msra.mxu0 0.0
        %2303 = vmatprep.subr.mxu0 0.0
        %2304 = vmatpush1.msra.mxu0 0.0
        %2305 = vmatprep.subr.mxu0 0.0
        %2306 = vmatpush1.msra.mxu0 0.0
        %2307 = vmatprep.subr.mxu0 0.0
        %2308 = vmatpush1.msra.mxu0 0.0
        %2309 = vmatprep.subr.mxu0 0.0
        %2310 = vmatpush1.msra.mxu0 0.0
        %2311 = vmatprep.subr.mxu0 0.0
        %2312 = vmatpush1.msra.mxu0 0.0
        %2313 = vmatprep.subr.mxu0 0.0
        %2314 = vmatpush1.msra.mxu0 0.0
        %2315 = vmatprep.subr.mxu0 0.0
        %2316 = vmatpush1.msra.mxu0 0.0
        %2317 = vmatprep.subr.mxu0 0.0
        %2318 = vmatpush1.msra.mxu0 0.0
        %2319 = vmatprep.subr.mxu0 0.0
        %2320 = vmatpush1.msra.mxu0 0.0
        %2321 = vmatprep.subr.mxu0 0.0
        %2322 = vmatpush1.msra.mxu0 0.0
        %2323 = vmatprep.subr.mxu0 0.0
        %2324 = vmatpush1.msra.mxu0 0.0
        %2325 = vmatprep.subr.mxu0 0.0
        %2326 = vmatpush1.msra.mxu0 0.0
        %2327 = vmatprep.subr.mxu0 0.0
        %2328 = vmatpush1.msra.mxu0 0.0
        %2329 = vmatprep.subr.mxu0 0.0
        %2330 = vmatpush1.msra.mxu0 0.0
        %2331 = vmatprep.mubr.f32.mxu0 0.0
        %2332 = vmatmul.mubr.f32.gmra.mrb[0].mxu0 %v2261
        %v2333 = vpop.f32.mrb[0].mxu0
        %v2334 = vadd.f32 0.0, %v2333
        %v2335 = vpop.f32.mrb[0].mxu0
        %v2336 = vadd.f32 0.0, %v2335
        %2337 = vdwg.mxu0
        %v2338 = vld [vmem:[%s4] sm:$0xff]
        %v2339 = vld [vmem:[%s4 + $0x8] sm:$0xff]
        %v2340 = vld [vmem:[%s4 + $0x10] sm:$0xff]
        %v2341 = vld [vmem:[%s4 + $0x18] sm:$0xff]
        %v2342 = vld [vmem:[%s4 + $0x20] sm:$0xff]
        %v2343 = vld [vmem:[%s4 + $0x28] sm:$0xff]
        %v2344 = vld [vmem:[%s4 + $0x30] sm:$0xff]
        %v2345 = vld [vmem:[%s4 + $0x38] sm:$0xff]
        %v2346 = vld [vmem:[%s4 + $0x40] sm:$0xff]
        %v2347 = vld [vmem:[%s4 + $0x48] sm:$0xff]
        %v2348 = vld [vmem:[%s4 + $0x50] sm:$0xff]
        %v2349 = vld [vmem:[%s4 + $0x58] sm:$0xff]
        %v2350 = vld [vmem:[%s4 + $0x60] sm:$0xff]
        %v2351 = vld [vmem:[%s4 + $0x68] sm:$0xff]
        %v2352 = vld [vmem:[%s4 + $0x70] sm:$0xff]
        %v2353 = vld [vmem:[%s4 + $0x78] sm:$0xff]
        %v2354 = vld [vmem:[%s4 + $0x80] sm:$0xff]
        %v2355 = vld [vmem:[%s4 + $0x88] sm:$0xff]
        %v2356 = vld [vmem:[%s4 + $0x90] sm:$0xff]
        %v2357 = vld [vmem:[%s4 + $0x98] sm:$0xff]
        %v2358 = vld [vmem:[%s4 + $0xa0] sm:$0xff]
        %v2359 = vld [vmem:[%s4 + $0xa8] sm:$0xff]
        %v2361 = vsel %vm681, %v2336, 0
        %2363 = vmatprep.subr.mxu0 0.0
        %2364 = vmatpush1.msra.mxu0 %v2338
        %2365 = vmatprep.subr.mxu0 0.0
        %2366 = vmatpush1.msra.mxu0 %v2339
        %2367 = vmatprep.subr.mxu0 0.0
        %2368 = vmatpush1.msra.mxu0 %v2340
        %2369 = vmatprep.subr.mxu0 0.0
        %2370 = vmatpush1.msra.mxu0 %v2341
        %2371 = vmatprep.subr.mxu0 0.0
        %2372 = vmatpush1.msra.mxu0 %v2342
        %2373 = vmatprep.subr.mxu0 0.0
        %2374 = vmatpush1.msra.mxu0 %v2343
        %2375 = vmatprep.subr.mxu0 0.0
        %2376 = vmatpush1.msra.mxu0 %v2344
        %2377 = vmatprep.subr.mxu0 0.0
        %2378 = vmatpush1.msra.mxu0 %v2345
        %2379 = vmatprep.subr.mxu0 0.0
        %2380 = vmatpush1.msra.mxu0 %v2346
        %2381 = vmatprep.subr.mxu0 0.0
        %2382 = vmatpush1.msra.mxu0 %v2347
        %2383 = vmatprep.subr.mxu0 0.0
        %2384 = vmatpush1.msra.mxu0 %v2348
        %2385 = vmatprep.subr.mxu0 0.0
        %2386 = vmatpush1.msra.mxu0 %v2349
        %2387 = vmatprep.subr.mxu0 0.0
        %2388 = vmatpush1.msra.mxu0 %v2350
        %2389 = vmatprep.subr.mxu0 0.0
        %2390 = vmatpush1.msra.mxu0 %v2351
        %2391 = vmatprep.subr.mxu0 0.0
        %2392 = vmatpush1.msra.mxu0 %v2352
        %2393 = vmatprep.subr.mxu0 0.0
        %2394 = vmatpush1.msra.mxu0 %v2353
        %2395 = vmatprep.subr.mxu0 0.0
        %2396 = vmatpush1.msra.mxu0 %v2354
        %2397 = vmatprep.subr.mxu0 0.0
        %2398 = vmatpush1.msra.mxu0 %v2355
        %2399 = vmatprep.subr.mxu0 0.0
        %2400 = vmatpush1.msra.mxu0 %v2356
        %2401 = vmatprep.subr.mxu0 0.0
        %2402 = vmatpush1.msra.mxu0 %v2357
        %2403 = vmatprep.subr.mxu0 0.0
        %2404 = vmatpush1.msra.mxu0 %v2358
        %2405 = vmatprep.subr.mxu0 0.0
        %2406 = vmatpush1.msra.mxu0 %v2359
        %2407 = vmatprep.subr.mxu0 0.0
        %2408 = vmatpush1.msra.mxu0 0.0
        %2409 = vmatprep.subr.mxu0 0.0
        %2410 = vmatpush1.msra.mxu0 0.0
        %2411 = vmatprep.subr.mxu0 0.0
        %2412 = vmatpush1.msra.mxu0 0.0
        %2413 = vmatprep.subr.mxu0 0.0
        %2414 = vmatpush1.msra.mxu0 0.0
        %2415 = vmatprep.subr.mxu0 0.0
        %2416 = vmatpush1.msra.mxu0 0.0
        %2417 = vmatprep.subr.mxu0 0.0
        %2418 = vmatpush1.msra.mxu0 0.0
        %2419 = vmatprep.subr.mxu0 0.0
        %2420 = vmatpush1.msra.mxu0 0.0
        %2421 = vmatprep.subr.mxu0 0.0
        %2422 = vmatpush1.msra.mxu0 0.0
        %2423 = vmatprep.subr.mxu0 0.0
        %2424 = vmatpush1.msra.mxu0 0.0
        %2425 = vmatprep.subr.mxu0 0.0
        %2426 = vmatpush1.msra.mxu0 0.0
        %2427 = vmatprep.mubr.f32.mxu0 %v2361
        %2428 = vmatmul.mubr.f32.gmra.mrb[0].mxu0 %v2334
        %v2429 = vpop.f32.mrb[0].mxu0
        %v2430 = vadd.f32 0.0, %v2429
        %v2431 = vpop.f32.mrb[0].mxu0
        %2432 = vdwg.mxu0
        %v2433 = vmax.f32 %v2430, 0.0
        %v2434 = vld [vmem:[#allocation8] sm:$0xff]
        %vm2435 = vcmask 64512
        %v2437 = vsel %vm2435, %v2433, 0
        %2439 = vmatprep.subr.mxu0 0.0
        %2440 = vmatpush1.msra.mxu0 %v2434
        %2441 = vmatprep.subr.mxu0 0.0
        %2442 = vmatpush1.msra.mxu0 0.0
        %2443 = vmatprep.subr.mxu0 0.0
        %2444 = vmatpush1.msra.mxu0 0.0
        %2445 = vmatprep.subr.mxu0 0.0
        %2446 = vmatpush1.msra.mxu0 0.0
        %2447 = vmatprep.subr.mxu0 0.0
        %2448 = vmatpush1.msra.mxu0 0.0
        %2449 = vmatprep.subr.mxu0 0.0
        %2450 = vmatpush1.msra.mxu0 0.0
        %2451 = vmatprep.subr.mxu0 0.0
        %2452 = vmatpush1.msra.mxu0 0.0
        %2453 = vmatprep.subr.mxu0 0.0
        %2454 = vmatpush1.msra.mxu0 0.0
        %2455 = vmatprep.subr.mxu0 0.0
        %2456 = vmatpush1.msra.mxu0 0.0
        %2457 = vmatprep.subr.mxu0 0.0
        %2458 = vmatpush1.msra.mxu0 0.0
        %2459 = vmatprep.subr.mxu0 0.0
        %2460 = vmatpush1.msra.mxu0 0.0
        %2461 = vmatprep.subr.mxu0 0.0
        %2462 = vmatpush1.msra.mxu0 0.0
        %2463 = vmatprep.subr.mxu0 0.0
        %2464 = vmatpush1.msra.mxu0 0.0
        %2465 = vmatprep.subr.mxu0 0.0
        %2466 = vmatpush1.msra.mxu0 0.0
        %2467 = vmatprep.subr.mxu0 0.0
        %2468 = vmatpush1.msra.mxu0 0.0
        %2469 = vmatprep.subr.mxu0 0.0
        %2470 = vmatpush1.msra.mxu0 0.0
        %2471 = vmatprep.subr.mxu0 0.0
        %2472 = vmatpush1.msra.mxu0 0.0
        %2473 = vmatprep.subr.mxu0 0.0
        %2474 = vmatpush1.msra.mxu0 0.0
        %2475 = vmatprep.subr.mxu0 0.0
        %2476 = vmatpush1.msra.mxu0 0.0
        %2477 = vmatprep.subr.mxu0 0.0
        %2478 = vmatpush1.msra.mxu0 0.0
        %2479 = vmatprep.subr.mxu0 0.0
        %2480 = vmatpush1.msra.mxu0 0.0
        %2481 = vmatprep.subr.mxu0 0.0
        %2482 = vmatpush1.msra.mxu0 0.0
        %2483 = vmatprep.subr.mxu0 0.0
        %2484 = vmatpush1.msra.mxu0 0.0
        %2485 = vmatprep.subr.mxu0 0.0
        %2486 = vmatpush1.msra.mxu0 0.0
        %2487 = vmatprep.subr.mxu0 0.0
        %2488 = vmatpush1.msra.mxu0 0.0
        %2489 = vmatprep.subr.mxu0 0.0
        %2490 = vmatpush1.msra.mxu0 0.0
        %2491 = vmatprep.subr.mxu0 0.0
        %2492 = vmatpush1.msra.mxu0 0.0
        %2493 = vmatprep.subr.mxu0 0.0
        %2494 = vmatpush1.msra.mxu0 0.0
        %2495 = vmatprep.subr.mxu0 0.0
        %2496 = vmatpush1.msra.mxu0 0.0
        %2497 = vmatprep.subr.mxu0 0.0
        %2498 = vmatpush1.msra.mxu0 0.0
        %2499 = vmatprep.subr.mxu0 0.0
        %2500 = vmatpush1.msra.mxu0 0.0
        %2501 = vmatprep.subr.mxu0 0.0
        %2502 = vmatpush1.msra.mxu0 0.0
        %2503 = vmatprep.mubr.f32.mxu0 0.0
        %2504 = vmatmul.mubr.f32.gmra.mrb[0].mxu0 %v2437
        %v2505 = vpop.f32.mrb[0].mxu0
        %v2506 = vadd.f32 0.0, %v2505
        %v2507 = vpop.f32.mrb[0].mxu0
        %2508 = vdwg.mxu0
        %v2509 = vld [vmem:[%s6] sm:$0xff]
        %v2510 = vld [vmem:[%s6 + $0x8] sm:$0xff]
        %vm2511 = vcmask 7168
        %v2513 = vsel %vm2511, %v2509, 0
        %v2516 = vsel %vm2511, %v2510, 0
        %vm2518 = vcmask 1040384
        %v2520 = vsel %vm2518, %v2506, 0
        %2522 = vmatprep.subr.mxu0 0.0
        %2523 = vmatpush1.msra.mxu0 %v2520
        %2524 = vmatprep.subr.mxu0 0.0
        %2525 = vmatpush1.msra.mxu0 0.0
        %2526 = vmatprep.subr.mxu0 0.0
        %2527 = vmatpush1.msra.mxu0 0.0
        %2528 = vmatprep.subr.mxu0 0.0
        %2529 = vmatpush1.msra.mxu0 0.0
        %2530 = vmatprep.subr.mxu0 0.0
        %2531 = vmatpush1.msra.mxu0 0.0
        %2532 = vmatprep.subr.mxu0 0.0
        %2533 = vmatpush1.msra.mxu0 0.0
        %2534 = vmatprep.subr.mxu0 0.0
        %2535 = vmatpush1.msra.mxu0 0.0
        %2536 = vmatprep.subr.mxu0 0.0
        %2537 = vmatpush1.msra.mxu0 0.0
        %2538 = vmatprep.subr.mxu0 0.0
        %2539 = vmatpush1.msra.mxu0 0.0
        %2540 = vmatprep.subr.mxu0 0.0
        %2541 = vmatpush1.msra.mxu0 0.0
        %2542 = vmatprep.subr.mxu0 0.0
        %2543 = vmatpush1.msra.mxu0 0.0
        %2544 = vmatprep.subr.mxu0 0.0
        %2545 = vmatpush1.msra.mxu0 0.0
        %2546 = vmatprep.subr.mxu0 0.0
        %2547 = vmatpush1.msra.mxu0 0.0
        %2548 = vmatprep.subr.mxu0 0.0
        %2549 = vmatpush1.msra.mxu0 0.0
        %2550 = vmatprep.subr.mxu0 0.0
        %2551 = vmatpush1.msra.mxu0 0.0
        %2552 = vmatprep.subr.mxu0 0.0
        %2553 = vmatpush1.msra.mxu0 0.0
        %2554 = vmatprep.subr.mxu0 0.0
        %2555 = vmatpush1.msra.mxu0 0.0
        %2556 = vmatprep.subr.mxu0 0.0
        %2557 = vmatpush1.msra.mxu0 0.0
        %2558 = vmatprep.subr.mxu0 0.0
        %2559 = vmatpush1.msra.mxu0 0.0
        %2560 = vmatprep.subr.mxu0 0.0
        %2561 = vmatpush1.msra.mxu0 0.0
        %2562 = vmatprep.subr.mxu0 0.0
        %2563 = vmatpush1.msra.mxu0 0.0
        %2564 = vmatprep.subr.mxu0 0.0
        %2565 = vmatpush1.msra.mxu0 0.0
        %2566 = vmatprep.subr.mxu0 0.0
        %2567 = vmatpush1.msra.mxu0 0.0
        %2568 = vmatprep.subr.mxu0 0.0
        %2569 = vmatpush1.msra.mxu0 0.0
        %2570 = vmatprep.subr.mxu0 0.0
        %2571 = vmatpush1.msra.mxu0 0.0
        %2572 = vmatprep.subr.mxu0 0.0
        %2573 = vmatpush1.msra.mxu0 0.0
        %2574 = vmatprep.subr.mxu0 0.0
        %2575 = vmatpush1.msra.mxu0 0.0
        %2576 = vmatprep.subr.mxu0 0.0
        %2577 = vmatpush1.msra.mxu0 0.0
        %2578 = vmatprep.subr.mxu0 0.0
        %2579 = vmatpush1.msra.mxu0 0.0
        %2580 = vmatprep.subr.mxu0 0.0
        %2581 = vmatpush1.msra.mxu0 0.0
        %2582 = vmatprep.subr.mxu0 0.0
        %2583 = vmatpush1.msra.mxu0 0.0
        %2584 = vmatprep.subr.mxu0 0.0
        %2585 = vmatpush1.msra.mxu0 0.0
        %2586 = vmatprep.mubr.f32.mxu0 0.0
        %2587 = vmatmul.mubr.f32.gmra.mrb[0].mxu0 %v2513
        %v2588 = vpop.f32.mrb[0].mxu0
        %v2589 = vadd.f32 0.0, %v2588
        %v2590 = vpop.f32.mrb[0].mxu0
        %2591 = vmatprep.mubr.f32.mxu0 0.0
        %2592 = vmatmul.mubr.f32.gmra.mrb[0].mxu0 %v2516
        %v2593 = vpop.f32.mrb[0].mxu0
        %v2594 = vadd.f32 0.0, %v2593
        %v2595 = vpop.f32.mrb[0].mxu0
        %2596 = vdwg.mxu0
        %2597 = vmatprep.subr.mxu0 0.0
        %2598 = vmatpush1.msra.mxu0 %v2210
        %2599 = vmatprep.subr.mxu0 0.0
        %2600 = vmatpush1.msra.mxu0 %v2211
        %2601 = vmatprep.subr.mxu0 0.0
        %2602 = vmatpush1.msra.mxu0 %v2212
        %2603 = vmatprep.subr.mxu0 0.0
        %2604 = vmatpush1.msra.mxu0 %v2213
        %2605 = vmatprep.subr.mxu0 0.0
        %2606 = vmatpush1.msra.mxu0 %v2214
        %2607 = vmatprep.subr.mxu0 0.0
        %2608 = vmatpush1.msra.mxu0 %v2215
        %2609 = vmatprep.subr.mxu0 0.0
        %2610 = vmatpush1.msra.mxu0 %v2216
        %2611 = vmatprep.subr.mxu0 0.0
        %2612 = vmatpush1.msra.mxu0 %v2217
        %2613 = vmatprep.subr.mxu0 0.0
        %2614 = vmatpush1.msra.mxu0 %v2218
        %2615 = vmatprep.subr.mxu0 0.0
        %2616 = vmatpush1.msra.mxu0 %v2219
        %2617 = vmatprep.subr.mxu0 0.0
        %2618 = vmatpush1.msra.mxu0 %v2220
        %2619 = vmatprep.subr.mxu0 0.0
        %2620 = vmatpush1.msra.mxu0 %v2221
        %2621 = vmatprep.subr.mxu0 0.0
        %2622 = vmatpush1.msra.mxu0 %v2222
        %2623 = vmatprep.subr.mxu0 0.0
        %2624 = vmatpush1.msra.mxu0 %v2223
        %2625 = vmatprep.subr.mxu0 0.0
        %2626 = vmatpush1.msra.mxu0 %v2224
        %2627 = vmatprep.subr.mxu0 0.0
        %2628 = vmatpush1.msra.mxu0 %v2225
        %2629 = vmatprep.subr.mxu0 0.0
        %2630 = vmatpush1.msra.mxu0 %v2226
        %2631 = vmatprep.subr.mxu0 0.0
        %2632 = vmatpush1.msra.mxu0 %v2227
        %2633 = vmatprep.subr.mxu0 0.0
        %2634 = vmatpush1.msra.mxu0 %v2228
        %2635 = vmatprep.subr.mxu0 0.0
        %2636 = vmatpush1.msra.mxu0 %v2229
        %2637 = vmatprep.subr.mxu0 0.0
        %2638 = vmatpush1.msra.mxu0 %v2230
        %2639 = vmatprep.subr.mxu0 0.0
        %2640 = vmatpush1.msra.mxu0 %v2231
        %2641 = vmatprep.subr.mxu0 0.0
        %2642 = vmatpush1.msra.mxu0 %v2232
        %2643 = vmatprep.subr.mxu0 0.0
        %2644 = vmatpush1.msra.mxu0 %v2233
        %2645 = vmatprep.subr.mxu0 0.0
        %2646 = vmatpush1.msra.mxu0 %v2234
        %2647 = vmatprep.subr.mxu0 0.0
        %2648 = vmatpush1.msra.mxu0 %v2235
        %2649 = vmatprep.subr.mxu0 0.0
        %2650 = vmatpush1.msra.mxu0 %v2236
        %2651 = vmatprep.subr.mxu0 0.0
        %2652 = vmatpush1.msra.mxu0 %v2237
        %2653 = vmatprep.subr.mxu0 0.0
        %2654 = vmatpush1.msra.mxu0 %v2238
        %2655 = vmatprep.subr.mxu0 0.0
        %2656 = vmatpush1.msra.mxu0 %v2239
        %2657 = vmatprep.subr.mxu0 0.0
        %2658 = vmatpush1.msra.mxu0 %v2240
        %2659 = vmatprep.subr.mxu0 0.0
        %2660 = vmatpush1.msra.mxu0 %v2241
        %2661 = vmatprep.mubr.f32.mxu0 %v2205
        %2662 = vmatmul.mubr.f32.gmra.mrb[0].mxu0 %v2204
        %v2663 = vpop.f32.mrb[0].mxu0
        %v2664 = vadd.f32 %v2589, %v2663
        %v2665 = vpop.f32.mrb[0].mxu0
        %2666 = vmatprep.mubr.f32.mxu0 %v2208
        %2667 = vmatmul.mubr.f32.gmra.mrb[0].mxu0 %v2207
        %v2668 = vpop.f32.mrb[0].mxu0
        %v2669 = vadd.f32 %v2594, %v2668
        %v2670 = vpop.f32.mrb[0].mxu0
        %2671 = vdwg.mxu0
        %2672 = vmatprep.subr.mxu0 0.0
        %2673 = vmatpush1.msra.mxu0 %v2242
        %2674 = vmatprep.subr.mxu0 0.0
        %2675 = vmatpush1.msra.mxu0 %v2243
        %2676 = vmatprep.subr.mxu0 0.0
        %2677 = vmatpush1.msra.mxu0 %v2244
        %2678 = vmatprep.subr.mxu0 0.0
        %2679 = vmatpush1.msra.mxu0 %v2245
        %2680 = vmatprep.subr.mxu0 0.0
        %2681 = vmatpush1.msra.mxu0 %v2246
        %2682 = vmatprep.subr.mxu0 0.0
        %2683 = vmatpush1.msra.mxu0 %v2247
        %2684 = vmatprep.subr.mxu0 0.0
        %2685 = vmatpush1.msra.mxu0 %v2248
        %2686 = vmatprep.subr.mxu0 0.0
        %2687 = vmatpush1.msra.mxu0 %v2249
        %2688 = vmatprep.subr.mxu0 0.0
        %2689 = vmatpush1.msra.mxu0 %v2250
        %2690 = vmatprep.subr.mxu0 0.0
        %2691 = vmatpush1.msra.mxu0 %v2251
        %2692 = vmatprep.subr.mxu0 0.0
        %2693 = vmatpush1.msra.mxu0 %v2252
        %2694 = vmatprep.subr.mxu0 0.0
        %2695 = vmatpush1.msra.mxu0 %v2253
        %2696 = vmatprep.subr.mxu0 0.0
        %2697 = vmatpush1.msra.mxu0 %v2254
        %2698 = vmatprep.subr.mxu0 0.0
        %2699 = vmatpush1.msra.mxu0 %v2255
        %2700 = vmatprep.subr.mxu0 0.0
        %2701 = vmatpush1.msra.mxu0 %v2256
        %2702 = vmatprep.subr.mxu0 0.0
        %2703 = vmatpush1.msra.mxu0 %v2257
        %2704 = vmatprep.subr.mxu0 0.0
        %2705 = vmatpush1.msra.mxu0 0.0
        %2706 = vmatprep.subr.mxu0 0.0
        %2707 = vmatpush1.msra.mxu0 0.0
        %2708 = vmatprep.subr.mxu0 0.0
        %2709 = vmatpush1.msra.mxu0 0.0
        %2710 = vmatprep.subr.mxu0 0.0
        %2711 = vmatpush1.msra.mxu0 0.0
        %2712 = vmatprep.subr.mxu0 0.0
        %2713 = vmatpush1.msra.mxu0 0.0
        %2714 = vmatprep.subr.mxu0 0.0
        %2715 = vmatpush1.msra.mxu0 0.0
        %2716 = vmatprep.subr.mxu0 0.0
        %2717 = vmatpush1.msra.mxu0 0.0
        %2718 = vmatprep.subr.mxu0 0.0
        %2719 = vmatpush1.msra.mxu0 0.0
        %2720 = vmatprep.subr.mxu0 0.0
        %2721 = vmatpush1.msra.mxu0 0.0
        %2722 = vmatprep.subr.mxu0 0.0
        %2723 = vmatpush1.msra.mxu0 0.0
        %2724 = vmatprep.subr.mxu0 0.0
        %2725 = vmatpush1.msra.mxu0 0.0
        %2726 = vmatprep.subr.mxu0 0.0
        %2727 = vmatpush1.msra.mxu0 0.0
        %2728 = vmatprep.subr.mxu0 0.0
        %2729 = vmatpush1.msra.mxu0 0.0
        %2730 = vmatprep.subr.mxu0 0.0
        %2731 = vmatpush1.msra.mxu0 0.0
        %2732 = vmatprep.subr.mxu0 0.0
        %2733 = vmatpush1.msra.mxu0 0.0
        %2734 = vmatprep.subr.mxu0 0.0
        %2735 = vmatpush1.msra.mxu0 0.0
        %2736 = vmatprep.mubr.f32.mxu0 0.0
        %2737 = vmatmul.mubr.f32.gmra.mrb[0].mxu0 %v2206
        %v2738 = vpop.f32.mrb[0].mxu0
        %v2739 = vadd.f32 %v2664, %v2738
        %v2740 = vpop.f32.mrb[0].mxu0
        %2741 = vmatprep.mubr.f32.mxu0 0.0
        %2742 = vmatmul.mubr.f32.gmra.mrb[0].mxu0 %v2209
        %v2743 = vpop.f32.mrb[0].mxu0
        %v2744 = vadd.f32 %v2669, %v2743
        %v2745 = vpop.f32.mrb[0].mxu0
        %2746 = vdwg.mxu0
        %v2747 = vld [vmem:[%s7] sm:$0xff]
        %v2748 = vld [vmem:[%s7 + $0x8] sm:$0xff]
        %v2749 = vld [vmem:[%s7 + $0x10] sm:$0xff]
        %v2750 = vld [vmem:[%s7 + $0x18] sm:$0xff]
        %v2751 = vld [vmem:[%s7 + $0x20] sm:$0xff]
        %v2752 = vld [vmem:[%s7 + $0x28] sm:$0xff]
        %v2753 = vld [vmem:[%s7 + $0x30] sm:$0xff]
        %v2754 = vld [vmem:[%s7 + $0x38] sm:$0xff]
        %v2755 = vld [vmem:[%s7 + $0x40] sm:$0xff]
        %v2756 = vld [vmem:[%s7 + $0x48] sm:$0xff]
        %v2757 = vld [vmem:[%s7 + $0x50] sm:$0xff]
        %v2758 = vld [vmem:[%s7 + $0x58] sm:$0xff]
        %v2759 = vld [vmem:[%s7 + $0x60] sm:$0xff]
        %v2760 = vld [vmem:[%s7 + $0x68] sm:$0xff]
        %v2761 = vld [vmem:[%s7 + $0x70] sm:$0xff]
        %v2762 = vld [vmem:[%s7 + $0x78] sm:$0xff]
        %v2763 = vld [vmem:[%s7 + $0x80] sm:$0xff]
        %v2764 = vld [vmem:[%s7 + $0x88] sm:$0xff]
        %v2765 = vld [vmem:[%s7 + $0x90] sm:$0xff]
        %v2766 = vld [vmem:[%s7 + $0x98] sm:$0xff]
        %v2767 = vld [vmem:[%s7 + $0xa0] sm:$0xff]
        %v2768 = vld [vmem:[%s7 + $0xa8] sm:$0xff]
        %v2770 = vrot.slane %v2334, 1
        %v2771 = vrot.slane %v2336, 1
        %v2773 = vsel %vm681, %v2771, 0
        %2775 = vmatprep.subr.mxu0 0.0
        %2776 = vmatpush1.msra.mxu0 %v2747
        %2777 = vmatprep.subr.mxu0 0.0
        %2778 = vmatpush1.msra.mxu0 %v2748
        %2779 = vmatprep.subr.mxu0 0.0
        %2780 = vmatpush1.msra.mxu0 %v2749
        %2781 = vmatprep.subr.mxu0 0.0
        %2782 = vmatpush1.msra.mxu0 %v2750
        %2783 = vmatprep.subr.mxu0 0.0
        %2784 = vmatpush1.msra.mxu0 %v2751
        %2785 = vmatprep.subr.mxu0 0.0
        %2786 = vmatpush1.msra.mxu0 %v2752
        %2787 = vmatprep.subr.mxu0 0.0
        %2788 = vmatpush1.msra.mxu0 %v2753
        %2789 = vmatprep.subr.mxu0 0.0
        %2790 = vmatpush1.msra.mxu0 %v2754
        %2791 = vmatprep.subr.mxu0 0.0
        %2792 = vmatpush1.msra.mxu0 %v2755
        %2793 = vmatprep.subr.mxu0 0.0
        %2794 = vmatpush1.msra.mxu0 %v2756
        %2795 = vmatprep.subr.mxu0 0.0
        %2796 = vmatpush1.msra.mxu0 %v2757
        %2797 = vmatprep.subr.mxu0 0.0
        %2798 = vmatpush1.msra.mxu0 %v2758
        %2799 = vmatprep.subr.mxu0 0.0
        %2800 = vmatpush1.msra.mxu0 %v2759
        %2801 = vmatprep.subr.mxu0 0.0
        %2802 = vmatpush1.msra.mxu0 %v2760
        %2803 = vmatprep.subr.mxu0 0.0
        %2804 = vmatpush1.msra.mxu0 %v2761
        %2805 = vmatprep.subr.mxu0 0.0
        %2806 = vmatpush1.msra.mxu0 %v2762
        %2807 = vmatprep.subr.mxu0 0.0
        %2808 = vmatpush1.msra.mxu0 %v2763
        %2809 = vmatprep.subr.mxu0 0.0
        %2810 = vmatpush1.msra.mxu0 %v2764
        %2811 = vmatprep.subr.mxu0 0.0
        %2812 = vmatpush1.msra.mxu0 %v2765
        %2813 = vmatprep.subr.mxu0 0.0
        %2814 = vmatpush1.msra.mxu0 %v2766
        %2815 = vmatprep.subr.mxu0 0.0
        %2816 = vmatpush1.msra.mxu0 %v2767
        %2817 = vmatprep.subr.mxu0 0.0
        %2818 = vmatpush1.msra.mxu0 %v2768
        %2819 = vmatprep.subr.mxu0 0.0
        %2820 = vmatpush1.msra.mxu0 0.0
        %2821 = vmatprep.subr.mxu0 0.0
        %2822 = vmatpush1.msra.mxu0 0.0
        %2823 = vmatprep.subr.mxu0 0.0
        %2824 = vmatpush1.msra.mxu0 0.0
        %2825 = vmatprep.subr.mxu0 0.0
        %2826 = vmatpush1.msra.mxu0 0.0
        %2827 = vmatprep.subr.mxu0 0.0
        %2828 = vmatpush1.msra.mxu0 0.0
        %2829 = vmatprep.subr.mxu0 0.0
        %2830 = vmatpush1.msra.mxu0 0.0
        %2831 = vmatprep.subr.mxu0 0.0
        %2832 = vmatpush1.msra.mxu0 0.0
        %2833 = vmatprep.subr.mxu0 0.0
        %2834 = vmatpush1.msra.mxu0 0.0
        %2835 = vmatprep.subr.mxu0 0.0
        %2836 = vmatpush1.msra.mxu0 0.0
        %2837 = vmatprep.subr.mxu0 0.0
        %2838 = vmatpush1.msra.mxu0 0.0
        %2839 = vmatprep.mubr.f32.mxu0 %v2773
        %2840 = vmatmul.mubr.f32.gmra.mrb[0].mxu0 %v2770
        %v2841 = vpop.f32.mrb[0].mxu0
        %v2842 = vadd.f32 0.0, %v2841
        %v2843 = vpop.f32.mrb[0].mxu0
        %2844 = vdwg.mxu0
        %v2845 = vmax.f32 %v2842, 0.0
        %v2846 = vld [vmem:[#allocation10] sm:$0xff]
        %v2847 = vld [vmem:[#allocation10 + $0x8] sm:$0xff]
        %vm2848 = vcmask 130048
        %v2850 = vsel %vm2848, %v2845, 0
        %2852 = vmatprep.subr.mxu0 0.0
        %2853 = vmatpush1.msra.mxu0 %v2846
        %2854 = vmatprep.subr.mxu0 0.0
        %2855 = vmatpush1.msra.mxu0 %v2847
        %2856 = vmatprep.subr.mxu0 0.0
        %2857 = vmatpush1.msra.mxu0 0.0
        %2858 = vmatprep.subr.mxu0 0.0
        %2859 = vmatpush1.msra.mxu0 0.0
        %2860 = vmatprep.subr.mxu0 0.0
        %2861 = vmatpush1.msra.mxu0 0.0
        %2862 = vmatprep.subr.mxu0 0.0
        %2863 = vmatpush1.msra.mxu0 0.0
        %2864 = vmatprep.subr.mxu0 0.0
        %2865 = vmatpush1.msra.mxu0 0.0
        %2866 = vmatprep.subr.mxu0 0.0
        %2867 = vmatpush1.msra.mxu0 0.0
        %2868 = vmatprep.subr.mxu0 0.0
        %2869 = vmatpush1.msra.mxu0 0.0
        %2870 = vmatprep.subr.mxu0 0.0
        %2871 = vmatpush1.msra.mxu0 0.0
        %2872 = vmatprep.subr.mxu0 0.0
        %2873 = vmatpush1.msra.mxu0 0.0
        %2874 = vmatprep.subr.mxu0 0.0
        %2875 = vmatpush1.msra.mxu0 0.0
        %2876 = vmatprep.subr.mxu0 0.0
        %2877 = vmatpush1.msra.mxu0 0.0
        %2878 = vmatprep.subr.mxu0 0.0
        %2879 = vmatpush1.msra.mxu0 0.0
        %2880 = vmatprep.subr.mxu0 0.0
        %2881 = vmatpush1.msra.mxu0 0.0
        %2882 = vmatprep.subr.mxu0 0.0
        %2883 = vmatpush1.msra.mxu0 0.0
        %2884 = vmatprep.subr.mxu0 0.0
        %2885 = vmatpush1.msra.mxu0 0.0
        %2886 = vmatprep.subr.mxu0 0.0
        %2887 = vmatpush1.msra.mxu0 0.0
        %2888 = vmatprep.subr.mxu0 0.0
        %2889 = vmatpush1.msra.mxu0 0.0
        %2890 = vmatprep.subr.mxu0 0.0
        %2891 = vmatpush1.msra.mxu0 0.0
        %2892 = vmatprep.subr.mxu0 0.0
        %2893 = vmatpush1.msra.mxu0 0.0
        %2894 = vmatprep.subr.mxu0 0.0
        %2895 = vmatpush1.msra.mxu0 0.0
        %2896 = vmatprep.subr.mxu0 0.0
        %2897 = vmatpush1.msra.mxu0 0.0
        %2898 = vmatprep.subr.mxu0 0.0
        %2899 = vmatpush1.msra.mxu0 0.0
        %2900 = vmatprep.subr.mxu0 0.0
        %2901 = vmatpush1.msra.mxu0 0.0
        %2902 = vmatprep.subr.mxu0 0.0
        %2903 = vmatpush1.msra.mxu0 0.0
        %2904 = vmatprep.subr.mxu0 0.0
        %2905 = vmatpush1.msra.mxu0 0.0
        %2906 = vmatprep.subr.mxu0 0.0
        %2907 = vmatpush1.msra.mxu0 0.0
        %2908 = vmatprep.subr.mxu0 0.0
        %2909 = vmatpush1.msra.mxu0 0.0
        %2910 = vmatprep.subr.mxu0 0.0
        %2911 = vmatpush1.msra.mxu0 0.0
        %2912 = vmatprep.subr.mxu0 0.0
        %2913 = vmatpush1.msra.mxu0 0.0
        %2914 = vmatprep.subr.mxu0 0.0
        %2915 = vmatpush1.msra.mxu0 0.0
        %2916 = vmatprep.mubr.f32.mxu0 0.0
        %2917 = vmatmul.mubr.f32.gmra.mrb[0].mxu0 %v2850
        %v2918 = vpop.f32.mrb[0].mxu0
        %v2919 = vadd.f32 0.0, %v2918
        %v2920 = vpop.f32.mrb[0].mxu0
        %2921 = vdwg.mxu0
        %v2922 = vld [vmem:[%s9] sm:$0xff]
        %v2923 = vld [vmem:[%s9 + $0x8] sm:$0xff]
        %vm2924 = vcmask 15360
        %v2926 = vsel %vm2924, %v2922, 0
        %v2929 = vsel %vm2924, %v2923, 0
        %v2932 = vsel %vm2029, %v2919, 0
        %2934 = vmatprep.subr.mxu0 0.0
        %2935 = vmatpush1.msra.mxu0 %v2932
        %2936 = vmatprep.subr.mxu0 0.0
        %2937 = vmatpush1.msra.mxu0 0.0
        %2938 = vmatprep.subr.mxu0 0.0
        %2939 = vmatpush1.msra.mxu0 0.0
        %2940 = vmatprep.subr.mxu0 0.0
        %2941 = vmatpush1.msra.mxu0 0.0
        %2942 = vmatprep.subr.mxu0 0.0
        %2943 = vmatpush1.msra.mxu0 0.0
        %2944 = vmatprep.subr.mxu0 0.0
        %2945 = vmatpush1.msra.mxu0 0.0
        %2946 = vmatprep.subr.mxu0 0.0
        %2947 = vmatpush1.msra.mxu0 0.0
        %2948 = vmatprep.subr.mxu0 0.0
        %2949 = vmatpush1.msra.mxu0 0.0
        %2950 = vmatprep.subr.mxu0 0.0
        %2951 = vmatpush1.msra.mxu0 0.0
        %2952 = vmatprep.subr.mxu0 0.0
        %2953 = vmatpush1.msra.mxu0 0.0
        %2954 = vmatprep.subr.mxu0 0.0
        %2955 = vmatpush1.msra.mxu0 0.0
        %2956 = vmatprep.subr.mxu0 0.0
        %2957 = vmatpush1.msra.mxu0 0.0
        %2958 = vmatprep.subr.mxu0 0.0
        %2959 = vmatpush1.msra.mxu0 0.0
        %2960 = vmatprep.subr.mxu0 0.0
        %2961 = vmatpush1.msra.mxu0 0.0
        %2962 = vmatprep.subr.mxu0 0.0
        %2963 = vmatpush1.msra.mxu0 0.0
        %2964 = vmatprep.subr.mxu0 0.0
        %2965 = vmatpush1.msra.mxu0 0.0
        %2966 = vmatprep.subr.mxu0 0.0
        %2967 = vmatpush1.msra.mxu0 0.0
        %2968 = vmatprep.subr.mxu0 0.0
        %2969 = vmatpush1.msra.mxu0 0.0
        %2970 = vmatprep.subr.mxu0 0.0
        %2971 = vmatpush1.msra.mxu0 0.0
        %2972 = vmatprep.subr.mxu0 0.0
        %2973 = vmatpush1.msra.mxu0 0.0
        %2974 = vmatprep.subr.mxu0 0.0
        %2975 = vmatpush1.msra.mxu0 0.0
        %2976 = vmatprep.subr.mxu0 0.0
        %2977 = vmatpush1.msra.mxu0 0.0
        %2978 = vmatprep.subr.mxu0 0.0
        %2979 = vmatpush1.msra.mxu0 0.0
        %2980 = vmatprep.subr.mxu0 0.0
        %2981 = vmatpush1.msra.mxu0 0.0
        %2982 = vmatprep.subr.mxu0 0.0
        %2983 = vmatpush1.msra.mxu0 0.0
        %2984 = vmatprep.subr.mxu0 0.0
        %2985 = vmatpush1.msra.mxu0 0.0
        %2986 = vmatprep.subr.mxu0 0.0
        %2987 = vmatpush1.msra.mxu0 0.0
        %2988 = vmatprep.subr.mxu0 0.0
        %2989 = vmatpush1.msra.mxu0 0.0
        %2990 = vmatprep.subr.mxu0 0.0
        %2991 = vmatpush1.msra.mxu0 0.0
        %2992 = vmatprep.subr.mxu0 0.0
        %2993 = vmatpush1.msra.mxu0 0.0
        %2994 = vmatprep.subr.mxu0 0.0
        %2995 = vmatpush1.msra.mxu0 0.0
        %2996 = vmatprep.subr.mxu0 0.0
        %2997 = vmatpush1.msra.mxu0 0.0
        %2998 = vmatprep.mubr.f32.mxu0 0.0
        %2999 = vmatmul.mubr.f32.gmra.mrb[0].mxu0 %v2926
        %v3000 = vpop.f32.mrb[0].mxu0
        %v3001 = vadd.f32 0.0, %v3000
        %v3002 = vpop.f32.mrb[0].mxu0
        %3003 = vmatprep.mubr.f32.mxu0 0.0
        %3004 = vmatmul.mubr.f32.gmra.mrb[0].mxu0 %v2929
        %v3005 = vpop.f32.mrb[0].mxu0
        %v3006 = vadd.f32 0.0, %v3005
        %v3007 = vpop.f32.mrb[0].mxu0
        %3008 = vdwg.mxu0
        %v3009 = vadd.f32 %v2739, %v3001
        %v3010 = vadd.f32 %v2744, %v3006
        %v3011 = vld [vmem:[%s10] sm:$0xff]
        %v3012 = vld [vmem:[%s10 + $0x8] sm:$0xff]
        %v3013 = vld [vmem:[%s10 + $0x10] sm:$0xff]
        %v3014 = vld [vmem:[%s10 + $0x18] sm:$0xff]
        %v3015 = vld [vmem:[%s10 + $0x20] sm:$0xff]
        %v3016 = vld [vmem:[%s10 + $0x28] sm:$0xff]
        %v3017 = vld [vmem:[%s10 + $0x30] sm:$0xff]
        %v3018 = vld [vmem:[%s10 + $0x38] sm:$0xff]
        %v3019 = vld [vmem:[%s10 + $0x40] sm:$0xff]
        %v3020 = vld [vmem:[%s10 + $0x48] sm:$0xff]
        %v3021 = vld [vmem:[%s10 + $0x50] sm:$0xff]
        %v3022 = vld [vmem:[%s10 + $0x58] sm:$0xff]
        %v3023 = vld [vmem:[%s10 + $0x60] sm:$0xff]
        %v3024 = vld [vmem:[%s10 + $0x68] sm:$0xff]
        %v3025 = vld [vmem:[%s10 + $0x70] sm:$0xff]
        %v3026 = vld [vmem:[%s10 + $0x78] sm:$0xff]
        %v3027 = vld [vmem:[%s10 + $0x80] sm:$0xff]
        %v3028 = vld [vmem:[%s10 + $0x88] sm:$0xff]
        %v3029 = vld [vmem:[%s10 + $0x90] sm:$0xff]
        %v3030 = vld [vmem:[%s10 + $0x98] sm:$0xff]
        %v3031 = vld [vmem:[%s10 + $0xa0] sm:$0xff]
        %v3032 = vld [vmem:[%s10 + $0xa8] sm:$0xff]
        %v3033 = vrot.slane %v2334, 3
        %v3034 = vrot.slane %v2336, 3
        %v3036 = vsel %vm681, %v3034, 0
        %3038 = vmatprep.subr.mxu0 0.0
        %3039 = vmatpush1.msra.mxu0 %v3011
        %3040 = vmatprep.subr.mxu0 0.0
        %3041 = vmatpush1.msra.mxu0 %v3012
        %3042 = vmatprep.subr.mxu0 0.0
        %3043 = vmatpush1.msra.mxu0 %v3013
        %3044 = vmatprep.subr.mxu0 0.0
        %3045 = vmatpush1.msra.mxu0 %v3014
        %3046 = vmatprep.subr.mxu0 0.0
        %3047 = vmatpush1.msra.mxu0 %v3015
        %3048 = vmatprep.subr.mxu0 0.0
        %3049 = vmatpush1.msra.mxu0 %v3016
        %3050 = vmatprep.subr.mxu0 0.0
        %3051 = vmatpush1.msra.mxu0 %v3017
        %3052 = vmatprep.subr.mxu0 0.0
        %3053 = vmatpush1.msra.mxu0 %v3018
        %3054 = vmatprep.subr.mxu0 0.0
        %3055 = vmatpush1.msra.mxu0 %v3019
        %3056 = vmatprep.subr.mxu0 0.0
        %3057 = vmatpush1.msra.mxu0 %v3020
        %3058 = vmatprep.subr.mxu0 0.0
        %3059 = vmatpush1.msra.mxu0 %v3021
        %3060 = vmatprep.subr.mxu0 0.0
        %3061 = vmatpush1.msra.mxu0 %v3022
        %3062 = vmatprep.subr.mxu0 0.0
        %3063 = vmatpush1.msra.mxu0 %v3023
        %3064 = vmatprep.subr.mxu0 0.0
        %3065 = vmatpush1.msra.mxu0 %v3024
        %3066 = vmatprep.subr.mxu0 0.0
        %3067 = vmatpush1.msra.mxu0 %v3025
        %3068 = vmatprep.subr.mxu0 0.0
        %3069 = vmatpush1.msra.mxu0 %v3026
        %3070 = vmatprep.subr.mxu0 0.0
        %3071 = vmatpush1.msra.mxu0 %v3027
        %3072 = vmatprep.subr.mxu0 0.0
        %3073 = vmatpush1.msra.mxu0 %v3028
        %3074 = vmatprep.subr.mxu0 0.0
        %3075 = vmatpush1.msra.mxu0 %v3029
        %3076 = vmatprep.subr.mxu0 0.0
        %3077 = vmatpush1.msra.mxu0 %v3030
        %3078 = vmatprep.subr.mxu0 0.0
        %3079 = vmatpush1.msra.mxu0 %v3031
        %3080 = vmatprep.subr.mxu0 0.0
        %3081 = vmatpush1.msra.mxu0 %v3032
        %3082 = vmatprep.subr.mxu0 0.0
        %3083 = vmatpush1.msra.mxu0 0.0
        %3084 = vmatprep.subr.mxu0 0.0
        %3085 = vmatpush1.msra.mxu0 0.0
        %3086 = vmatprep.subr.mxu0 0.0
        %3087 = vmatpush1.msra.mxu0 0.0
        %3088 = vmatprep.subr.mxu0 0.0
        %3089 = vmatpush1.msra.mxu0 0.0
        %3090 = vmatprep.subr.mxu0 0.0
        %3091 = vmatpush1.msra.mxu0 0.0
        %3092 = vmatprep.subr.mxu0 0.0
        %3093 = vmatpush1.msra.mxu0 0.0
        %3094 = vmatprep.subr.mxu0 0.0
        %3095 = vmatpush1.msra.mxu0 0.0
        %3096 = vmatprep.subr.mxu0 0.0
        %3097 = vmatpush1.msra.mxu0 0.0
        %3098 = vmatprep.subr.mxu0 0.0
        %3099 = vmatpush1.msra.mxu0 0.0
        %3100 = vmatprep.subr.mxu0 0.0
        %3101 = vmatpush1.msra.mxu0 0.0
        %3102 = vmatprep.mubr.f32.mxu0 %v3036
        %3103 = vmatmul.mubr.f32.gmra.mrb[0].mxu0 %v3033
        %v3104 = vpop.f32.mrb[0].mxu0
        %v3105 = vadd.f32 0.0, %v3104
        %v3106 = vpop.f32.mrb[0].mxu0
        %3107 = vdwg.mxu0
        %v3108 = vmax.f32 %v3105, 0.0
        %v3109 = vld [vmem:[#allocation11] sm:$0xff]
        %v3110 = vld [vmem:[#allocation11 + $0x8] sm:$0xff]
        %v3111 = vld [vmem:[#allocation11 + $0x10] sm:$0xff]
        %v3112 = vld [vmem:[#allocation11 + $0x18] sm:$0xff]
        %vm3113 = vcmask 261120
        %v3115 = vsel %vm3113, %v3108, 0
        %3117 = vmatprep.subr.mxu0 0.0
        %3118 = vmatpush1.msra.mxu0 %v3109
        %3119 = vmatprep.subr.mxu0 0.0
        %3120 = vmatpush1.msra.mxu0 %v3110
        %3121 = vmatprep.subr.mxu0 0.0
        %3122 = vmatpush1.msra.mxu0 %v3111
        %3123 = vmatprep.subr.mxu0 0.0
        %3124 = vmatpush1.msra.mxu0 %v3112
        %3125 = vmatprep.subr.mxu0 0.0
        %3126 = vmatpush1.msra.mxu0 0.0
        %3127 = vmatprep.subr.mxu0 0.0
        %3128 = vmatpush1.msra.mxu0 0.0
        %3129 = vmatprep.subr.mxu0 0.0
        %3130 = vmatpush1.msra.mxu0 0.0
        %3131 = vmatprep.subr.mxu0 0.0
        %3132 = vmatpush1.msra.mxu0 0.0
        %3133 = vmatprep.subr.mxu0 0.0
        %3134 = vmatpush1.msra.mxu0 0.0
        %3135 = vmatprep.subr.mxu0 0.0
        %3136 = vmatpush1.msra.mxu0 0.0
        %3137 = vmatprep.subr.mxu0 0.0
        %3138 = vmatpush1.msra.mxu0 0.0
        %3139 = vmatprep.subr.mxu0 0.0
        %3140 = vmatpush1.msra.mxu0 0.0
        %3141 = vmatprep.subr.mxu0 0.0
        %3142 = vmatpush1.msra.mxu0 0.0
        %3143 = vmatprep.subr.mxu0 0.0
        %3144 = vmatpush1.msra.mxu0 0.0
        %3145 = vmatprep.subr.mxu0 0.0
        %3146 = vmatpush1.msra.mxu0 0.0
        %3147 = vmatprep.subr.mxu0 0.0
        %3148 = vmatpush1.msra.mxu0 0.0
        %3149 = vmatprep.subr.mxu0 0.0
        %3150 = vmatpush1.msra.mxu0 0.0
        %3151 = vmatprep.subr.mxu0 0.0
        %3152 = vmatpush1.msra.mxu0 0.0
        %3153 = vmatprep.subr.mxu0 0.0
        %3154 = vmatpush1.msra.mxu0 0.0
        %3155 = vmatprep.subr.mxu0 0.0
        %3156 = vmatpush1.msra.mxu0 0.0
        %3157 = vmatprep.subr.mxu0 0.0
        %3158 = vmatpush1.msra.mxu0 0.0
        %3159 = vmatprep.subr.mxu0 0.0
        %3160 = vmatpush1.msra.mxu0 0.0
        %3161 = vmatprep.subr.mxu0 0.0
        %3162 = vmatpush1.msra.mxu0 0.0
        %3163 = vmatprep.subr.mxu0 0.0
        %3164 = vmatpush1.msra.mxu0 0.0
        %3165 = vmatprep.subr.mxu0 0.0
        %3166 = vmatpush1.msra.mxu0 0.0
        %3167 = vmatprep.subr.mxu0 0.0
        %3168 = vmatpush1.msra.mxu0 0.0
        %3169 = vmatprep.subr.mxu0 0.0
        %3170 = vmatpush1.msra.mxu0 0.0
        %3171 = vmatprep.subr.mxu0 0.0
        %3172 = vmatpush1.msra.mxu0 0.0
        %3173 = vmatprep.subr.mxu0 0.0
        %3174 = vmatpush1.msra.mxu0 0.0
        %3175 = vmatprep.subr.mxu0 0.0
        %3176 = vmatpush1.msra.mxu0 0.0
        %3177 = vmatprep.subr.mxu0 0.0
        %3178 = vmatpush1.msra.mxu0 0.0
        %3179 = vmatprep.subr.mxu0 0.0
        %3180 = vmatpush1.msra.mxu0 0.0
        %3181 = vmatprep.mubr.f32.mxu0 0.0
        %3182 = vmatmul.mubr.f32.gmra.mrb[0].mxu0 %v3115
        %v3183 = vpop.f32.mrb[0].mxu0
        %v3184 = vadd.f32 0.0, %v3183
        %v3185 = vpop.f32.mrb[0].mxu0
        %3186 = vdwg.mxu0
        %v3187 = vld [vmem:[%s12] sm:$0xff]
        %v3188 = vld [vmem:[%s12 + $0x8] sm:$0xff]
        %vm3189 = vcmask 31744
        %v3191 = vsel %vm3189, %v3187, 0
        %v3194 = vsel %vm3189, %v3188, 0
        %v3197 = vsel %vm1545, %v3184, 0
        %3199 = vmatprep.subr.mxu0 0.0
        %3200 = vmatpush1.msra.mxu0 %v3197
        %3201 = vmatprep.subr.mxu0 0.0
        %3202 = vmatpush1.msra.mxu0 0.0
        %3203 = vmatprep.subr.mxu0 0.0
        %3204 = vmatpush1.msra.mxu0 0.0
        %3205 = vmatprep.subr.mxu0 0.0
        %3206 = vmatpush1.msra.mxu0 0.0
        %3207 = vmatprep.subr.mxu0 0.0
        %3208 = vmatpush1.msra.mxu0 0.0
        %3209 = vmatprep.subr.mxu0 0.0
        %3210 = vmatpush1.msra.mxu0 0.0
        %3211 = vmatprep.subr.mxu0 0.0
        %3212 = vmatpush1.msra.mxu0 0.0
        %3213 = vmatprep.subr.mxu0 0.0
        %3214 = vmatpush1.msra.mxu0 0.0
        %3215 = vmatprep.subr.mxu0 0.0
        %3216 = vmatpush1.msra.mxu0 0.0
        %3217 = vmatprep.subr.mxu0 0.0
        %3218 = vmatpush1.msra.mxu0 0.0
        %3219 = vmatprep.subr.mxu0 0.0
        %3220 = vmatpush1.msra.mxu0 0.0
        %3221 = vmatprep.subr.mxu0 0.0
        %3222 = vmatpush1.msra.mxu0 0.0
        %3223 = vmatprep.subr.mxu0 0.0
        %3224 = vmatpush1.msra.mxu0 0.0
        %3225 = vmatprep.subr.mxu0 0.0
        %3226 = vmatpush1.msra.mxu0 0.0
        %3227 = vmatprep.subr.mxu0 0.0
        %3228 = vmatpush1.msra.mxu0 0.0
        %3229 = vmatprep.subr.mxu0 0.0
        %3230 = vmatpush1.msra.mxu0 0.0
        %3231 = vmatprep.subr.mxu0 0.0
        %3232 = vmatpush1.msra.mxu0 0.0
        %3233 = vmatprep.subr.mxu0 0.0
        %3234 = vmatpush1.msra.mxu0 0.0
        %3235 = vmatprep.subr.mxu0 0.0
        %3236 = vmatpush1.msra.mxu0 0.0
        %3237 = vmatprep.subr.mxu0 0.0
        %3238 = vmatpush1.msra.mxu0 0.0
        %3239 = vmatprep.subr.mxu0 0.0
        %3240 = vmatpush1.msra.mxu0 0.0
        %3241 = vmatprep.subr.mxu0 0.0
        %3242 = vmatpush1.msra.mxu0 0.0
        %3243 = vmatprep.subr.mxu0 0.0
        %3244 = vmatpush1.msra.mxu0 0.0
        %3245 = vmatprep.subr.mxu0 0.0
        %3246 = vmatpush1.msra.mxu0 0.0
        %3247 = vmatprep.subr.mxu0 0.0
        %3248 = vmatpush1.msra.mxu0 0.0
        %3249 = vmatprep.subr.mxu0 0.0
        %3250 = vmatpush1.msra.mxu0 0.0
        %3251 = vmatprep.subr.mxu0 0.0
        %3252 = vmatpush1.msra.mxu0 0.0
        %3253 = vmatprep.subr.mxu0 0.0
        %3254 = vmatpush1.msra.mxu0 0.0
        %3255 = vmatprep.subr.mxu0 0.0
        %3256 = vmatpush1.msra.mxu0 0.0
        %3257 = vmatprep.subr.mxu0 0.0
        %3258 = vmatpush1.msra.mxu0 0.0
        %3259 = vmatprep.subr.mxu0 0.0
        %3260 = vmatpush1.msra.mxu0 0.0
        %3261 = vmatprep.subr.mxu0 0.0
        %3262 = vmatpush1.msra.mxu0 0.0
        %3263 = vmatprep.mubr.f32.mxu0 0.0
        %3264 = vmatmul.mubr.f32.gmra.mrb[0].mxu0 %v3191
        %v3265 = vpop.f32.mrb[0].mxu0
        %v3266 = vadd.f32 0.0, %v3265
        %v3267 = vpop.f32.mrb[0].mxu0
        %3268 = vmatprep.mubr.f32.mxu0 0.0
        %3269 = vmatmul.mubr.f32.gmra.mrb[0].mxu0 %v3194
        %v3270 = vpop.f32.mrb[0].mxu0
        %v3271 = vadd.f32 0.0, %v3270
        %v3272 = vpop.f32.mrb[0].mxu0
        %3273 = vdwg.mxu0
        %v3274 = vadd.f32 %v3009, %v3266
        %v3275 = vadd.f32 %v3010, %v3271
        %3276 = vst [vmem:[%s517] sm:$0xff] %v3274
        %3277 = vst [vmem:[%s517 + $0x8] sm:$0xff] %v3275
        %s3278 = sand.u32 %s317, 1
        %s3279 = scalar_lea.sflag [#allocation4], %s3278
        %s3280 = sand.u32 %s317, 1
        %s3281 = smul.addr %s3280, 16
        %s3282 = scalar_lea.vmem [#allocation13], %s3281
        // Predicated region
        $region97: #{tpu_custom_call.1} parent=71 // pred_check
          %p3283 = pneg %p327
        $region98: #{tpu_custom_call.1} parent=71 // pred_check_branch
          %3285 = sbr.rel (%p3283) target = $region100
        $region99: #{tpu_custom_call.1} parent=71 // pred_region
          %s3287 = ssub.s32 256, 256
          %3288 = vsyncadd %s3279, %s3287
          %s3289 = smul.addr %s31, 2
          %s3290 = smul.addr %s3289, 128
          %s3291 = scalar_lea.hbm %s13, %s3290
          %s3292 = sshll.u32 %s3282, 4
          %s3293 = int_to_ptr.vmem [resolvable:$true] %s3292
          %3298 = dma.vmem_to_hbm [thread:$0]  %s3293, 256, %s3291, %s3279, 128, 128, 8
        $region100: #{tpu_custom_call.1} parent=71 // pred_fallthru
          _
      $region72: #{tpu_custom_call.1} parent=5 // pred_fallthru
        _
      %p3299 = scmp.le.s32.totalorder 2, %s26
      // Predicated region
      $region101: #{tpu_custom_call.1} parent=5 // pred_check
        %p3300 = pneg %p3299
      $region102: #{tpu_custom_call.1} parent=5 // pred_check_branch
        %3302 = sbr.rel (%p3300) target = $region104
      $region103: #{tpu_custom_call.1} parent=5 // pred_region
        %s3303 = ssub.s32 %s26, 2
        // Predicated region
        $region105: #{tpu_custom_call.1} parent=103 // pred_check
          %p3304 = pneg %p333
        $region106: #{tpu_custom_call.1} parent=103 // pred_check_branch
          %3306 = sbr.rel (%p3304) target = $region108
        $region107: #{tpu_custom_call.1} parent=103 // pred_region
          %s3307 = sand.u32 %s318, 1
          %s3308 = scalar_lea.sflag [#allocation4], %s3307
          %s3309 = sand.u32 %s318, 1
          %s3310 = smul.addr %s3309, 16
          %s3311 = scalar_lea.vmem [#allocation13], %s3310
          %3312 = dma.done %s3308, 256
        $region108: #{tpu_custom_call.1} parent=103 // pred_fallthru
          _
      $region104: #{tpu_custom_call.1} parent=5 // pred_fallthru
        _
    $region6: #{tpu_custom_call.1} parent=1 // loop_footer
      %s30 = sadd.s32 1, %s26
    $region7: #{tpu_custom_call.1} parent=1 // loop_footer_branch
      %25 = sbr.rel target = $region3
    $region8: #{tpu_custom_call.1} parent=1 // loop_exit
      _
    %3313 = vsyncpa [#allocation3], 1
    %s3314 = scalar_lea.sflag [#allocation3], 1
    %3315 = vsyncpa %s3314, 1
    %3316 = vsyncpa [#allocation6], 1
    %3317 = vsyncpa [#allocation9], 1
    %3318 = vsyncpa [#allocation12], 1
    %3319 = vsyncpa [#allocation4], 1
    %s3320 = scalar_lea.sflag [#allocation4], 1
    %3321 = vsyncpa %s3320, 1

</llo_original>
